<compile_context>
chip_gen: v7x
topology: tpu7x:2x2x1
jax: 0.10.0
libtpu: 0.0.40
codegen_flags: <defaults>
</compile_context>

<pallas_src>
import functools

import jax
import jax.numpy as jnp
from jax.experimental import pallas as pl
from jax.experimental.pallas import tpu as pltpu

LANE = 128  # TPU lane width; all channel dims are zero-padded to this.


# ----------------------------------------------------------------------------
# Fused bottleneck kernel: one grid step == one image.
# ----------------------------------------------------------------------------
def _bottleneck_kernel(x_ref, w1_ref, w2_ref, w3_ref, wsc_ref,
                       s1_ref, b1_ref, s2_ref, b2_ref, s3_ref, b3_ref,
                       ssc_ref, bsc_ref, o_ref,
                       xpad_ref, patch_ref, *, H, W):
    HW = H * W
    P = o_ref.shape[-1]                       # lane-padded channel width (128)

    x2d = x_ref[0]                            # (HW, Cin) -- read once, used twice

    # ---- conv1 (1x1) + bn1 + relu  ->  h1 : (HW, P), lane-dense -------------
    h1 = jnp.dot(x2d, w1_ref[...], preferred_element_type=jnp.float32)
    h1 = jnp.maximum(h1 * s1_ref[...] + b1_ref[...], 0.0)

    # ---- 3x3 conv (stride 1, pad 1) as a single im2col matmul ---------------
    # Halo padding done in VMEM (no padded HBM copy): zero the scratch, write
    # the interior.
    xpad_ref[...] = jnp.zeros_like(xpad_ref)
    xpad_ref[1:H + 1, 1:W + 1, :] = h1.reshape(H, W, P)
    # 9 shifted slabs -> 128-lane-aligned column blocks of the patch matrix.
    for ki in range(3):
        for kj in range(3):
            tap = ki * 3 + kj
            slab = xpad_ref[ki:ki + H, kj:kj + W, :].reshape(HW, P)
            patch_ref[:, tap * P:(tap + 1) * P] = slab
    # One MXU contraction with K = 9*P (instead of nine K=Cin dots).
    h2 = jnp.dot(patch_ref[...], w2_ref[...], preferred_element_type=jnp.float32)
    h2 = jnp.maximum(h2 * s2_ref[...] + b2_ref[...], 0.0)

    # ---- conv3 (1x1) + bn3, fused shortcut (1x1 conv + bn), add, relu -------
    out = jnp.dot(h2, w3_ref[...], preferred_element_type=jnp.float32)
    out = out * s3_ref[...] + b3_ref[...]
    sc = jnp.dot(x2d, wsc_ref[...], preferred_element_type=jnp.float32)
    sc = sc * ssc_ref[...] + bsc_ref[...]
    o_ref[0] = jnp.maximum(out + sc, 0.0).astype(o_ref.dtype)


# ----------------------------------------------------------------------------
# Wrapper: layout glue (transpose / reshape / zero-pad channels) + pallas_call.
# ----------------------------------------------------------------------------
def _pad_axis(a, axis, target):
    pad = [(0, 0)] * a.ndim
    pad[axis] = (0, target - a.shape[axis])
    return jnp.pad(a, pad)


def bottleneck_forward(x_nchw, p):
    N, Cin, H, W = x_nchw.shape
    HW = H * W
    P = LANE
    cout = p["w3"].shape[1]

    # NCHW -> NHWC -> (N, H*W, Cin): pure layout glue outside the kernel.
    x2d = jnp.transpose(x_nchw, (0, 2, 3, 1)).reshape(N, HW, Cin)

    # Zero-pad channel dims to the 128-lane width.  Padded lanes stay exactly
    # zero through every stage (padded weight columns and biases are zero, so
    # relu(0*s + 0) == 0), and are sliced off after the kernel.
    w1p = _pad_axis(p["w1"], 1, P)                                   # (Cin, P)
    w2p = _pad_axis(_pad_axis(p["w2"], 2, P), 3, P).reshape(9 * P, P)
    w3p = _pad_axis(_pad_axis(p["w3"], 0, P), 1, P)                  # (P, P)
    wscp = _pad_axis(p["wsc"], 1, P)                                 # (Cin, P)
    vec = {k: _pad_axis(p[k], 1, P)
           for k in ("s1", "b1", "s2", "b2", "s3", "b3", "ssc", "bsc")}

    kernel = functools.partial(_bottleneck_kernel, H=H, W=W)
    const = lambda n: (0, 0)

    flops = 2 * N * HW * (Cin * P + 9 * P * P + P * P + Cin * P)
    bytes_accessed = 4 * (x2d.size + w1p.size + w2p.size + w3p.size
                          + wscp.size + 8 * P + N * HW * P)

    out = pl.pallas_call(
        kernel,
        out_shape=jax.ShapeDtypeStruct((N, HW, P), jnp.float32),
        grid=(N,),
        in_specs=[
            pl.BlockSpec((1, HW, Cin), lambda n: (n, 0, 0)),    # x (per image)
            pl.BlockSpec((Cin, P), const),                      # w1
            pl.BlockSpec((9 * P, P), const),                    # w2 (im2col)
            pl.BlockSpec((P, P), const),                        # w3
            pl.BlockSpec((Cin, P), const),                      # w_shortcut
        ] + [pl.BlockSpec((1, P), const)] * 8,                  # bn scale/bias
        out_specs=pl.BlockSpec((1, HW, P), lambda n: (n, 0, 0)),
        scratch_shapes=[
            pltpu.VMEM((H + 2, W + 2, P), jnp.float32),   # halo-padded h1
            pltpu.VMEM((HW, 9 * P), jnp.float32),         # im2col patches
        ],
        compiler_params=pltpu.CompilerParams(
            dimension_semantics=("parallel",),
            vmem_limit_bytes=32 * 1024 * 1024,
        ),
        cost_estimate=pl.CostEstimate(flops=flops, transcendentals=0,
                                      bytes_accessed=bytes_accessed),
    )(x2d, w1p, w2p, w3p, wscp,
      vec["s1"], vec["b1"], vec["s2"], vec["b2"],
      vec["s3"], vec["b3"], vec["ssc"], vec["bsc"])

    # Drop zero-padded channels, restore NCHW.
    out = out[:, :, :cout].reshape(N, H, W, cout)
    return jnp.transpose(out, (0, 3, 1, 2))


# ----------------------------------------------------------------------------
# Pure-JAX reference (numerical sanity check)
# ----------------------------------------------------------------------------
def bottleneck_reference(x_nchw, p, stride=1):
    x = jnp.transpose(x_nchw, (0, 2, 3, 1))
    dn = ("NHWC", "HWIO", "NHWC")
    bn = lambda y, s, b: y * s + b
    Cin = x.shape[-1]
    planes = p["w1"].shape[1]
    cout = p["w3"].shape[1]

    y = jax.lax.conv_general_dilated(x, p["w1"].reshape(1, 1, Cin, planes),
                                     (1, 1), "VALID", dimension_numbers=dn)
    y = jax.nn.relu(bn(y, p["s1"], p["b1"]))
    y = jax.lax.conv_general_dilated(y, p["w2"], (stride, stride),
                                     ((1, 1), (1, 1)), dimension_numbers=dn)
    y = jax.nn.relu(bn(y, p["s2"], p["b2"]))
    y = jax.lax.conv_general_dilated(y, p["w3"].reshape(1, 1, planes, cout),
                                     (1, 1), "VALID", dimension_numbers=dn)
    y = bn(y, p["s3"], p["b3"])
    sc = jax.lax.conv_general_dilated(x, p["wsc"].reshape(1, 1, Cin, cout),
                                      (stride, stride), "VALID",
                                      dimension_numbers=dn)
    sc = bn(sc, p["ssc"], p["bsc"])
    y = jax.nn.relu(y + sc)
    return jnp.transpose(y, (0, 3, 1, 2))


# ----------------------------------------------------------------------------
# Deterministic parameter construction (BN folded to inference scale/bias)
# ----------------------------------------------------------------------------
def make_params(key, in_planes, planes, expansion=4, eps=1e-5):
    ks = jax.random.split(key, 8)
    cout = expansion * planes

    def bn_params(k, c):
        kg, kb, km, kv = jax.random.split(k, 4)
        gamma = 1.0 + 0.1 * jax.random.normal(kg, (1, c), jnp.float32)
        beta = 0.1 * jax.random.normal(kb, (1, c), jnp.float32)
        mean = 0.1 * jax.random.normal(km, (1, c), jnp.float32)
        var = 0.5 + 0.5 * jnp.abs(jax.random.normal(kv, (1, c), jnp.float32))
        scale = gamma / jnp.sqrt(var + eps)
        bias = beta - mean * scale
        return scale, bias

    p = {}
    p["w1"] = 0.1 * jax.random.normal(ks[0], (in_planes, planes), jnp.float32)
    p["w2"] = 0.1 * jax.random.normal(ks[1], (3, 3, planes, planes), jnp.float32)
    p["w3"] = 0.1 * jax.random.normal(ks[2], (planes, cout), jnp.float32)
    p["wsc"] = 0.1 * jax.random.normal(ks[3], (in_planes, cout), jnp.float32)
    p["s1"], p["b1"] = bn_params(ks[4], planes)
    p["s2"], p["b2"] = bn_params(ks[5], planes)
    p["s3"], p["b3"] = bn_params(ks[6], cout)
    p["ssc"], p["bsc"] = bn_params(ks[7], cout)
    return p


if __name__ == "__main__":
    key = jax.random.PRNGKey(0)
    k_x, k_p = jax.random.split(key)

    # Bottleneck(in_planes=4, planes=4, stride=1) -> output channels = 16
    in_planes, planes = 4, 4
    N, H, W = 2, 16, 16
    x = jax.random.normal(k_x, (N, in_planes, H, W), jnp.float32)   # NCHW input
    params = make_params(k_p, in_planes, planes)

    out = jax.block_until_ready(bottleneck_forward(x, params))
    ref = jax.block_until_ready(bottleneck_reference(x, params))

    assert out.shape == (N, 4 * planes, H, W), out.shape
    # f32 throughout; tolerance absorbs only accumulation-order differences.
    err = float(jnp.max(jnp.abs(out - ref)))
    assert jnp.allclose(out, ref, atol=1e-3, rtol=1e-3), err
    print("KERNEL_OK")
</pallas_src>

<mosaic_0001>
module attributes {stable_mosaic.version = 11 : i64} {
  func.func @_bottleneck_kernel(%arg0: i32, %arg1: memref<1x256x4xf32, #tpu.memory_space<vmem>>, %arg2: memref<4x128xf32, #tpu.memory_space<vmem>>, %arg3: memref<1152x128xf32, #tpu.memory_space<vmem>>, %arg4: memref<128x128xf32, #tpu.memory_space<vmem>>, %arg5: memref<4x128xf32, #tpu.memory_space<vmem>>, %arg6: memref<1x128xf32, #tpu.memory_space<vmem>>, %arg7: memref<1x128xf32, #tpu.memory_space<vmem>>, %arg8: memref<1x128xf32, #tpu.memory_space<vmem>>, %arg9: memref<1x128xf32, #tpu.memory_space<vmem>>, %arg10: memref<1x128xf32, #tpu.memory_space<vmem>>, %arg11: memref<1x128xf32, #tpu.memory_space<vmem>>, %arg12: memref<1x128xf32, #tpu.memory_space<vmem>>, %arg13: memref<1x128xf32, #tpu.memory_space<vmem>>, %arg14: memref<1x256x128xf32, #tpu.memory_space<vmem>>, %arg15: memref<18x18x128xf32, #tpu.memory_space<vmem>>, %arg16: memref<256x1152xf32, #tpu.memory_space<vmem>>) attributes {dimension_semantics = [#tpu.dimension_semantics<parallel>], iteration_bounds = array<i64: 2>, scalar_prefetch = 0 : i64, scratch_operands = 2 : i64, tpu.core_type = #tpu.core_type<tc>, window_params = [{transform_indices = @transform_0, window_bounds = array<i64: 1, 256, 4>}, {pipeline_mode = #tpu.pipeline_mode<synchronous>, transform_indices = @transform_1, window_bounds = array<i64: 4, 128>}, {pipeline_mode = #tpu.pipeline_mode<synchronous>, transform_indices = @transform_2, window_bounds = array<i64: 1152, 128>}, {pipeline_mode = #tpu.pipeline_mode<synchronous>, transform_indices = @transform_3, window_bounds = array<i64: 128, 128>}, {pipeline_mode = #tpu.pipeline_mode<synchronous>, transform_indices = @transform_4, window_bounds = array<i64: 4, 128>}, {pipeline_mode = #tpu.pipeline_mode<synchronous>, transform_indices = @transform_5, window_bounds = array<i64: 1, 128>}, {pipeline_mode = #tpu.pipeline_mode<synchronous>, transform_indices = @transform_6, window_bounds = array<i64: 1, 128>}, {pipeline_mode = #tpu.pipeline_mode<synchronous>, transform_indices = @transform_7, window_bounds = array<i64: 1, 128>}, {pipeline_mode = #tpu.pipeline_mode<synchronous>, transform_indices = @transform_8, window_bounds = array<i64: 1, 128>}, {pipeline_mode = #tpu.pipeline_mode<synchronous>, transform_indices = @transform_9, window_bounds = array<i64: 1, 128>}, {pipeline_mode = #tpu.pipeline_mode<synchronous>, transform_indices = @transform_10, window_bounds = array<i64: 1, 128>}, {pipeline_mode = #tpu.pipeline_mode<synchronous>, transform_indices = @transform_11, window_bounds = array<i64: 1, 128>}, {pipeline_mode = #tpu.pipeline_mode<synchronous>, transform_indices = @transform_12, window_bounds = array<i64: 1, 128>}, {transform_indices = @transform_13, window_bounds = array<i64: 1, 256, 128>}]} {
    %c0 = arith.constant 0 : index
    %c0_0 = arith.constant 0 : index
    %c0_1 = arith.constant 0 : index
    %0 = vector.load %arg1[%c0, %c0_0, %c0_1] : memref<1x256x4xf32, #tpu.memory_space<vmem>>, vector<1x256x4xf32>
    %1 = vector.shape_cast %0 : vector<1x256x4xf32> to vector<256x4xf32>
    %c0_2 = arith.constant 0 : index
    %c0_3 = arith.constant 0 : index
    %2 = vector.load %arg2[%c0_2, %c0_3] : memref<4x128xf32, #tpu.memory_space<vmem>>, vector<4x128xf32>
    %cst = arith.constant dense<0.000000e+00> : vector<256x128xf32>
    %3 = tpu.matmul %1, %2, %cst {dimension_numbers = #tpu.dot_dimension_numbers<[1], [0], [0], [1], [0, 0, 1, 1], [], []>} : vector<256x4xf32>, vector<4x128xf32>, vector<256x128xf32> -> vector<256x128xf32>
    %c0_4 = arith.constant 0 : index
    %c0_5 = arith.constant 0 : index
    %4 = vector.load %arg6[%c0_4, %c0_5] : memref<1x128xf32, #tpu.memory_space<vmem>>, vector<1x128xf32>
    %5 = vector.broadcast %4 : vector<1x128xf32> to vector<256x128xf32>
    %6 = arith.mulf %3, %5 : vector<256x128xf32>
    %c0_6 = arith.constant 0 : index
    %c0_7 = arith.constant 0 : index
    %7 = vector.load %arg7[%c0_6, %c0_7] : memref<1x128xf32, #tpu.memory_space<vmem>>, vector<1x128xf32>
    %8 = vector.broadcast %7 : vector<1x128xf32> to vector<256x128xf32>
    %9 = arith.addf %6, %8 : vector<256x128xf32>
    %cst_8 = arith.constant 0.000000e+00 : f32
    %10 = vector.broadcast %cst_8 : f32 to vector<256x128xf32>
    %11 = arith.maximumf %9, %10 : vector<256x128xf32>
    %cst_9 = arith.constant 0.000000e+00 : f32
    %12 = vector.broadcast %cst_9 : f32 to vector<18x18x128xf32>
    %c0_10 = arith.constant 0 : index
    %c0_11 = arith.constant 0 : index
    %c0_12 = arith.constant 0 : index
    %13 = vector.load %arg15[%c0_10, %c0_11, %c0_12] : memref<18x18x128xf32, #tpu.memory_space<vmem>>, vector<18x18x128xf32>
    tpu.vector_store %arg15[%c0_10, %c0_11, %c0_12], %12 {strides = array<i32>} : memref<18x18x128xf32, #tpu.memory_space<vmem>>, vector<18x18x128xf32>,
    %14 = vector.shape_cast %11 : vector<256x128xf32> to vector<16x16x128xf32>
    %c1 = arith.constant 1 : index
    %c1_13 = arith.constant 1 : index
    %c0_14 = arith.constant 0 : index
    %15 = vector.load %arg15[%c1, %c1_13, %c0_14] : memref<18x18x128xf32, #tpu.memory_space<vmem>>, vector<16x16x128xf32>
    tpu.vector_store %arg15[%c1, %c1_13, %c0_14], %14 {strides = array<i32>} : memref<18x18x128xf32, #tpu.memory_space<vmem>>, vector<16x16x128xf32>,
    %c0_15 = arith.constant 0 : index
    %c0_16 = arith.constant 0 : index
    %c0_17 = arith.constant 0 : index
    %16 = vector.load %arg15[%c0_15, %c0_16, %c0_17] : memref<18x18x128xf32, #tpu.memory_space<vmem>>, vector<16x16x128xf32>
    %17 = vector.shape_cast %16 : vector<16x16x128xf32> to vector<256x128xf32>
    %c0_18 = arith.constant 0 : index
    %c0_19 = arith.constant 0 : index
    %18 = vector.load %arg16[%c0_18, %c0_19] : memref<256x1152xf32, #tpu.memory_space<vmem>>, vector<256x128xf32>
    tpu.vector_store %arg16[%c0_18, %c0_19], %17 {strides = array<i32>} : memref<256x1152xf32, #tpu.memory_space<vmem>>, vector<256x128xf32>,
    %c0_20 = arith.constant 0 : index
    %c1_21 = arith.constant 1 : index
    %c0_22 = arith.constant 0 : index
    %19 = vector.load %arg15[%c0_20, %c1_21, %c0_22] : memref<18x18x128xf32, #tpu.memory_space<vmem>>, vector<16x16x128xf32>
    %20 = vector.shape_cast %19 : vector<16x16x128xf32> to vector<256x128xf32>
    %c0_23 = arith.constant 0 : index
    %c128 = arith.constant 128 : index
    %21 = vector.load %arg16[%c0_23, %c128] : memref<256x1152xf32, #tpu.memory_space<vmem>>, vector<256x128xf32>
    tpu.vector_store %arg16[%c0_23, %c128], %20 {strides = array<i32>} : memref<256x1152xf32, #tpu.memory_space<vmem>>, vector<256x128xf32>,
    %c0_24 = arith.constant 0 : index
    %c2 = arith.constant 2 : index
    %c0_25 = arith.constant 0 : index
    %22 = vector.load %arg15[%c0_24, %c2, %c0_25] : memref<18x18x128xf32, #tpu.memory_space<vmem>>, vector<16x16x128xf32>
    %23 = vector.shape_cast %22 : vector<16x16x128xf32> to vector<256x128xf32>
    %c0_26 = arith.constant 0 : index
    %c256 = arith.constant 256 : index
    %24 = vector.load %arg16[%c0_26, %c256] : memref<256x1152xf32, #tpu.memory_space<vmem>>, vector<256x128xf32>
    tpu.vector_store %arg16[%c0_26, %c256], %23 {strides = array<i32>} : memref<256x1152xf32, #tpu.memory_space<vmem>>, vector<256x128xf32>,
    %c1_27 = arith.constant 1 : index
    %c0_28 = arith.constant 0 : index
    %c0_29 = arith.constant 0 : index
    %25 = vector.load %arg15[%c1_27, %c0_28, %c0_29] : memref<18x18x128xf32, #tpu.memory_space<vmem>>, vector<16x16x128xf32>
    %26 = vector.shape_cast %25 : vector<16x16x128xf32> to vector<256x128xf32>
    %c0_30 = arith.constant 0 : index
    %c384 = arith.constant 384 : index
    %27 = vector.load %arg16[%c0_30, %c384] : memref<256x1152xf32, #tpu.memory_space<vmem>>, vector<256x128xf32>
    tpu.vector_store %arg16[%c0_30, %c384], %26 {strides = array<i32>} : memref<256x1152xf32, #tpu.memory_space<vmem>>, vector<256x128xf32>,
    %c1_31 = arith.constant 1 : index
    %c1_32 = arith.constant 1 : index
    %c0_33 = arith.constant 0 : index
    %28 = vector.load %arg15[%c1_31, %c1_32, %c0_33] : memref<18x18x128xf32, #tpu.memory_space<vmem>>, vector<16x16x128xf32>
    %29 = vector.shape_cast %28 : vector<16x16x128xf32> to vector<256x128xf32>
    %c0_34 = arith.constant 0 : index
    %c512 = arith.constant 512 : index
    %30 = vector.load %arg16[%c0_34, %c512] : memref<256x1152xf32, #tpu.memory_space<vmem>>, vector<256x128xf32>
    tpu.vector_store %arg16[%c0_34, %c512], %29 {strides = array<i32>} : memref<256x1152xf32, #tpu.memory_space<vmem>>, vector<256x128xf32>,
    %c1_35 = arith.constant 1 : index
    %c2_36 = arith.constant 2 : index
    %c0_37 = arith.constant 0 : index
    %31 = vector.load %arg15[%c1_35, %c2_36, %c0_37] : memref<18x18x128xf32, #tpu.memory_space<vmem>>, vector<16x16x128xf32>
    %32 = vector.shape_cast %31 : vector<16x16x128xf32> to vector<256x128xf32>
    %c0_38 = arith.constant 0 : index
    %c640 = arith.constant 640 : index
    %33 = vector.load %arg16[%c0_38, %c640] : memref<256x1152xf32, #tpu.memory_space<vmem>>, vector<256x128xf32>
    tpu.vector_store %arg16[%c0_38, %c640], %32 {strides = array<i32>} : memref<256x1152xf32, #tpu.memory_space<vmem>>, vector<256x128xf32>,
    %c2_39 = arith.constant 2 : index
    %c0_40 = arith.constant 0 : index
    %c0_41 = arith.constant 0 : index
    %34 = vector.load %arg15[%c2_39, %c0_40, %c0_41] : memref<18x18x128xf32, #tpu.memory_space<vmem>>, vector<16x16x128xf32>
    %35 = vector.shape_cast %34 : vector<16x16x128xf32> to vector<256x128xf32>
    %c0_42 = arith.constant 0 : index
    %c768 = arith.constant 768 : index
    %36 = vector.load %arg16[%c0_42, %c768] : memref<256x1152xf32, #tpu.memory_space<vmem>>, vector<256x128xf32>
    tpu.vector_store %arg16[%c0_42, %c768], %35 {strides = array<i32>} : memref<256x1152xf32, #tpu.memory_space<vmem>>, vector<256x128xf32>,
    %c2_43 = arith.constant 2 : index
    %c1_44 = arith.constant 1 : index
    %c0_45 = arith.constant 0 : index
    %37 = vector.load %arg15[%c2_43, %c1_44, %c0_45] : memref<18x18x128xf32, #tpu.memory_space<vmem>>, vector<16x16x128xf32>
    %38 = vector.shape_cast %37 : vector<16x16x128xf32> to vector<256x128xf32>
    %c0_46 = arith.constant 0 : index
    %c896 = arith.constant 896 : index
    %39 = vector.load %arg16[%c0_46, %c896] : memref<256x1152xf32, #tpu.memory_space<vmem>>, vector<256x128xf32>
    tpu.vector_store %arg16[%c0_46, %c896], %38 {strides = array<i32>} : memref<256x1152xf32, #tpu.memory_space<vmem>>, vector<256x128xf32>,
    %c2_47 = arith.constant 2 : index
    %c2_48 = arith.constant 2 : index
    %c0_49 = arith.constant 0 : index
    %40 = vector.load %arg15[%c2_47, %c2_48, %c0_49] : memref<18x18x128xf32, #tpu.memory_space<vmem>>, vector<16x16x128xf32>
    %41 = vector.shape_cast %40 : vector<16x16x128xf32> to vector<256x128xf32>
    %c0_50 = arith.constant 0 : index
    %c1024 = arith.constant 1024 : index
    %42 = vector.load %arg16[%c0_50, %c1024] : memref<256x1152xf32, #tpu.memory_space<vmem>>, vector<256x128xf32>
    tpu.vector_store %arg16[%c0_50, %c1024], %41 {strides = array<i32>} : memref<256x1152xf32, #tpu.memory_space<vmem>>, vector<256x128xf32>,
    %c0_51 = arith.constant 0 : index
    %c0_52 = arith.constant 0 : index
    %43 = vector.load %arg16[%c0_51, %c0_52] : memref<256x1152xf32, #tpu.memory_space<vmem>>, vector<256x1152xf32>
    %c0_53 = arith.constant 0 : index
    %c0_54 = arith.constant 0 : index
    %44 = vector.load %arg3[%c0_53, %c0_54] : memref<1152x128xf32, #tpu.memory_space<vmem>>, vector<1152x128xf32>
    %cst_55 = arith.constant dense<0.000000e+00> : vector<256x128xf32>
    %45 = tpu.matmul %43, %44, %cst_55 {dimension_numbers = #tpu.dot_dimension_numbers<[1], [0], [0], [1], [0, 0, 1, 1], [], []>} : vector<256x1152xf32>, vector<1152x128xf32>, vector<256x128xf32> -> vector<256x128xf32>
    %c0_56 = arith.constant 0 : index
    %c0_57 = arith.constant 0 : index
    %46 = vector.load %arg8[%c0_56, %c0_57] : memref<1x128xf32, #tpu.memory_space<vmem>>, vector<1x128xf32>
    %47 = vector.broadcast %46 : vector<1x128xf32> to vector<256x128xf32>
    %48 = arith.mulf %45, %47 : vector<256x128xf32>
    %c0_58 = arith.constant 0 : index
    %c0_59 = arith.constant 0 : index
    %49 = vector.load %arg9[%c0_58, %c0_59] : memref<1x128xf32, #tpu.memory_space<vmem>>, vector<1x128xf32>
    %50 = vector.broadcast %49 : vector<1x128xf32> to vector<256x128xf32>
    %51 = arith.addf %48, %50 : vector<256x128xf32>
    %cst_60 = arith.constant 0.000000e+00 : f32
    %52 = vector.broadcast %cst_60 : f32 to vector<256x128xf32>
    %53 = arith.maximumf %51, %52 : vector<256x128xf32>
    %c0_61 = arith.constant 0 : index
    %c0_62 = arith.constant 0 : index
    %54 = vector.load %arg4[%c0_61, %c0_62] : memref<128x128xf32, #tpu.memory_space<vmem>>, vector<128x128xf32>
    %cst_63 = arith.constant dense<0.000000e+00> : vector<256x128xf32>
    %55 = tpu.matmul %53, %54, %cst_63 {dimension_numbers = #tpu.dot_dimension_numbers<[1], [0], [0], [1], [0, 0, 1, 1], [], []>} : vector<256x128xf32>, vector<128x128xf32>, vector<256x128xf32> -> vector<256x128xf32>
    %c0_64 = arith.constant 0 : index
    %c0_65 = arith.constant 0 : index
    %56 = vector.load %arg10[%c0_64, %c0_65] : memref<1x128xf32, #tpu.memory_space<vmem>>, vector<1x128xf32>
    %57 = vector.broadcast %56 : vector<1x128xf32> to vector<256x128xf32>
    %58 = arith.mulf %55, %57 : vector<256x128xf32>
    %c0_66 = arith.constant 0 : index
    %c0_67 = arith.constant 0 : index
    %59 = vector.load %arg11[%c0_66, %c0_67] : memref<1x128xf32, #tpu.memory_space<vmem>>, vector<1x128xf32>
    %60 = vector.broadcast %59 : vector<1x128xf32> to vector<256x128xf32>
    %61 = arith.addf %58, %60 : vector<256x128xf32>
    %c0_68 = arith.constant 0 : index
    %c0_69 = arith.constant 0 : index
    %62 = vector.load %arg5[%c0_68, %c0_69] : memref<4x128xf32, #tpu.memory_space<vmem>>, vector<4x128xf32>
    %cst_70 = arith.constant dense<0.000000e+00> : vector<256x128xf32>
    %63 = tpu.matmul %1, %62, %cst_70 {dimension_numbers = #tpu.dot_dimension_numbers<[1], [0], [0], [1], [0, 0, 1, 1], [], []>} : vector<256x4xf32>, vector<4x128xf32>, vector<256x128xf32> -> vector<256x128xf32>
    %c0_71 = arith.constant 0 : index
    %c0_72 = arith.constant 0 : index
    %64 = vector.load %arg12[%c0_71, %c0_72] : memref<1x128xf32, #tpu.memory_space<vmem>>, vector<1x128xf32>
    %65 = vector.broadcast %64 : vector<1x128xf32> to vector<256x128xf32>
    %66 = arith.mulf %63, %65 : vector<256x128xf32>
    %c0_73 = arith.constant 0 : index
    %c0_74 = arith.constant 0 : index
    %67 = vector.load %arg13[%c0_73, %c0_74] : memref<1x128xf32, #tpu.memory_space<vmem>>, vector<1x128xf32>
    %68 = vector.broadcast %67 : vector<1x128xf32> to vector<256x128xf32>
    %69 = arith.addf %66, %68 : vector<256x128xf32>
    %70 = arith.addf %61, %69 : vector<256x128xf32>
    %cst_75 = arith.constant 0.000000e+00 : f32
    %71 = vector.broadcast %cst_75 : f32 to vector<256x128xf32>
    %72 = arith.maximumf %70, %71 : vector<256x128xf32>
    %c0_76 = arith.constant 0 : index
    %c0_77 = arith.constant 0 : index
    %c0_78 = arith.constant 0 : index
    %73 = vector.load %arg14[%c0_76, %c0_77, %c0_78] : memref<1x256x128xf32, #tpu.memory_space<vmem>>, vector<1x256x128xf32>
    %74 = vector.shape_cast %73 : vector<1x256x128xf32> to vector<256x128xf32>
    %75 = vector.shape_cast %72 : vector<256x128xf32> to vector<1x256x128xf32>
    tpu.vector_store %arg14[%c0_76, %c0_77, %c0_78], %75 {strides = array<i32>} : memref<1x256x128xf32, #tpu.memory_space<vmem>>, vector<1x256x128xf32>,
    return
  }
  func.func @transform_0(%arg0: i32) -> (i32, i32, i32) {
    %c0_i32 = arith.constant 0 : i32
    %c0_i32_0 = arith.constant 0 : i32
    %c0_i32_1 = arith.constant 0 : i32
    return %arg0, %c0_i32, %c0_i32_0 : i32, i32, i32
  }
  func.func @transform_1(%arg0: i32) -> (i32, i32) {
    %c0_i32 = arith.constant 0 : i32
    %c0_i32_0 = arith.constant 0 : i32
    %c0_i32_1 = arith.constant 0 : i32
    return %c0_i32, %c0_i32_0 : i32, i32
  }
  func.func @transform_2(%arg0: i32) -> (i32, i32) {
    %c0_i32 = arith.constant 0 : i32
    %c0_i32_0 = arith.constant 0 : i32
    %c0_i32_1 = arith.constant 0 : i32
    return %c0_i32, %c0_i32_0 : i32, i32
  }
  func.func @transform_3(%arg0: i32) -> (i32, i32) {
    %c0_i32 = arith.constant 0 : i32
    %c0_i32_0 = arith.constant 0 : i32
    %c0_i32_1 = arith.constant 0 : i32
    return %c0_i32, %c0_i32_0 : i32, i32
  }
  func.func @transform_4(%arg0: i32) -> (i32, i32) {
    %c0_i32 = arith.constant 0 : i32
    %c0_i32_0 = arith.constant 0 : i32
    %c0_i32_1 = arith.constant 0 : i32
    return %c0_i32, %c0_i32_0 : i32, i32
  }
  func.func @transform_5(%arg0: i32) -> (i32, i32) {
    %c0_i32 = arith.constant 0 : i32
    %c0_i32_0 = arith.constant 0 : i32
    %c0_i32_1 = arith.constant 0 : i32
    return %c0_i32, %c0_i32_0 : i32, i32
  }
  func.func @transform_6(%arg0: i32) -> (i32, i32) {
    %c0_i32 = arith.constant 0 : i32
    %c0_i32_0 = arith.constant 0 : i32
    %c0_i32_1 = arith.constant 0 : i32
    return %c0_i32, %c0_i32_0 : i32, i32
  }
  func.func @transform_7(%arg0: i32) -> (i32, i32) {
    %c0_i32 = arith.constant 0 : i32
    %c0_i32_0 = arith.constant 0 : i32
    %c0_i32_1 = arith.constant 0 : i32
    return %c0_i32, %c0_i32_0 : i32, i32
  }
  func.func @transform_8(%arg0: i32) -> (i32, i32) {
    %c0_i32 = arith.constant 0 : i32
    %c0_i32_0 = arith.constant 0 : i32
    %c0_i32_1 = arith.constant 0 : i32
    return %c0_i32, %c0_i32_0 : i32, i32
  }
  func.func @transform_9(%arg0: i32) -> (i32, i32) {
    %c0_i32 = arith.constant 0 : i32
    %c0_i32_0 = arith.constant 0 : i32
    %c0_i32_1 = arith.constant 0 : i32
    return %c0_i32, %c0_i32_0 : i32, i32
  }
  func.func @transform_10(%arg0: i32) -> (i32, i32) {
    %c0_i32 = arith.constant 0 : i32
    %c0_i32_0 = arith.constant 0 : i32
    %c0_i32_1 = arith.constant 0 : i32
    return %c0_i32, %c0_i32_0 : i32, i32
  }
  func.func @transform_11(%arg0: i32) -> (i32, i32) {
    %c0_i32 = arith.constant 0 : i32
    %c0_i32_0 = arith.constant 0 : i32
    %c0_i32_1 = arith.constant 0 : i32
    return %c0_i32, %c0_i32_0 : i32, i32
  }
  func.func @transform_12(%arg0: i32) -> (i32, i32) {
    %c0_i32 = arith.constant 0 : i32
    %c0_i32_0 = arith.constant 0 : i32
    %c0_i32_1 = arith.constant 0 : i32
    return %c0_i32, %c0_i32_0 : i32, i32
  }
  func.func @transform_13(%arg0: i32) -> (i32, i32, i32) {
    %c0_i32 = arith.constant 0 : i32
    %c0_i32_0 = arith.constant 0 : i32
    %c0_i32_1 = arith.constant 0 : i32
    return %arg0, %c0_i32, %c0_i32_0 : i32, i32, i32
  }
}

</mosaic_0001>

<llo_original>
// kernel: tpu_custom_call.1
$region0: #{tpu_custom_call.1}
  #allocation0 [shape = 'u32[]', space=smem, size = 0x4, offset = 0x4, fixed_abs, tag = 'smem constant byte address 0x4 - core index']
  #allocation1 [shape = 'u32[144,128]{1,0:T(1,128)}', space=vmem, size = 0x12000, scoped, tag = 'internal scratch']
  #allocation2 [shape = 'f32[18,18,128]{2,1,0:T(8,128)}', space=vmem, size = 0x36000, scoped, tag = 'scratch operand']
  #allocation3 [shape = 'f32[256,1152]{1,0:T(8,128)}', space=vmem, size = 0x120000, scoped, tag = 'scratch operand']
  %s0 = inlined_call_operand.vmem [shape: f32[2,256,4], index: 0, kind: input, shape index: {}]
  %s1 = inlined_call_operand.vmem [shape: f32[4,128], index: 1, kind: input, shape index: {}]
  %s2 = inlined_call_operand.hbm [shape: f32[1152,128], index: 2, kind: input, shape index: {}]
  %s3 = inlined_call_operand.vmem [shape: f32[128,128], index: 3, kind: input, shape index: {}]
  %s4 = inlined_call_operand.vmem [shape: f32[4,128], index: 4, kind: input, shape index: {}]
  %s5 = inlined_call_operand.vmem [shape: f32[1,128], index: 5, kind: input, shape index: {}]
  %s6 = inlined_call_operand.vmem [shape: f32[1,128], index: 6, kind: input, shape index: {}]
  %s7 = inlined_call_operand.vmem [shape: f32[1,128], index: 7, kind: input, shape index: {}]
  %s8 = inlined_call_operand.vmem [shape: f32[1,128], index: 8, kind: input, shape index: {}]
  %s9 = inlined_call_operand.vmem [shape: f32[1,128], index: 9, kind: input, shape index: {}]
  %s10 = inlined_call_operand.vmem [shape: f32[1,128], index: 10, kind: input, shape index: {}]
  %s11 = inlined_call_operand.vmem [shape: f32[1,128], index: 11, kind: input, shape index: {}]
  %s12 = inlined_call_operand.vmem [shape: f32[1,128], index: 12, kind: input, shape index: {}]
  %s13 = inlined_call_operand.hbm [shape: f32[2,256,128], index: 13, kind: output, shape index: {}]
  %s14 = sld [smem:[#allocation0]]
  $region89: #{tpu_custom_call.1} parent=0
    _
  %s16 = ssub.s32 1, %s14
  %s17 = scalar_select 0, %s16, %s14
  $region1: #{tpu_custom_call.1} parent=0
    #allocation4 [shape = 'u8[589824]{0}', space=vmem, size = 0x90000, scoped, tag = 'input window, operand 2, single buffered']
    #allocation5 [shape = 's32[2]{0}', space=sflag, size = 0x8, scoped, tag = 'scoped memory for tpu_custom_call.1']
    #allocation6 [shape = 's32[2]{0}', space=sflag, size = 0x8, scoped, tag = 'scoped memory for tpu_custom_call.1']
    #allocation7 [shape = 'u8[262144]{0}', space=vmem, size = 0x40000, scoped, tag = 'output window, operand 0']
    %18 = vsyncpa [#allocation5], 0
    %19 = vsyncpa [#allocation6], 0
    %s20 = scalar_lea.sflag [#allocation6], 1
    %21 = vsyncpa %s20, 0
    loop: start=0, step=1, limit=4
    $region2: #{tpu_custom_call.1} parent=1 // loop_pre_header
      _
    $region3: #{tpu_custom_call.1} parent=1 // loop_header
      %s23 = sphi 0, %s27
      %p24 = scmp.ge.s32.totalorder %s23, 4
      %s33 = sphi 0, %s35
      %s36 = sphi 0, %s33
      %s37 = sphi 0, %s36
      %s53 = sphi 0, %s37
      %s57 = sphi 0, %s57
      %s59 = sphi 0, %s57
      %s60 = sphi 0, %s59
      %s74 = sphi 0, %s60
      %s78 = sphi 0, %s78
      %s80 = sphi 0, %s78
      %s81 = sphi 0, %s80
      %s95 = sphi 0, %s81
      %s99 = sphi 0, %s99
      %s101 = sphi 0, %s99
      %s102 = sphi 0, %s101
      %s116 = sphi 0, %s102
      %s120 = sphi 0, %s120
      %s122 = sphi 0, %s120
      %s123 = sphi 0, %s122
      %s137 = sphi 0, %s123
      %s141 = sphi 0, %s141
      %s143 = sphi 0, %s141
      %s144 = sphi 0, %s143
      %s158 = sphi 0, %s144
      %s162 = sphi 0, %s162
      %s164 = sphi 0, %s162
      %s165 = sphi 0, %s164
      %s179 = sphi 0, %s165
      %s183 = sphi 0, %s183
      %s185 = sphi 0, %s183
      %s186 = sphi 0, %s185
      %s200 = sphi 0, %s186
      %s204 = sphi 0, %s204
      %s206 = sphi 0, %s204
      %s207 = sphi 0, %s206
      %s221 = sphi 0, %s207
      %s225 = sphi 0, %s225
      %s227 = sphi 0, %s225
      %s228 = sphi 0, %s227
      %s242 = sphi 0, %s228
      %s246 = sphi 0, %s246
      %s248 = sphi 0, %s246
      %s249 = sphi 0, %s248
      %s263 = sphi 0, %s249
      %s267 = sphi 0, %s267
      %s269 = sphi 0, %s267
      %s270 = sphi 0, %s269
      %s284 = sphi 0, %s270
      %s288 = sphi 0, %s288
      %s290 = sphi 0, %s288
      %s291 = sphi 0, %s290
      %s305 = sphi 0, %s291
      %s311 = sphi 0, %s313
      %s314 = sphi 0, %s311
      %s315 = sphi 0, %s314
      %s331 = sphi 0, %s315
    $region4: #{tpu_custom_call.1} parent=1 // loop_header_branch
      %26 = sbr.rel (%p24) target = $region8
    $region5: #{tpu_custom_call.1} parent=1 // loop_body
      %s28 = ssub.s32 %s23, 1
      %s29 = ssub.s32 %s23, 2
      %s30 = sadd.s32 %s23, 1
      %s31 = ssub.s32 %s23, %s30
      %p32 = scmp.eq.s32.totalorder %s31, 0
      %s34 = sadd.s32 %s33, 1
      %s35 = scalar_select %p32, %s33, %s34
      %p38 = pneg %p32
      %p39 = scmp.eq.s32.totalorder %s23, 1
      %p40 = por %p38, %p39
      %p41 = scmp.ne.s32.totalorder %s33, %s36
      %p42 = scmp.eq.s32.totalorder %s23, 0
      %p43 = por %p41, %p42
      %p44 = scmp.ne.s32.totalorder %s33, %s36
      %p45 = scmp.eq.s32.totalorder %s28, 1
      %p46 = por %p44, %p45
      %p47 = scmp.ne.s32.totalorder %s36, %s37
      %p48 = scmp.eq.s32.totalorder %s28, 0
      %p49 = por %p47, %p48
      %p50 = scmp.ne.s32.totalorder %s36, %s37
      %p51 = scmp.eq.s32.totalorder %s29, 1
      %p52 = por %p50, %p51
      %p54 = scmp.ne.s32.totalorder %s37, %s53
      %p55 = scmp.eq.s32.totalorder %s29, 0
      %p56 = por %p54, %p55
      %s58 = sadd.s32 %s57, 1
      %p61 = scmp.eq.s32.totalorder %s23, 1
      %p62 = scmp.ne.s32.totalorder %s57, %s59
      %p63 = scmp.eq.s32.totalorder %s23, 0
      %p64 = por %p62, %p63
      %p65 = scmp.ne.s32.totalorder %s57, %s59
      %p66 = scmp.eq.s32.totalorder %s28, 1
      %p67 = por %p65, %p66
      %p68 = scmp.ne.s32.totalorder %s59, %s60
      %p69 = scmp.eq.s32.totalorder %s28, 0
      %p70 = por %p68, %p69
      %p71 = scmp.ne.s32.totalorder %s59, %s60
      %p72 = scmp.eq.s32.totalorder %s29, 1
      %p73 = por %p71, %p72
      %p75 = scmp.ne.s32.totalorder %s60, %s74
      %p76 = scmp.eq.s32.totalorder %s29, 0
      %p77 = por %p75, %p76
      %s79 = sadd.s32 %s78, 1
      %p82 = scmp.eq.s32.totalorder %s23, 1
      %p83 = scmp.ne.s32.totalorder %s78, %s80
      %p84 = scmp.eq.s32.totalorder %s23, 0
      %p85 = por %p83, %p84
      %p86 = scmp.ne.s32.totalorder %s78, %s80
      %p87 = scmp.eq.s32.totalorder %s28, 1
      %p88 = por %p86, %p87
      %p89 = scmp.ne.s32.totalorder %s80, %s81
      %p90 = scmp.eq.s32.totalorder %s28, 0
      %p91 = por %p89, %p90
      %p92 = scmp.ne.s32.totalorder %s80, %s81
      %p93 = scmp.eq.s32.totalorder %s29, 1
      %p94 = por %p92, %p93
      %p96 = scmp.ne.s32.totalorder %s81, %s95
      %p97 = scmp.eq.s32.totalorder %s29, 0
      %p98 = por %p96, %p97
      %s100 = sadd.s32 %s99, 1
      %p103 = scmp.eq.s32.totalorder %s23, 1
      %p104 = scmp.ne.s32.totalorder %s99, %s101
      %p105 = scmp.eq.s32.totalorder %s23, 0
      %p106 = por %p104, %p105
      %p107 = scmp.ne.s32.totalorder %s99, %s101
      %p108 = scmp.eq.s32.totalorder %s28, 1
      %p109 = por %p107, %p108
      %p110 = scmp.ne.s32.totalorder %s101, %s102
      %p111 = scmp.eq.s32.totalorder %s28, 0
      %p112 = por %p110, %p111
      %p113 = scmp.ne.s32.totalorder %s101, %s102
      %p114 = scmp.eq.s32.totalorder %s29, 1
      %p115 = por %p113, %p114
      %p117 = scmp.ne.s32.totalorder %s102, %s116
      %p118 = scmp.eq.s32.totalorder %s29, 0
      %p119 = por %p117, %p118
      %s121 = sadd.s32 %s120, 1
      %p124 = scmp.eq.s32.totalorder %s23, 1
      %p125 = scmp.ne.s32.totalorder %s120, %s122
      %p126 = scmp.eq.s32.totalorder %s23, 0
      %p127 = por %p125, %p126
      %p128 = scmp.ne.s32.totalorder %s120, %s122
      %p129 = scmp.eq.s32.totalorder %s28, 1
      %p130 = por %p128, %p129
      %p131 = scmp.ne.s32.totalorder %s122, %s123
      %p132 = scmp.eq.s32.totalorder %s28, 0
      %p133 = por %p131, %p132
      %p134 = scmp.ne.s32.totalorder %s122, %s123
      %p135 = scmp.eq.s32.totalorder %s29, 1
      %p136 = por %p134, %p135
      %p138 = scmp.ne.s32.totalorder %s123, %s137
      %p139 = scmp.eq.s32.totalorder %s29, 0
      %p140 = por %p138, %p139
      %s142 = sadd.s32 %s141, 1
      %p145 = scmp.eq.s32.totalorder %s23, 1
      %p146 = scmp.ne.s32.totalorder %s141, %s143
      %p147 = scmp.eq.s32.totalorder %s23, 0
      %p148 = por %p146, %p147
      %p149 = scmp.ne.s32.totalorder %s141, %s143
      %p150 = scmp.eq.s32.totalorder %s28, 1
      %p151 = por %p149, %p150
      %p152 = scmp.ne.s32.totalorder %s143, %s144
      %p153 = scmp.eq.s32.totalorder %s28, 0
      %p154 = por %p152, %p153
      %p155 = scmp.ne.s32.totalorder %s143, %s144
      %p156 = scmp.eq.s32.totalorder %s29, 1
      %p157 = por %p155, %p156
      %p159 = scmp.ne.s32.totalorder %s144, %s158
      %p160 = scmp.eq.s32.totalorder %s29, 0
      %p161 = por %p159, %p160
      %s163 = sadd.s32 %s162, 1
      %p166 = scmp.eq.s32.totalorder %s23, 1
      %p167 = scmp.ne.s32.totalorder %s162, %s164
      %p168 = scmp.eq.s32.totalorder %s23, 0
      %p169 = por %p167, %p168
      %p170 = scmp.ne.s32.totalorder %s162, %s164
      %p171 = scmp.eq.s32.totalorder %s28, 1
      %p172 = por %p170, %p171
      %p173 = scmp.ne.s32.totalorder %s164, %s165
      %p174 = scmp.eq.s32.totalorder %s28, 0
      %p175 = por %p173, %p174
      %p176 = scmp.ne.s32.totalorder %s164, %s165
      %p177 = scmp.eq.s32.totalorder %s29, 1
      %p178 = por %p176, %p177
      %p180 = scmp.ne.s32.totalorder %s165, %s179
      %p181 = scmp.eq.s32.totalorder %s29, 0
      %p182 = por %p180, %p181
      %s184 = sadd.s32 %s183, 1
      %p187 = scmp.eq.s32.totalorder %s23, 1
      %p188 = scmp.ne.s32.totalorder %s183, %s185
      %p189 = scmp.eq.s32.totalorder %s23, 0
      %p190 = por %p188, %p189
      %p191 = scmp.ne.s32.totalorder %s183, %s185
      %p192 = scmp.eq.s32.totalorder %s28, 1
      %p193 = por %p191, %p192
      %p194 = scmp.ne.s32.totalorder %s185, %s186
      %p195 = scmp.eq.s32.totalorder %s28, 0
      %p196 = por %p194, %p195
      %p197 = scmp.ne.s32.totalorder %s185, %s186
      %p198 = scmp.eq.s32.totalorder %s29, 1
      %p199 = por %p197, %p198
      %p201 = scmp.ne.s32.totalorder %s186, %s200
      %p202 = scmp.eq.s32.totalorder %s29, 0
      %p203 = por %p201, %p202
      %s205 = sadd.s32 %s204, 1
      %p208 = scmp.eq.s32.totalorder %s23, 1
      %p209 = scmp.ne.s32.totalorder %s204, %s206
      %p210 = scmp.eq.s32.totalorder %s23, 0
      %p211 = por %p209, %p210
      %p212 = scmp.ne.s32.totalorder %s204, %s206
      %p213 = scmp.eq.s32.totalorder %s28, 1
      %p214 = por %p212, %p213
      %p215 = scmp.ne.s32.totalorder %s206, %s207
      %p216 = scmp.eq.s32.totalorder %s28, 0
      %p217 = por %p215, %p216
      %p218 = scmp.ne.s32.totalorder %s206, %s207
      %p219 = scmp.eq.s32.totalorder %s29, 1
      %p220 = por %p218, %p219
      %p222 = scmp.ne.s32.totalorder %s207, %s221
      %p223 = scmp.eq.s32.totalorder %s29, 0
      %p224 = por %p222, %p223
      %s226 = sadd.s32 %s225, 1
      %p229 = scmp.eq.s32.totalorder %s23, 1
      %p230 = scmp.ne.s32.totalorder %s225, %s227
      %p231 = scmp.eq.s32.totalorder %s23, 0
      %p232 = por %p230, %p231
      %p233 = scmp.ne.s32.totalorder %s225, %s227
      %p234 = scmp.eq.s32.totalorder %s28, 1
      %p235 = por %p233, %p234
      %p236 = scmp.ne.s32.totalorder %s227, %s228
      %p237 = scmp.eq.s32.totalorder %s28, 0
      %p238 = por %p236, %p237
      %p239 = scmp.ne.s32.totalorder %s227, %s228
      %p240 = scmp.eq.s32.totalorder %s29, 1
      %p241 = por %p239, %p240
      %p243 = scmp.ne.s32.totalorder %s228, %s242
      %p244 = scmp.eq.s32.totalorder %s29, 0
      %p245 = por %p243, %p244
      %s247 = sadd.s32 %s246, 1
      %p250 = scmp.eq.s32.totalorder %s23, 1
      %p251 = scmp.ne.s32.totalorder %s246, %s248
      %p252 = scmp.eq.s32.totalorder %s23, 0
      %p253 = por %p251, %p252
      %p254 = scmp.ne.s32.totalorder %s246, %s248
      %p255 = scmp.eq.s32.totalorder %s28, 1
      %p256 = por %p254, %p255
      %p257 = scmp.ne.s32.totalorder %s248, %s249
      %p258 = scmp.eq.s32.totalorder %s28, 0
      %p259 = por %p257, %p258
      %p260 = scmp.ne.s32.totalorder %s248, %s249
      %p261 = scmp.eq.s32.totalorder %s29, 1
      %p262 = por %p260, %p261
      %p264 = scmp.ne.s32.totalorder %s249, %s263
      %p265 = scmp.eq.s32.totalorder %s29, 0
      %p266 = por %p264, %p265
      %s268 = sadd.s32 %s267, 1
      %p271 = scmp.eq.s32.totalorder %s23, 1
      %p272 = scmp.ne.s32.totalorder %s267, %s269
      %p273 = scmp.eq.s32.totalorder %s23, 0
      %p274 = por %p272, %p273
      %p275 = scmp.ne.s32.totalorder %s267, %s269
      %p276 = scmp.eq.s32.totalorder %s28, 1
      %p277 = por %p275, %p276
      %p278 = scmp.ne.s32.totalorder %s269, %s270
      %p279 = scmp.eq.s32.totalorder %s28, 0
      %p280 = por %p278, %p279
      %p281 = scmp.ne.s32.totalorder %s269, %s270
      %p282 = scmp.eq.s32.totalorder %s29, 1
      %p283 = por %p281, %p282
      %p285 = scmp.ne.s32.totalorder %s270, %s284
      %p286 = scmp.eq.s32.totalorder %s29, 0
      %p287 = por %p285, %p286
      %s289 = sadd.s32 %s288, 1
      %p292 = scmp.eq.s32.totalorder %s23, 1
      %p293 = scmp.ne.s32.totalorder %s288, %s290
      %p294 = scmp.eq.s32.totalorder %s23, 0
      %p295 = por %p293, %p294
      %p296 = scmp.ne.s32.totalorder %s288, %s290
      %p297 = scmp.eq.s32.totalorder %s28, 1
      %p298 = por %p296, %p297
      %p299 = scmp.ne.s32.totalorder %s290, %s291
      %p300 = scmp.eq.s32.totalorder %s28, 0
      %p301 = por %p299, %p300
      %p302 = scmp.ne.s32.totalorder %s290, %s291
      %p303 = scmp.eq.s32.totalorder %s29, 1
      %p304 = por %p302, %p303
      %p306 = scmp.ne.s32.totalorder %s291, %s305
      %p307 = scmp.eq.s32.totalorder %s29, 0
      %p308 = por %p306, %p307
      %s309 = ssub.s32 %s23, %s30
      %p310 = scmp.eq.s32.totalorder %s309, 0
      %s312 = sadd.s32 %s311, 1
      %s313 = scalar_select %p310, %s311, %s312
      %p316 = pneg %p310
      %p317 = scmp.eq.s32.totalorder %s23, 1
      %p318 = por %p316, %p317
      %p319 = scmp.ne.s32.totalorder %s311, %s314
      %p320 = scmp.eq.s32.totalorder %s23, 0
      %p321 = por %p319, %p320
      %p322 = scmp.ne.s32.totalorder %s311, %s314
      %p323 = scmp.eq.s32.totalorder %s28, 1
      %p324 = por %p322, %p323
      %p325 = scmp.ne.s32.totalorder %s314, %s315
      %p326 = scmp.eq.s32.totalorder %s28, 0
      %p327 = por %p325, %p326
      %p328 = scmp.ne.s32.totalorder %s314, %s315
      %p329 = scmp.eq.s32.totalorder %s29, 1
      %p330 = por %p328, %p329
      %p332 = scmp.ne.s32.totalorder %s315, %s331
      %p333 = scmp.eq.s32.totalorder %s29, 0
      %p334 = por %p332, %p333
      %p335 = scmp.le.s32.totalorder 1, %s23
      %p336 = scmp.lt.s32.totalorder %s23, 3
      %p337 = pnand %p335, %p336
      %p338 = pneg %p337
      // Predicated region
      $region9: #{tpu_custom_call.1} parent=5 // pred_check
        _
      $region10: #{tpu_custom_call.1} parent=5 // pred_check_branch
        %340 = sbr.rel (%p337) target = $region12
      $region11: #{tpu_custom_call.1} parent=5 // pred_region
        %s341 = ssub.s32 %s23, 1
        // Predicated region
        $region13: #{tpu_custom_call.1} parent=11 // pred_check
          %p342 = pneg %p70
        $region14: #{tpu_custom_call.1} parent=11 // pred_check_branch
          %344 = sbr.rel (%p342) target = $region16
        $region15: #{tpu_custom_call.1} parent=11 // pred_region
          _
        $region16: #{tpu_custom_call.1} parent=11 // pred_fallthru
          _
        // Predicated region
        $region17: #{tpu_custom_call.1} parent=11 // pred_check
          %p345 = pneg %p91
        $region18: #{tpu_custom_call.1} parent=11 // pred_check_branch
          %347 = sbr.rel (%p345) target = $region20
        $region19: #{tpu_custom_call.1} parent=11 // pred_region
          %s349 = ssub.s32 18432, 18432
          %350 = vsyncadd [#allocation5], %s349
          %s351 = sshll.u32 [#allocation4], 4
          %s352 = int_to_ptr.vmem [resolvable:$true] %s351
          %357 = dma.hbm_to_vmem [thread:$0]  %s2, 18432, %s352, [#allocation5], 128, 128, 8
        $region20: #{tpu_custom_call.1} parent=11 // pred_fallthru
          _
        // Predicated region
        $region21: #{tpu_custom_call.1} parent=11 // pred_check
          %p358 = pneg %p112
        $region22: #{tpu_custom_call.1} parent=11 // pred_check_branch
          %360 = sbr.rel (%p358) target = $region24
        $region23: #{tpu_custom_call.1} parent=11 // pred_region
          _
        $region24: #{tpu_custom_call.1} parent=11 // pred_fallthru
          _
        // Predicated region
        $region25: #{tpu_custom_call.1} parent=11 // pred_check
          %p361 = pneg %p133
        $region26: #{tpu_custom_call.1} parent=11 // pred_check_branch
          %363 = sbr.rel (%p361) target = $region28
        $region27: #{tpu_custom_call.1} parent=11 // pred_region
          _
        $region28: #{tpu_custom_call.1} parent=11 // pred_fallthru
          _
        // Predicated region
        $region29: #{tpu_custom_call.1} parent=11 // pred_check
          %p364 = pneg %p154
        $region30: #{tpu_custom_call.1} parent=11 // pred_check_branch
          %366 = sbr.rel (%p364) target = $region32
        $region31: #{tpu_custom_call.1} parent=11 // pred_region
          _
        $region32: #{tpu_custom_call.1} parent=11 // pred_fallthru
          _
        // Predicated region
        $region33: #{tpu_custom_call.1} parent=11 // pred_check
          %p367 = pneg %p175
        $region34: #{tpu_custom_call.1} parent=11 // pred_check_branch
          %369 = sbr.rel (%p367) target = $region36
        $region35: #{tpu_custom_call.1} parent=11 // pred_region
          _
        $region36: #{tpu_custom_call.1} parent=11 // pred_fallthru
          _
        // Predicated region
        $region37: #{tpu_custom_call.1} parent=11 // pred_check
          %p370 = pneg %p196
        $region38: #{tpu_custom_call.1} parent=11 // pred_check_branch
          %372 = sbr.rel (%p370) target = $region40
        $region39: #{tpu_custom_call.1} parent=11 // pred_region
          _
        $region40: #{tpu_custom_call.1} parent=11 // pred_fallthru
          _
        // Predicated region
        $region41: #{tpu_custom_call.1} parent=11 // pred_check
          %p373 = pneg %p217
        $region42: #{tpu_custom_call.1} parent=11 // pred_check_branch
          %375 = sbr.rel (%p373) target = $region44
        $region43: #{tpu_custom_call.1} parent=11 // pred_region
          _
        $region44: #{tpu_custom_call.1} parent=11 // pred_fallthru
          _
        // Predicated region
        $region45: #{tpu_custom_call.1} parent=11 // pred_check
          %p376 = pneg %p238
        $region46: #{tpu_custom_call.1} parent=11 // pred_check_branch
          %378 = sbr.rel (%p376) target = $region48
        $region47: #{tpu_custom_call.1} parent=11 // pred_region
          _
        $region48: #{tpu_custom_call.1} parent=11 // pred_fallthru
          _
        // Predicated region
        $region49: #{tpu_custom_call.1} parent=11 // pred_check
          %p379 = pneg %p259
        $region50: #{tpu_custom_call.1} parent=11 // pred_check_branch
          %381 = sbr.rel (%p379) target = $region52
        $region51: #{tpu_custom_call.1} parent=11 // pred_region
          _
        $region52: #{tpu_custom_call.1} parent=11 // pred_fallthru
          _
        // Predicated region
        $region53: #{tpu_custom_call.1} parent=11 // pred_check
          %p382 = pneg %p280
        $region54: #{tpu_custom_call.1} parent=11 // pred_check_branch
          %384 = sbr.rel (%p382) target = $region56
        $region55: #{tpu_custom_call.1} parent=11 // pred_region
          _
        $region56: #{tpu_custom_call.1} parent=11 // pred_fallthru
          _
        // Predicated region
        $region57: #{tpu_custom_call.1} parent=11 // pred_check
          %p385 = pneg %p301
        $region58: #{tpu_custom_call.1} parent=11 // pred_check_branch
          %387 = sbr.rel (%p385) target = $region60
        $region59: #{tpu_custom_call.1} parent=11 // pred_region
          _
        $region60: #{tpu_custom_call.1} parent=11 // pred_fallthru
          _
      $region12: #{tpu_custom_call.1} parent=5 // pred_fallthru
        _
      %p388 = scmp.lt.s32.totalorder %s23, 2
      // Predicated region
      $region61: #{tpu_custom_call.1} parent=5 // pred_check
        %p389 = pneg %p388
      $region62: #{tpu_custom_call.1} parent=5 // pred_check_branch
        %391 = sbr.rel (%p389) target = $region64
      $region63: #{tpu_custom_call.1} parent=5 // pred_region
        // Predicated region
        $region65: #{tpu_custom_call.1} parent=63 // pred_check
          %p392 = pneg %p43
        $region66: #{tpu_custom_call.1} parent=63 // pred_check_branch
          %394 = sbr.rel (%p392) target = $region68
        $region67: #{tpu_custom_call.1} parent=63 // pred_region
          %p395 = scmp.lt.s32.totalorder %s23, 1
          %s396 = scalar_select %p395, %s23, 1
          %s397 = smul.addr %s396, 32
          %s398 = smul.addr %s397, 8
          %s399 = scalar_lea.vmem %s0, %s398
        $region68: #{tpu_custom_call.1} parent=63 // pred_fallthru
          _
      $region64: #{tpu_custom_call.1} parent=5 // pred_fallthru
        _
      %p400 = scmp.le.s32.totalorder 1, %s23
      %p401 = scmp.lt.s32.totalorder %s23, 3
      %p402 = pnand %p400, %p401
      %p403 = pneg %p402
      // Predicated region
      $region69: #{tpu_custom_call.1} parent=5 // pred_check
        _
      $region70: #{tpu_custom_call.1} parent=5 // pred_check_branch
        %405 = sbr.rel (%p402) target = $region72
      $region71: #{tpu_custom_call.1} parent=5 // pred_region
        %s406 = ssub.s32 %s23, 1
        // Predicated region
        $region73: #{tpu_custom_call.1} parent=71 // pred_check
          %p407 = pneg %p91
        $region74: #{tpu_custom_call.1} parent=71 // pred_check_branch
          %409 = sbr.rel (%p407) target = $region76
        $region75: #{tpu_custom_call.1} parent=71 // pred_region
          %410 = dma.done [#allocation5], 18432
        $region76: #{tpu_custom_call.1} parent=71 // pred_fallthru
          _
        %p411 = scmp.lt.s32.totalorder %s28, 1
        %s412 = scalar_select %p411, %s28, 1
        %s413 = smul.addr %s412, 32
        %s414 = smul.addr %s413, 8
        %s415 = scalar_lea.vmem %s0, %s414
        %p416 = pneg %p49
        %p417 = pneg %p46
        %p418 = pneg %p70
        %p419 = pneg %p67
        %p420 = pneg %p91
        %p421 = pneg %p88
        %p422 = pneg %p112
        %p423 = pneg %p109
        %p424 = pneg %p133
        %p425 = pneg %p130
        %p426 = pneg %p154
        %p427 = pneg %p151
        %p428 = pneg %p175
        %p429 = pneg %p172
        %p430 = pneg %p196
        %p431 = pneg %p193
        %p432 = pneg %p217
        %p433 = pneg %p214
        %p434 = pneg %p238
        %p435 = pneg %p235
        %p436 = pneg %p259
        %p437 = pneg %p256
        %p438 = pneg %p280
        %p439 = pneg %p277
        %p440 = pneg %p301
        %p441 = pneg %p298
        %p442 = pneg %p327
        %p443 = pneg %p324
        %s444 = sand.u32 %s314, 1
        %s445 = scalar_lea.sflag [#allocation6], %s444
        %s446 = sand.u32 %s314, 1
        %s447 = smul.addr %s446, 256
        %s448 = scalar_lea.vmem [#allocation7], %s447
        %p449 = scmp.lt.s32.totalorder %s28, 1
        %s450 = scalar_select %p449, %s28, 1
        %s451 = smul.addr %s450, 32
        %s452 = smul.addr %s451, 8
        %s453 = scalar_lea.vmem %s0, %s452
        %v454 = vld [vmem:[%s453] sm:$0xff]
        %v455 = vld [vmem:[%s453 + $0x8] sm:$0xff]
        %v456 = vld [vmem:[%s453 + $0x10] sm:$0xff]
        %v457 = vld [vmem:[%s453 + $0x18] sm:$0xff]
        %v458 = vld [vmem:[%s453 + $0x20] sm:$0xff]
        %v459 = vld [vmem:[%s453 + $0x28] sm:$0xff]
        %v460 = vld [vmem:[%s453 + $0x30] sm:$0xff]
        %v461 = vld [vmem:[%s453 + $0x38] sm:$0xff]
        %v462 = vld [vmem:[%s453 + $0x40] sm:$0xff]
        %v463 = vld [vmem:[%s453 + $0x48] sm:$0xff]
        %v464 = vld [vmem:[%s453 + $0x50] sm:$0xff]
        %v465 = vld [vmem:[%s453 + $0x58] sm:$0xff]
        %v466 = vld [vmem:[%s453 + $0x60] sm:$0xff]
        %v467 = vld [vmem:[%s453 + $0x68] sm:$0xff]
        %v468 = vld [vmem:[%s453 + $0x70] sm:$0xff]
        %v469 = vld [vmem:[%s453 + $0x78] sm:$0xff]
        %v470 = vld [vmem:[%s453 + $0x80] sm:$0xff]
        %v471 = vld [vmem:[%s453 + $0x88] sm:$0xff]
        %v472 = vld [vmem:[%s453 + $0x90] sm:$0xff]
        %v473 = vld [vmem:[%s453 + $0x98] sm:$0xff]
        %v474 = vld [vmem:[%s453 + $0xa0] sm:$0xff]
        %v475 = vld [vmem:[%s453 + $0xa8] sm:$0xff]
        %v476 = vld [vmem:[%s453 + $0xb0] sm:$0xff]
        %v477 = vld [vmem:[%s453 + $0xb8] sm:$0xff]
        %v478 = vld [vmem:[%s453 + $0xc0] sm:$0xff]
        %v479 = vld [vmem:[%s453 + $0xc8] sm:$0xff]
        %v480 = vld [vmem:[%s453 + $0xd0] sm:$0xff]
        %v481 = vld [vmem:[%s453 + $0xd8] sm:$0xff]
        %v482 = vld [vmem:[%s453 + $0xe0] sm:$0xff]
        %v483 = vld [vmem:[%s453 + $0xe8] sm:$0xff]
        %v484 = vld [vmem:[%s453 + $0xf0] sm:$0xff]
        %v485 = vld [vmem:[%s453 + $0xf8] sm:$0xff]
        %v486 = vld [vmem:[%s1] sm:$0xf]
        %vm487 = vcmask 31744
        %v489 = vsel %vm487, %v454, 0
        %v492 = vsel %vm487, %v455, 0
        %v495 = vsel %vm487, %v456, 0
        %v498 = vsel %vm487, %v457, 0
        %v501 = vsel %vm487, %v458, 0
        %v504 = vsel %vm487, %v459, 0
        %v507 = vsel %vm487, %v460, 0
        %v510 = vsel %vm487, %v461, 0
        %v513 = vsel %vm487, %v462, 0
        %v516 = vsel %vm487, %v463, 0
        %v519 = vsel %vm487, %v464, 0
        %v522 = vsel %vm487, %v465, 0
        %v525 = vsel %vm487, %v466, 0
        %v528 = vsel %vm487, %v467, 0
        %v531 = vsel %vm487, %v468, 0
        %v534 = vsel %vm487, %v469, 0
        %v537 = vsel %vm487, %v470, 0
        %v540 = vsel %vm487, %v471, 0
        %v543 = vsel %vm487, %v472, 0
        %v546 = vsel %vm487, %v473, 0
        %v549 = vsel %vm487, %v474, 0
        %v552 = vsel %vm487, %v475, 0
        %v555 = vsel %vm487, %v476, 0
        %v558 = vsel %vm487, %v477, 0
        %v561 = vsel %vm487, %v478, 0
        %v564 = vsel %vm487, %v479, 0
        %v567 = vsel %vm487, %v480, 0
        %v570 = vsel %vm487, %v481, 0
        %v573 = vsel %vm487, %v482, 0
        %v576 = vsel %vm487, %v483, 0
        %v579 = vsel %vm487, %v484, 0
        %v582 = vsel %vm487, %v485, 0
        %vm584 = vcmask 1043456
        %v586 = vsel %vm584, %v486, 0
        %588 = vmatprep.subr.mxu0 0.0
        %589 = vmatpush1.msra.mxu0 %v586
        %590 = vmatprep.subr.mxu0 0.0
        %591 = vmatpush1.msra.mxu0 0.0
        %592 = vmatprep.subr.mxu0 0.0
        %593 = vmatpush1.msra.mxu0 0.0
        %594 = vmatprep.subr.mxu0 0.0
        %595 = vmatpush1.msra.mxu0 0.0
        %596 = vmatprep.subr.mxu0 0.0
        %597 = vmatpush1.msra.mxu0 0.0
        %598 = vmatprep.subr.mxu0 0.0
        %599 = vmatpush1.msra.mxu0 0.0
        %600 = vmatprep.subr.mxu0 0.0
        %601 = vmatpush1.msra.mxu0 0.0
        %602 = vmatprep.subr.mxu0 0.0
        %603 = vmatpush1.msra.mxu0 0.0
        %604 = vmatprep.subr.mxu0 0.0
        %605 = vmatpush1.msra.mxu0 0.0
        %606 = vmatprep.subr.mxu0 0.0
        %607 = vmatpush1.msra.mxu0 0.0
        %608 = vmatprep.subr.mxu0 0.0
        %609 = vmatpush1.msra.mxu0 0.0
        %610 = vmatprep.subr.mxu0 0.0
        %611 = vmatpush1.msra.mxu0 0.0
        %612 = vmatprep.subr.mxu0 0.0
        %613 = vmatpush1.msra.mxu0 0.0
        %614 = vmatprep.subr.mxu0 0.0
        %615 = vmatpush1.msra.mxu0 0.0
        %616 = vmatprep.subr.mxu0 0.0
        %617 = vmatpush1.msra.mxu0 0.0
        %618 = vmatprep.subr.mxu0 0.0
        %619 = vmatpush1.msra.mxu0 0.0
        %620 = vmatprep.subr.mxu0 0.0
        %621 = vmatpush1.msra.mxu0 0.0
        %622 = vmatprep.subr.mxu0 0.0
        %623 = vmatpush1.msra.mxu0 0.0
        %624 = vmatprep.subr.mxu0 0.0
        %625 = vmatpush1.msra.mxu0 0.0
        %626 = vmatprep.subr.mxu0 0.0
        %627 = vmatpush1.msra.mxu0 0.0
        %628 = vmatprep.subr.mxu0 0.0
        %629 = vmatpush1.msra.mxu0 0.0
        %630 = vmatprep.subr.mxu0 0.0
        %631 = vmatpush1.msra.mxu0 0.0
        %632 = vmatprep.subr.mxu0 0.0
        %633 = vmatpush1.msra.mxu0 0.0
        %634 = vmatprep.subr.mxu0 0.0
        %635 = vmatpush1.msra.mxu0 0.0
        %636 = vmatprep.subr.mxu0 0.0
        %637 = vmatpush1.msra.mxu0 0.0
        %638 = vmatprep.subr.mxu0 0.0
        %639 = vmatpush1.msra.mxu0 0.0
        %640 = vmatprep.subr.mxu0 0.0
        %641 = vmatpush1.msra.mxu0 0.0
        %642 = vmatprep.subr.mxu0 0.0
        %643 = vmatpush1.msra.mxu0 0.0
        %644 = vmatprep.subr.mxu0 0.0
        %645 = vmatpush1.msra.mxu0 0.0
        %646 = vmatprep.subr.mxu0 0.0
        %647 = vmatpush1.msra.mxu0 0.0
        %648 = vmatprep.subr.mxu0 0.0
        %649 = vmatpush1.msra.mxu0 0.0
        %650 = vmatprep.subr.mxu0 0.0
        %651 = vmatpush1.msra.mxu0 0.0
        %652 = vmatprep.mubr.f32.mxu0 0.0
        %653 = vmatmul.mubr.f32.gmra.mrb[0].mxu0 %v489
        %v654 = vpop.f32.mrb[0].mxu0
        %v655 = vadd.f32 0.0, %v654
        %v656 = vpop.f32.mrb[0].mxu0
        %657 = vmatprep.mubr.f32.mxu0 0.0
        %658 = vmatmul.mubr.f32.gmra.mrb[0].mxu0 %v492
        %v659 = vpop.f32.mrb[0].mxu0
        %v660 = vadd.f32 0.0, %v659
        %v661 = vpop.f32.mrb[0].mxu0
        %662 = vmatprep.mubr.f32.mxu0 0.0
        %663 = vmatmul.mubr.f32.gmra.mrb[0].mxu0 %v495
        %v664 = vpop.f32.mrb[0].mxu0
        %v665 = vadd.f32 0.0, %v664
        %v666 = vpop.f32.mrb[0].mxu0
        %667 = vmatprep.mubr.f32.mxu0 0.0
        %668 = vmatmul.mubr.f32.gmra.mrb[0].mxu0 %v498
        %v669 = vpop.f32.mrb[0].mxu0
        %v670 = vadd.f32 0.0, %v669
        %v671 = vpop.f32.mrb[0].mxu0
        %672 = vmatprep.mubr.f32.mxu0 0.0
        %673 = vmatmul.mubr.f32.gmra.mrb[0].mxu0 %v501
        %v674 = vpop.f32.mrb[0].mxu0
        %v675 = vadd.f32 0.0, %v674
        %v676 = vpop.f32.mrb[0].mxu0
        %677 = vmatprep.mubr.f32.mxu0 0.0
        %678 = vmatmul.mubr.f32.gmra.mrb[0].mxu0 %v504
        %v679 = vpop.f32.mrb[0].mxu0
        %v680 = vadd.f32 0.0, %v679
        %v681 = vpop.f32.mrb[0].mxu0
        %682 = vmatprep.mubr.f32.mxu0 0.0
        %683 = vmatmul.mubr.f32.gmra.mrb[0].mxu0 %v507
        %v684 = vpop.f32.mrb[0].mxu0
        %v685 = vadd.f32 0.0, %v684
        %v686 = vpop.f32.mrb[0].mxu0
        %687 = vmatprep.mubr.f32.mxu0 0.0
        %688 = vmatmul.mubr.f32.gmra.mrb[0].mxu0 %v510
        %v689 = vpop.f32.mrb[0].mxu0
        %v690 = vadd.f32 0.0, %v689
        %v691 = vpop.f32.mrb[0].mxu0
        %692 = vmatprep.mubr.f32.mxu0 0.0
        %693 = vmatmul.mubr.f32.gmra.mrb[0].mxu0 %v513
        %v694 = vpop.f32.mrb[0].mxu0
        %v695 = vadd.f32 0.0, %v694
        %v696 = vpop.f32.mrb[0].mxu0
        %697 = vmatprep.mubr.f32.mxu0 0.0
        %698 = vmatmul.mubr.f32.gmra.mrb[0].mxu0 %v516
        %v699 = vpop.f32.mrb[0].mxu0
        %v700 = vadd.f32 0.0, %v699
        %v701 = vpop.f32.mrb[0].mxu0
        %702 = vmatprep.mubr.f32.mxu0 0.0
        %703 = vmatmul.mubr.f32.gmra.mrb[0].mxu0 %v519
        %v704 = vpop.f32.mrb[0].mxu0
        %v705 = vadd.f32 0.0, %v704
        %v706 = vpop.f32.mrb[0].mxu0
        %707 = vmatprep.mubr.f32.mxu0 0.0
        %708 = vmatmul.mubr.f32.gmra.mrb[0].mxu0 %v522
        %v709 = vpop.f32.mrb[0].mxu0
        %v710 = vadd.f32 0.0, %v709
        %v711 = vpop.f32.mrb[0].mxu0
        %712 = vmatprep.mubr.f32.mxu0 0.0
        %713 = vmatmul.mubr.f32.gmra.mrb[0].mxu0 %v525
        %v714 = vpop.f32.mrb[0].mxu0
        %v715 = vadd.f32 0.0, %v714
        %v716 = vpop.f32.mrb[0].mxu0
        %717 = vmatprep.mubr.f32.mxu0 0.0
        %718 = vmatmul.mubr.f32.gmra.mrb[0].mxu0 %v528
        %v719 = vpop.f32.mrb[0].mxu0
        %v720 = vadd.f32 0.0, %v719
        %v721 = vpop.f32.mrb[0].mxu0
        %722 = vmatprep.mubr.f32.mxu0 0.0
        %723 = vmatmul.mubr.f32.gmra.mrb[0].mxu0 %v531
        %v724 = vpop.f32.mrb[0].mxu0
        %v725 = vadd.f32 0.0, %v724
        %v726 = vpop.f32.mrb[0].mxu0
        %727 = vmatprep.mubr.f32.mxu0 0.0
        %728 = vmatmul.mubr.f32.gmra.mrb[0].mxu0 %v534
        %v729 = vpop.f32.mrb[0].mxu0
        %v730 = vadd.f32 0.0, %v729
        %v731 = vpop.f32.mrb[0].mxu0
        %732 = vmatprep.mubr.f32.mxu0 0.0
        %733 = vmatmul.mubr.f32.gmra.mrb[0].mxu0 %v537
        %v734 = vpop.f32.mrb[0].mxu0
        %v735 = vadd.f32 0.0, %v734
        %v736 = vpop.f32.mrb[0].mxu0
        %737 = vmatprep.mubr.f32.mxu0 0.0
        %738 = vmatmul.mubr.f32.gmra.mrb[0].mxu0 %v540
        %v739 = vpop.f32.mrb[0].mxu0
        %v740 = vadd.f32 0.0, %v739
        %v741 = vpop.f32.mrb[0].mxu0
        %742 = vmatprep.mubr.f32.mxu0 0.0
        %743 = vmatmul.mubr.f32.gmra.mrb[0].mxu0 %v543
        %v744 = vpop.f32.mrb[0].mxu0
        %v745 = vadd.f32 0.0, %v744
        %v746 = vpop.f32.mrb[0].mxu0
        %747 = vmatprep.mubr.f32.mxu0 0.0
        %748 = vmatmul.mubr.f32.gmra.mrb[0].mxu0 %v546
        %v749 = vpop.f32.mrb[0].mxu0
        %v750 = vadd.f32 0.0, %v749
        %v751 = vpop.f32.mrb[0].mxu0
        %752 = vmatprep.mubr.f32.mxu0 0.0
        %753 = vmatmul.mubr.f32.gmra.mrb[0].mxu0 %v549
        %v754 = vpop.f32.mrb[0].mxu0
        %v755 = vadd.f32 0.0, %v754
        %v756 = vpop.f32.mrb[0].mxu0
        %757 = vmatprep.mubr.f32.mxu0 0.0
        %758 = vmatmul.mubr.f32.gmra.mrb[0].mxu0 %v552
        %v759 = vpop.f32.mrb[0].mxu0
        %v760 = vadd.f32 0.0, %v759
        %v761 = vpop.f32.mrb[0].mxu0
        %762 = vmatprep.mubr.f32.mxu0 0.0
        %763 = vmatmul.mubr.f32.gmra.mrb[0].mxu0 %v555
        %v764 = vpop.f32.mrb[0].mxu0
        %v765 = vadd.f32 0.0, %v764
        %v766 = vpop.f32.mrb[0].mxu0
        %767 = vmatprep.mubr.f32.mxu0 0.0
        %768 = vmatmul.mubr.f32.gmra.mrb[0].mxu0 %v558
        %v769 = vpop.f32.mrb[0].mxu0
        %v770 = vadd.f32 0.0, %v769
        %v771 = vpop.f32.mrb[0].mxu0
        %772 = vmatprep.mubr.f32.mxu0 0.0
        %773 = vmatmul.mubr.f32.gmra.mrb[0].mxu0 %v561
        %v774 = vpop.f32.mrb[0].mxu0
        %v775 = vadd.f32 0.0, %v774
        %v776 = vpop.f32.mrb[0].mxu0
        %777 = vmatprep.mubr.f32.mxu0 0.0
        %778 = vmatmul.mubr.f32.gmra.mrb[0].mxu0 %v564
        %v779 = vpop.f32.mrb[0].mxu0
        %v780 = vadd.f32 0.0, %v779
        %v781 = vpop.f32.mrb[0].mxu0
        %782 = vmatprep.mubr.f32.mxu0 0.0
        %783 = vmatmul.mubr.f32.gmra.mrb[0].mxu0 %v567
        %v784 = vpop.f32.mrb[0].mxu0
        %v785 = vadd.f32 0.0, %v784
        %v786 = vpop.f32.mrb[0].mxu0
        %787 = vmatprep.mubr.f32.mxu0 0.0
        %788 = vmatmul.mubr.f32.gmra.mrb[0].mxu0 %v570
        %v789 = vpop.f32.mrb[0].mxu0
        %v790 = vadd.f32 0.0, %v789
        %v791 = vpop.f32.mrb[0].mxu0
        %792 = vmatprep.mubr.f32.mxu0 0.0
        %793 = vmatmul.mubr.f32.gmra.mrb[0].mxu0 %v573
        %v794 = vpop.f32.mrb[0].mxu0
        %v795 = vadd.f32 0.0, %v794
        %v796 = vpop.f32.mrb[0].mxu0
        %797 = vmatprep.mubr.f32.mxu0 0.0
        %798 = vmatmul.mubr.f32.gmra.mrb[0].mxu0 %v576
        %v799 = vpop.f32.mrb[0].mxu0
        %v800 = vadd.f32 0.0, %v799
        %v801 = vpop.f32.mrb[0].mxu0
        %802 = vmatprep.mubr.f32.mxu0 0.0
        %803 = vmatmul.mubr.f32.gmra.mrb[0].mxu0 %v579
        %v804 = vpop.f32.mrb[0].mxu0
        %v805 = vadd.f32 0.0, %v804
        %v806 = vpop.f32.mrb[0].mxu0
        %807 = vmatprep.mubr.f32.mxu0 0.0
        %808 = vmatmul.mubr.f32.gmra.mrb[0].mxu0 %v582
        %v809 = vpop.f32.mrb[0].mxu0
        %v810 = vadd.f32 0.0, %v809
        %v811 = vpop.f32.mrb[0].mxu0
        %812 = vdwg.mxu0
        %v813 = vld [vmem:[%s5] sm:$0x1]
        %v815 = vlaneseq
        %v816 = vshrl.u32 %v815, 7
        %v817 = vsub.s32 0, %v816
        %v818 = vrot.slane %v813, %v817
        %v820 = vmul.f32 %v655, %v818
        %v821 = vmul.f32 %v660, %v818
        %v822 = vmul.f32 %v665, %v818
        %v823 = vmul.f32 %v670, %v818
        %v824 = vmul.f32 %v675, %v818
        %v825 = vmul.f32 %v680, %v818
        %v826 = vmul.f32 %v685, %v818
        %v827 = vmul.f32 %v690, %v818
        %v828 = vmul.f32 %v695, %v818
        %v829 = vmul.f32 %v700, %v818
        %v830 = vmul.f32 %v705, %v818
        %v831 = vmul.f32 %v710, %v818
        %v832 = vmul.f32 %v715, %v818
        %v833 = vmul.f32 %v720, %v818
        %v834 = vmul.f32 %v725, %v818
        %v835 = vmul.f32 %v730, %v818
        %v836 = vmul.f32 %v735, %v818
        %v837 = vmul.f32 %v740, %v818
        %v838 = vmul.f32 %v745, %v818
        %v839 = vmul.f32 %v750, %v818
        %v840 = vmul.f32 %v755, %v818
        %v841 = vmul.f32 %v760, %v818
        %v842 = vmul.f32 %v765, %v818
        %v843 = vmul.f32 %v770, %v818
        %v844 = vmul.f32 %v775, %v818
        %v845 = vmul.f32 %v780, %v818
        %v846 = vmul.f32 %v785, %v818
        %v847 = vmul.f32 %v790, %v818
        %v848 = vmul.f32 %v795, %v818
        %v849 = vmul.f32 %v800, %v818
        %v850 = vmul.f32 %v805, %v818
        %v851 = vmul.f32 %v810, %v818
        %v852 = vld [vmem:[%s6] sm:$0x1]
        %v854 = vlaneseq
        %v855 = vshrl.u32 %v854, 7
        %v856 = vsub.s32 0, %v855
        %v857 = vrot.slane %v852, %v856
        %v859 = vadd.f32 %v820, %v857
        %v860 = vadd.f32 %v821, %v857
        %v861 = vadd.f32 %v822, %v857
        %v862 = vadd.f32 %v823, %v857
        %v863 = vadd.f32 %v824, %v857
        %v864 = vadd.f32 %v825, %v857
        %v865 = vadd.f32 %v826, %v857
        %v866 = vadd.f32 %v827, %v857
        %v867 = vadd.f32 %v828, %v857
        %v868 = vadd.f32 %v829, %v857
        %v869 = vadd.f32 %v830, %v857
        %v870 = vadd.f32 %v831, %v857
        %v871 = vadd.f32 %v832, %v857
        %v872 = vadd.f32 %v833, %v857
        %v873 = vadd.f32 %v834, %v857
        %v874 = vadd.f32 %v835, %v857
        %v875 = vadd.f32 %v836, %v857
        %v876 = vadd.f32 %v837, %v857
        %v877 = vadd.f32 %v838, %v857
        %v878 = vadd.f32 %v839, %v857
        %v879 = vadd.f32 %v840, %v857
        %v880 = vadd.f32 %v841, %v857
        %v881 = vadd.f32 %v842, %v857
        %v882 = vadd.f32 %v843, %v857
        %v883 = vadd.f32 %v844, %v857
        %v884 = vadd.f32 %v845, %v857
        %v885 = vadd.f32 %v846, %v857
        %v886 = vadd.f32 %v847, %v857
        %v887 = vadd.f32 %v848, %v857
        %v888 = vadd.f32 %v849, %v857
        %v889 = vadd.f32 %v850, %v857
        %v890 = vadd.f32 %v851, %v857
        %v891 = vmax.f32 %v859, 0.0
        %v892 = vmax.f32 %v860, 0.0
        %v893 = vmax.f32 %v861, 0.0
        %v894 = vmax.f32 %v862, 0.0
        %v895 = vmax.f32 %v863, 0.0
        %v896 = vmax.f32 %v864, 0.0
        %v897 = vmax.f32 %v865, 0.0
        %v898 = vmax.f32 %v866, 0.0
        %v899 = vmax.f32 %v867, 0.0
        %v900 = vmax.f32 %v868, 0.0
        %v901 = vmax.f32 %v869, 0.0
        %v902 = vmax.f32 %v870, 0.0
        %v903 = vmax.f32 %v871, 0.0
        %v904 = vmax.f32 %v872, 0.0
        %v905 = vmax.f32 %v873, 0.0
        %v906 = vmax.f32 %v874, 0.0
        %v907 = vmax.f32 %v875, 0.0
        %v908 = vmax.f32 %v876, 0.0
        %v909 = vmax.f32 %v877, 0.0
        %v910 = vmax.f32 %v878, 0.0
        %v911 = vmax.f32 %v879, 0.0
        %v912 = vmax.f32 %v880, 0.0
        %v913 = vmax.f32 %v881, 0.0
        %v914 = vmax.f32 %v882, 0.0
        %v915 = vmax.f32 %v883, 0.0
        %v916 = vmax.f32 %v884, 0.0
        %v917 = vmax.f32 %v885, 0.0
        %v918 = vmax.f32 %v886, 0.0
        %v919 = vmax.f32 %v887, 0.0
        %v920 = vmax.f32 %v888, 0.0
        %v921 = vmax.f32 %v889, 0.0
        %v922 = vmax.f32 %v890, 0.0
        %923 = vst [vmem:[#allocation2] sm:$0xff] 0.0
        %924 = vst [vmem:[#allocation2 + $0x8] sm:$0xff] 0.0
        %925 = vst [vmem:[#allocation2 + $0x10] sm:$0x3] 0.0
        %926 = vst [vmem:[#allocation2 + $0x18] sm:$0xff] 0.0
        %927 = vst [vmem:[#allocation2 + $0x20] sm:$0xff] 0.0
        %928 = vst [vmem:[#allocation2 + $0x28] sm:$0x3] 0.0
        %929 = vst [vmem:[#allocation2 + $0x30] sm:$0xff] 0.0
        %930 = vst [vmem:[#allocation2 + $0x38] sm:$0xff] 0.0
        %931 = vst [vmem:[#allocation2 + $0x40] sm:$0x3] 0.0
        %932 = vst [vmem:[#allocation2 + $0x48] sm:$0xff] 0.0
        %933 = vst [vmem:[#allocation2 + $0x50] sm:$0xff] 0.0
        %934 = vst [vmem:[#allocation2 + $0x58] sm:$0x3] 0.0
        %935 = vst [vmem:[#allocation2 + $0x60] sm:$0xff] 0.0
        %936 = vst [vmem:[#allocation2 + $0x68] sm:$0xff] 0.0
        %937 = vst [vmem:[#allocation2 + $0x70] sm:$0x3] 0.0
        %938 = vst [vmem:[#allocation2 + $0x78] sm:$0xff] 0.0
        %939 = vst [vmem:[#allocation2 + $0x80] sm:$0xff] 0.0
        %940 = vst [vmem:[#allocation2 + $0x88] sm:$0x3] 0.0
        %941 = vst [vmem:[#allocation2 + $0x90] sm:$0xff] 0.0
        %942 = vst [vmem:[#allocation2 + $0x98] sm:$0xff] 0.0
        %943 = vst [vmem:[#allocation2 + $0xa0] sm:$0x3] 0.0
        %944 = vst [vmem:[#allocation2 + $0xa8] sm:$0xff] 0.0
        %945 = vst [vmem:[#allocation2 + $0xb0] sm:$0xff] 0.0
        %946 = vst [vmem:[#allocation2 + $0xb8] sm:$0x3] 0.0
        %947 = vst [vmem:[#allocation2 + $0xc0] sm:$0xff] 0.0
        %948 = vst [vmem:[#allocation2 + $0xc8] sm:$0xff] 0.0
        %949 = vst [vmem:[#allocation2 + $0xd0] sm:$0x3] 0.0
        %950 = vst [vmem:[#allocation2 + $0xd8] sm:$0xff] 0.0
        %951 = vst [vmem:[#allocation2 + $0xe0] sm:$0xff] 0.0
        %952 = vst [vmem:[#allocation2 + $0xe8] sm:$0x3] 0.0
        %953 = vst [vmem:[#allocation2 + $0xf0] sm:$0xff] 0.0
        %954 = vst [vmem:[#allocation2 + $0xf8] sm:$0xff] 0.0
        %955 = vst [vmem:[#allocation2 + $0x100] sm:$0x3] 0.0
        %956 = vst [vmem:[#allocation2 + $0x108] sm:$0xff] 0.0
        %957 = vst [vmem:[#allocation2 + $0x110] sm:$0xff] 0.0
        %958 = vst [vmem:[#allocation2 + $0x118] sm:$0x3] 0.0
        %959 = vst [vmem:[#allocation2 + $0x120] sm:$0xff] 0.0
        %960 = vst [vmem:[#allocation2 + $0x128] sm:$0xff] 0.0
        %961 = vst [vmem:[#allocation2 + $0x130] sm:$0x3] 0.0
        %962 = vst [vmem:[#allocation2 + $0x138] sm:$0xff] 0.0
        %963 = vst [vmem:[#allocation2 + $0x140] sm:$0xff] 0.0
        %964 = vst [vmem:[#allocation2 + $0x148] sm:$0x3] 0.0
        %965 = vst [vmem:[#allocation2 + $0x150] sm:$0xff] 0.0
        %966 = vst [vmem:[#allocation2 + $0x158] sm:$0xff] 0.0
        %967 = vst [vmem:[#allocation2 + $0x160] sm:$0x3] 0.0
        %968 = vst [vmem:[#allocation2 + $0x168] sm:$0xff] 0.0
        %969 = vst [vmem:[#allocation2 + $0x170] sm:$0xff] 0.0
        %970 = vst [vmem:[#allocation2 + $0x178] sm:$0x3] 0.0
        %971 = vst [vmem:[#allocation2 + $0x180] sm:$0xff] 0.0
        %972 = vst [vmem:[#allocation2 + $0x188] sm:$0xff] 0.0
        %973 = vst [vmem:[#allocation2 + $0x190] sm:$0x3] 0.0
        %974 = vst [vmem:[#allocation2 + $0x198] sm:$0xff] 0.0
        %975 = vst [vmem:[#allocation2 + $0x1a0] sm:$0xff] 0.0
        %976 = vst [vmem:[#allocation2 + $0x1a8] sm:$0x3] 0.0
        %s977 = scalar_lea.vmem [#allocation2], 24
        %978 = vst [vmem:[%s977 + $0x1] sm:$0xff] %v891
        %979 = vst [vmem:[%s977 + $0x9] sm:$0xff] %v892
        %980 = vst [vmem:[%s977 + $0x19] sm:$0xff] %v893
        %981 = vst [vmem:[%s977 + $0x21] sm:$0xff] %v894
        %982 = vst [vmem:[%s977 + $0x31] sm:$0xff] %v895
        %983 = vst [vmem:[%s977 + $0x39] sm:$0xff] %v896
        %984 = vst [vmem:[%s977 + $0x49] sm:$0xff] %v897
        %985 = vst [vmem:[%s977 + $0x51] sm:$0xff] %v898
        %986 = vst [vmem:[%s977 + $0x61] sm:$0xff] %v899
        %987 = vst [vmem:[%s977 + $0x69] sm:$0xff] %v900
        %988 = vst [vmem:[%s977 + $0x79] sm:$0xff] %v901
        %989 = vst [vmem:[%s977 + $0x81] sm:$0xff] %v902
        %990 = vst [vmem:[%s977 + $0x91] sm:$0xff] %v903
        %991 = vst [vmem:[%s977 + $0x99] sm:$0xff] %v904
        %992 = vst [vmem:[%s977 + $0xa9] sm:$0xff] %v905
        %993 = vst [vmem:[%s977 + $0xb1] sm:$0xff] %v906
        %994 = vst [vmem:[%s977 + $0xc1] sm:$0xff] %v907
        %995 = vst [vmem:[%s977 + $0xc9] sm:$0xff] %v908
        %996 = vst [vmem:[%s977 + $0xd9] sm:$0xff] %v909
        %997 = vst [vmem:[%s977 + $0xe1] sm:$0xff] %v910
        %998 = vst [vmem:[%s977 + $0xf1] sm:$0xff] %v911
        %999 = vst [vmem:[%s977 + $0xf9] sm:$0xff] %v912
        %1000 = vst [vmem:[%s977 + $0x109] sm:$0xff] %v913
        %1001 = vst [vmem:[%s977 + $0x111] sm:$0xff] %v914
        %1002 = vst [vmem:[%s977 + $0x121] sm:$0xff] %v915
        %1003 = vst [vmem:[%s977 + $0x129] sm:$0xff] %v916
        %1004 = vst [vmem:[%s977 + $0x139] sm:$0xff] %v917
        %1005 = vst [vmem:[%s977 + $0x141] sm:$0xff] %v918
        %1006 = vst [vmem:[%s977 + $0x151] sm:$0xff] %v919
        %1007 = vst [vmem:[%s977 + $0x159] sm:$0xff] %v920
        %1008 = vst [vmem:[%s977 + $0x169] sm:$0xff] %v921
        %1009 = vst [vmem:[%s977 + $0x171] sm:$0xff] %v922
        %v1010 = vld [vmem:[#allocation2] sm:$0xff]
        %v1011 = vld [vmem:[#allocation2 + $0x8] sm:$0xff]
        %v1012 = vld [vmem:[#allocation2 + $0x18] sm:$0xff]
        %v1013 = vld [vmem:[#allocation2 + $0x20] sm:$0xff]
        %v1014 = vld [vmem:[#allocation2 + $0x30] sm:$0xff]
        %v1015 = vld [vmem:[#allocation2 + $0x38] sm:$0xff]
        %v1016 = vld [vmem:[#allocation2 + $0x48] sm:$0xff]
        %v1017 = vld [vmem:[#allocation2 + $0x50] sm:$0xff]
        %v1018 = vld [vmem:[#allocation2 + $0x60] sm:$0xff]
        %v1019 = vld [vmem:[#allocation2 + $0x68] sm:$0xff]
        %v1020 = vld [vmem:[#allocation2 + $0x78] sm:$0xff]
        %v1021 = vld [vmem:[#allocation2 + $0x80] sm:$0xff]
        %v1022 = vld [vmem:[#allocation2 + $0x90] sm:$0xff]
        %v1023 = vld [vmem:[#allocation2 + $0x98] sm:$0xff]
        %v1024 = vld [vmem:[#allocation2 + $0xa8] sm:$0xff]
        %v1025 = vld [vmem:[#allocation2 + $0xb0] sm:$0xff]
        %v1026 = vld [vmem:[#allocation2 + $0xc0] sm:$0xff]
        %v1027 = vld [vmem:[#allocation2 + $0xc8] sm:$0xff]
        %v1028 = vld [vmem:[#allocation2 + $0xd8] sm:$0xff]
        %v1029 = vld [vmem:[#allocation2 + $0xe0] sm:$0xff]
        %v1030 = vld [vmem:[#allocation2 + $0xf0] sm:$0xff]
        %v1031 = vld [vmem:[#allocation2 + $0xf8] sm:$0xff]
        %v1032 = vld [vmem:[#allocation2 + $0x108] sm:$0xff]
        %v1033 = vld [vmem:[#allocation2 + $0x110] sm:$0xff]
        %v1034 = vld [vmem:[#allocation2 + $0x120] sm:$0xff]
        %v1035 = vld [vmem:[#allocation2 + $0x128] sm:$0xff]
        %v1036 = vld [vmem:[#allocation2 + $0x138] sm:$0xff]
        %v1037 = vld [vmem:[#allocation2 + $0x140] sm:$0xff]
        %v1038 = vld [vmem:[#allocation2 + $0x150] sm:$0xff]
        %v1039 = vld [vmem:[#allocation2 + $0x158] sm:$0xff]
        %v1040 = vld [vmem:[#allocation2 + $0x168] sm:$0xff]
        %v1041 = vld [vmem:[#allocation2 + $0x170] sm:$0xff]
        %1042 = vst [vmem:[#allocation3] sm:$0xff] %v1010
        %1043 = vst [vmem:[#allocation3 + $0x48] sm:$0xff] %v1011
        %1044 = vst [vmem:[#allocation3 + $0x90] sm:$0xff] %v1012
        %1045 = vst [vmem:[#allocation3 + $0xd8] sm:$0xff] %v1013
        %1046 = vst [vmem:[#allocation3 + $0x120] sm:$0xff] %v1014
        %1047 = vst [vmem:[#allocation3 + $0x168] sm:$0xff] %v1015
        %1048 = vst [vmem:[#allocation3 + $0x1b0] sm:$0xff] %v1016
        %1049 = vst [vmem:[#allocation3 + $0x1f8] sm:$0xff] %v1017
        %1050 = vst [vmem:[#allocation3 + $0x240] sm:$0xff] %v1018
        %1051 = vst [vmem:[#allocation3 + $0x288] sm:$0xff] %v1019
        %1052 = vst [vmem:[#allocation3 + $0x2d0] sm:$0xff] %v1020
        %1053 = vst [vmem:[#allocation3 + $0x318] sm:$0xff] %v1021
        %1054 = vst [vmem:[#allocation3 + $0x360] sm:$0xff] %v1022
        %1055 = vst [vmem:[#allocation3 + $0x3a8] sm:$0xff] %v1023
        %1056 = vst [vmem:[#allocation3 + $0x3f0] sm:$0xff] %v1024
        %1057 = vst [vmem:[#allocation3 + $0x438] sm:$0xff] %v1025
        %1058 = vst [vmem:[#allocation3 + $0x480] sm:$0xff] %v1026
        %1059 = vst [vmem:[#allocation3 + $0x4c8] sm:$0xff] %v1027
        %1060 = vst [vmem:[#allocation3 + $0x510] sm:$0xff] %v1028
        %1061 = vst [vmem:[#allocation3 + $0x558] sm:$0xff] %v1029
        %1062 = vst [vmem:[#allocation3 + $0x5a0] sm:$0xff] %v1030
        %1063 = vst [vmem:[#allocation3 + $0x5e8] sm:$0xff] %v1031
        %1064 = vst [vmem:[#allocation3 + $0x630] sm:$0xff] %v1032
        %1065 = vst [vmem:[#allocation3 + $0x678] sm:$0xff] %v1033
        %1066 = vst [vmem:[#allocation3 + $0x6c0] sm:$0xff] %v1034
        %1067 = vst [vmem:[#allocation3 + $0x708] sm:$0xff] %v1035
        %1068 = vst [vmem:[#allocation3 + $0x750] sm:$0xff] %v1036
        %1069 = vst [vmem:[#allocation3 + $0x798] sm:$0xff] %v1037
        %1070 = vst [vmem:[#allocation3 + $0x7e0] sm:$0xff] %v1038
        %1071 = vst [vmem:[#allocation3 + $0x828] sm:$0xff] %v1039
        %1072 = vst [vmem:[#allocation3 + $0x870] sm:$0xff] %v1040
        %1073 = vst [vmem:[#allocation3 + $0x8b8] sm:$0xff] %v1041
        %v1074 = vld [vmem:[#allocation2 + $0x1] sm:$0xff]
        %v1075 = vld [vmem:[#allocation2 + $0x9] sm:$0xff]
        %v1076 = vld [vmem:[#allocation2 + $0x19] sm:$0xff]
        %v1077 = vld [vmem:[#allocation2 + $0x21] sm:$0xff]
        %v1078 = vld [vmem:[#allocation2 + $0x31] sm:$0xff]
        %v1079 = vld [vmem:[#allocation2 + $0x39] sm:$0xff]
        %v1080 = vld [vmem:[#allocation2 + $0x49] sm:$0xff]
        %v1081 = vld [vmem:[#allocation2 + $0x51] sm:$0xff]
        %v1082 = vld [vmem:[#allocation2 + $0x61] sm:$0xff]
        %v1083 = vld [vmem:[#allocation2 + $0x69] sm:$0xff]
        %v1084 = vld [vmem:[#allocation2 + $0x79] sm:$0xff]
        %v1085 = vld [vmem:[#allocation2 + $0x81] sm:$0xff]
        %v1086 = vld [vmem:[#allocation2 + $0x91] sm:$0xff]
        %v1087 = vld [vmem:[#allocation2 + $0x99] sm:$0xff]
        %v1088 = vld [vmem:[#allocation2 + $0xa9] sm:$0xff]
        %v1089 = vld [vmem:[#allocation2 + $0xb1] sm:$0xff]
        %v1090 = vld [vmem:[#allocation2 + $0xc1] sm:$0xff]
        %v1091 = vld [vmem:[#allocation2 + $0xc9] sm:$0xff]
        %v1092 = vld [vmem:[#allocation2 + $0xd9] sm:$0xff]
        %v1093 = vld [vmem:[#allocation2 + $0xe1] sm:$0xff]
        %v1094 = vld [vmem:[#allocation2 + $0xf1] sm:$0xff]
        %v1095 = vld [vmem:[#allocation2 + $0xf9] sm:$0xff]
        %v1096 = vld [vmem:[#allocation2 + $0x109] sm:$0xff]
        %v1097 = vld [vmem:[#allocation2 + $0x111] sm:$0xff]
        %v1098 = vld [vmem:[#allocation2 + $0x121] sm:$0xff]
        %v1099 = vld [vmem:[#allocation2 + $0x129] sm:$0xff]
        %v1100 = vld [vmem:[#allocation2 + $0x139] sm:$0xff]
        %v1101 = vld [vmem:[#allocation2 + $0x141] sm:$0xff]
        %v1102 = vld [vmem:[#allocation2 + $0x151] sm:$0xff]
        %v1103 = vld [vmem:[#allocation2 + $0x159] sm:$0xff]
        %v1104 = vld [vmem:[#allocation2 + $0x169] sm:$0xff]
        %v1105 = vld [vmem:[#allocation2 + $0x171] sm:$0xff]
        %1106 = vst [vmem:[#allocation3 + $0x8] sm:$0xff] %v1074
        %1107 = vst [vmem:[#allocation3 + $0x50] sm:$0xff] %v1075
        %1108 = vst [vmem:[#allocation3 + $0x98] sm:$0xff] %v1076
        %1109 = vst [vmem:[#allocation3 + $0xe0] sm:$0xff] %v1077
        %1110 = vst [vmem:[#allocation3 + $0x128] sm:$0xff] %v1078
        %1111 = vst [vmem:[#allocation3 + $0x170] sm:$0xff] %v1079
        %1112 = vst [vmem:[#allocation3 + $0x1b8] sm:$0xff] %v1080
        %1113 = vst [vmem:[#allocation3 + $0x200] sm:$0xff] %v1081
        %1114 = vst [vmem:[#allocation3 + $0x248] sm:$0xff] %v1082
        %1115 = vst [vmem:[#allocation3 + $0x290] sm:$0xff] %v1083
        %1116 = vst [vmem:[#allocation3 + $0x2d8] sm:$0xff] %v1084
        %1117 = vst [vmem:[#allocation3 + $0x320] sm:$0xff] %v1085
        %1118 = vst [vmem:[#allocation3 + $0x368] sm:$0xff] %v1086
        %1119 = vst [vmem:[#allocation3 + $0x3b0] sm:$0xff] %v1087
        %1120 = vst [vmem:[#allocation3 + $0x3f8] sm:$0xff] %v1088
        %1121 = vst [vmem:[#allocation3 + $0x440] sm:$0xff] %v1089
        %1122 = vst [vmem:[#allocation3 + $0x488] sm:$0xff] %v1090
        %1123 = vst [vmem:[#allocation3 + $0x4d0] sm:$0xff] %v1091
        %1124 = vst [vmem:[#allocation3 + $0x518] sm:$0xff] %v1092
        %1125 = vst [vmem:[#allocation3 + $0x560] sm:$0xff] %v1093
        %1126 = vst [vmem:[#allocation3 + $0x5a8] sm:$0xff] %v1094
        %1127 = vst [vmem:[#allocation3 + $0x5f0] sm:$0xff] %v1095
        %1128 = vst [vmem:[#allocation3 + $0x638] sm:$0xff] %v1096
        %1129 = vst [vmem:[#allocation3 + $0x680] sm:$0xff] %v1097
        %1130 = vst [vmem:[#allocation3 + $0x6c8] sm:$0xff] %v1098
        %1131 = vst [vmem:[#allocation3 + $0x710] sm:$0xff] %v1099
        %1132 = vst [vmem:[#allocation3 + $0x758] sm:$0xff] %v1100
        %1133 = vst [vmem:[#allocation3 + $0x7a0] sm:$0xff] %v1101
        %1134 = vst [vmem:[#allocation3 + $0x7e8] sm:$0xff] %v1102
        %1135 = vst [vmem:[#allocation3 + $0x830] sm:$0xff] %v1103
        %1136 = vst [vmem:[#allocation3 + $0x878] sm:$0xff] %v1104
        %1137 = vst [vmem:[#allocation3 + $0x8c0] sm:$0xff] %v1105
        %v1138 = vld [vmem:[#allocation2 + $0x2] sm:$0xff]
        %v1139 = vld [vmem:[#allocation2 + $0xa] sm:$0xff]
        %v1140 = vld [vmem:[#allocation2 + $0x1a] sm:$0xff]
        %v1141 = vld [vmem:[#allocation2 + $0x22] sm:$0xff]
        %v1142 = vld [vmem:[#allocation2 + $0x32] sm:$0xff]
        %v1143 = vld [vmem:[#allocation2 + $0x3a] sm:$0xff]
        %v1144 = vld [vmem:[#allocation2 + $0x4a] sm:$0xff]
        %v1145 = vld [vmem:[#allocation2 + $0x52] sm:$0xff]
        %v1146 = vld [vmem:[#allocation2 + $0x62] sm:$0xff]
        %v1147 = vld [vmem:[#allocation2 + $0x6a] sm:$0xff]
        %v1148 = vld [vmem:[#allocation2 + $0x7a] sm:$0xff]
        %v1149 = vld [vmem:[#allocation2 + $0x82] sm:$0xff]
        %v1150 = vld [vmem:[#allocation2 + $0x92] sm:$0xff]
        %v1151 = vld [vmem:[#allocation2 + $0x9a] sm:$0xff]
        %v1152 = vld [vmem:[#allocation2 + $0xaa] sm:$0xff]
        %v1153 = vld [vmem:[#allocation2 + $0xb2] sm:$0xff]
        %v1154 = vld [vmem:[#allocation2 + $0xc2] sm:$0xff]
        %v1155 = vld [vmem:[#allocation2 + $0xca] sm:$0xff]
        %v1156 = vld [vmem:[#allocation2 + $0xda] sm:$0xff]
        %v1157 = vld [vmem:[#allocation2 + $0xe2] sm:$0xff]
        %v1158 = vld [vmem:[#allocation2 + $0xf2] sm:$0xff]
        %v1159 = vld [vmem:[#allocation2 + $0xfa] sm:$0xff]
        %v1160 = vld [vmem:[#allocation2 + $0x10a] sm:$0xff]
        %v1161 = vld [vmem:[#allocation2 + $0x112] sm:$0xff]
        %v1162 = vld [vmem:[#allocation2 + $0x122] sm:$0xff]
        %v1163 = vld [vmem:[#allocation2 + $0x12a] sm:$0xff]
        %v1164 = vld [vmem:[#allocation2 + $0x13a] sm:$0xff]
        %v1165 = vld [vmem:[#allocation2 + $0x142] sm:$0xff]
        %v1166 = vld [vmem:[#allocation2 + $0x152] sm:$0xff]
        %v1167 = vld [vmem:[#allocation2 + $0x15a] sm:$0xff]
        %v1168 = vld [vmem:[#allocation2 + $0x16a] sm:$0xff]
        %v1169 = vld [vmem:[#allocation2 + $0x172] sm:$0xff]
        %1170 = vst [vmem:[#allocation3 + $0x10] sm:$0xff] %v1138
        %1171 = vst [vmem:[#allocation3 + $0x58] sm:$0xff] %v1139
        %1172 = vst [vmem:[#allocation3 + $0xa0] sm:$0xff] %v1140
        %1173 = vst [vmem:[#allocation3 + $0xe8] sm:$0xff] %v1141
        %1174 = vst [vmem:[#allocation3 + $0x130] sm:$0xff] %v1142
        %1175 = vst [vmem:[#allocation3 + $0x178] sm:$0xff] %v1143
        %1176 = vst [vmem:[#allocation3 + $0x1c0] sm:$0xff] %v1144
        %1177 = vst [vmem:[#allocation3 + $0x208] sm:$0xff] %v1145
        %1178 = vst [vmem:[#allocation3 + $0x250] sm:$0xff] %v1146
        %1179 = vst [vmem:[#allocation3 + $0x298] sm:$0xff] %v1147
        %1180 = vst [vmem:[#allocation3 + $0x2e0] sm:$0xff] %v1148
        %1181 = vst [vmem:[#allocation3 + $0x328] sm:$0xff] %v1149
        %1182 = vst [vmem:[#allocation3 + $0x370] sm:$0xff] %v1150
        %1183 = vst [vmem:[#allocation3 + $0x3b8] sm:$0xff] %v1151
        %1184 = vst [vmem:[#allocation3 + $0x400] sm:$0xff] %v1152
        %1185 = vst [vmem:[#allocation3 + $0x448] sm:$0xff] %v1153
        %1186 = vst [vmem:[#allocation3 + $0x490] sm:$0xff] %v1154
        %1187 = vst [vmem:[#allocation3 + $0x4d8] sm:$0xff] %v1155
        %1188 = vst [vmem:[#allocation3 + $0x520] sm:$0xff] %v1156
        %1189 = vst [vmem:[#allocation3 + $0x568] sm:$0xff] %v1157
        %1190 = vst [vmem:[#allocation3 + $0x5b0] sm:$0xff] %v1158
        %1191 = vst [vmem:[#allocation3 + $0x5f8] sm:$0xff] %v1159
        %1192 = vst [vmem:[#allocation3 + $0x640] sm:$0xff] %v1160
        %1193 = vst [vmem:[#allocation3 + $0x688] sm:$0xff] %v1161
        %1194 = vst [vmem:[#allocation3 + $0x6d0] sm:$0xff] %v1162
        %1195 = vst [vmem:[#allocation3 + $0x718] sm:$0xff] %v1163
        %1196 = vst [vmem:[#allocation3 + $0x760] sm:$0xff] %v1164
        %1197 = vst [vmem:[#allocation3 + $0x7a8] sm:$0xff] %v1165
        %1198 = vst [vmem:[#allocation3 + $0x7f0] sm:$0xff] %v1166
        %1199 = vst [vmem:[#allocation3 + $0x838] sm:$0xff] %v1167
        %1200 = vst [vmem:[#allocation3 + $0x880] sm:$0xff] %v1168
        %1201 = vst [vmem:[#allocation3 + $0x8c8] sm:$0xff] %v1169
        %v1202 = vld [vmem:[%s977] sm:$0xff]
        %v1203 = vld [vmem:[%s977 + $0x8] sm:$0xff]
        %v1204 = vld [vmem:[%s977 + $0x18] sm:$0xff]
        %v1205 = vld [vmem:[%s977 + $0x20] sm:$0xff]
        %v1206 = vld [vmem:[%s977 + $0x30] sm:$0xff]
        %v1207 = vld [vmem:[%s977 + $0x38] sm:$0xff]
        %v1208 = vld [vmem:[%s977 + $0x48] sm:$0xff]
        %v1209 = vld [vmem:[%s977 + $0x50] sm:$0xff]
        %v1210 = vld [vmem:[%s977 + $0x60] sm:$0xff]
        %v1211 = vld [vmem:[%s977 + $0x68] sm:$0xff]
        %v1212 = vld [vmem:[%s977 + $0x78] sm:$0xff]
        %v1213 = vld [vmem:[%s977 + $0x80] sm:$0xff]
        %v1214 = vld [vmem:[%s977 + $0x90] sm:$0xff]
        %v1215 = vld [vmem:[%s977 + $0x98] sm:$0xff]
        %v1216 = vld [vmem:[%s977 + $0xa8] sm:$0xff]
        %v1217 = vld [vmem:[%s977 + $0xb0] sm:$0xff]
        %v1218 = vld [vmem:[%s977 + $0xc0] sm:$0xff]
        %v1219 = vld [vmem:[%s977 + $0xc8] sm:$0xff]
        %v1220 = vld [vmem:[%s977 + $0xd8] sm:$0xff]
        %v1221 = vld [vmem:[%s977 + $0xe0] sm:$0xff]
        %v1222 = vld [vmem:[%s977 + $0xf0] sm:$0xff]
        %v1223 = vld [vmem:[%s977 + $0xf8] sm:$0xff]
        %v1224 = vld [vmem:[%s977 + $0x108] sm:$0xff]
        %v1225 = vld [vmem:[%s977 + $0x110] sm:$0xff]
        %v1226 = vld [vmem:[%s977 + $0x120] sm:$0xff]
        %v1227 = vld [vmem:[%s977 + $0x128] sm:$0xff]
        %v1228 = vld [vmem:[%s977 + $0x138] sm:$0xff]
        %v1229 = vld [vmem:[%s977 + $0x140] sm:$0xff]
        %v1230 = vld [vmem:[%s977 + $0x150] sm:$0xff]
        %v1231 = vld [vmem:[%s977 + $0x158] sm:$0xff]
        %v1232 = vld [vmem:[%s977 + $0x168] sm:$0xff]
        %v1233 = vld [vmem:[%s977 + $0x170] sm:$0xff]
        %1234 = vst [vmem:[#allocation3 + $0x18] sm:$0xff] %v1202
        %1235 = vst [vmem:[#allocation3 + $0x60] sm:$0xff] %v1203
        %1236 = vst [vmem:[#allocation3 + $0xa8] sm:$0xff] %v1204
        %1237 = vst [vmem:[#allocation3 + $0xf0] sm:$0xff] %v1205
        %1238 = vst [vmem:[#allocation3 + $0x138] sm:$0xff] %v1206
        %1239 = vst [vmem:[#allocation3 + $0x180] sm:$0xff] %v1207
        %1240 = vst [vmem:[#allocation3 + $0x1c8] sm:$0xff] %v1208
        %1241 = vst [vmem:[#allocation3 + $0x210] sm:$0xff] %v1209
        %1242 = vst [vmem:[#allocation3 + $0x258] sm:$0xff] %v1210
        %1243 = vst [vmem:[#allocation3 + $0x2a0] sm:$0xff] %v1211
        %1244 = vst [vmem:[#allocation3 + $0x2e8] sm:$0xff] %v1212
        %1245 = vst [vmem:[#allocation3 + $0x330] sm:$0xff] %v1213
        %1246 = vst [vmem:[#allocation3 + $0x378] sm:$0xff] %v1214
        %1247 = vst [vmem:[#allocation3 + $0x3c0] sm:$0xff] %v1215
        %1248 = vst [vmem:[#allocation3 + $0x408] sm:$0xff] %v1216
        %1249 = vst [vmem:[#allocation3 + $0x450] sm:$0xff] %v1217
        %1250 = vst [vmem:[#allocation3 + $0x498] sm:$0xff] %v1218
        %1251 = vst [vmem:[#allocation3 + $0x4e0] sm:$0xff] %v1219
        %1252 = vst [vmem:[#allocation3 + $0x528] sm:$0xff] %v1220
        %1253 = vst [vmem:[#allocation3 + $0x570] sm:$0xff] %v1221
        %1254 = vst [vmem:[#allocation3 + $0x5b8] sm:$0xff] %v1222
        %1255 = vst [vmem:[#allocation3 + $0x600] sm:$0xff] %v1223
        %1256 = vst [vmem:[#allocation3 + $0x648] sm:$0xff] %v1224
        %1257 = vst [vmem:[#allocation3 + $0x690] sm:$0xff] %v1225
        %1258 = vst [vmem:[#allocation3 + $0x6d8] sm:$0xff] %v1226
        %1259 = vst [vmem:[#allocation3 + $0x720] sm:$0xff] %v1227
        %1260 = vst [vmem:[#allocation3 + $0x768] sm:$0xff] %v1228
        %1261 = vst [vmem:[#allocation3 + $0x7b0] sm:$0xff] %v1229
        %1262 = vst [vmem:[#allocation3 + $0x7f8] sm:$0xff] %v1230
        %1263 = vst [vmem:[#allocation3 + $0x840] sm:$0xff] %v1231
        %1264 = vst [vmem:[#allocation3 + $0x888] sm:$0xff] %v1232
        %1265 = vst [vmem:[#allocation3 + $0x8d0] sm:$0xff] %v1233
        %v1266 = vld [vmem:[%s977 + $0x1] sm:$0xff]
        %v1267 = vld [vmem:[%s977 + $0x9] sm:$0xff]
        %v1268 = vld [vmem:[%s977 + $0x19] sm:$0xff]
        %v1269 = vld [vmem:[%s977 + $0x21] sm:$0xff]
        %v1270 = vld [vmem:[%s977 + $0x31] sm:$0xff]
        %v1271 = vld [vmem:[%s977 + $0x39] sm:$0xff]
        %v1272 = vld [vmem:[%s977 + $0x49] sm:$0xff]
        %v1273 = vld [vmem:[%s977 + $0x51] sm:$0xff]
        %v1274 = vld [vmem:[%s977 + $0x61] sm:$0xff]
        %v1275 = vld [vmem:[%s977 + $0x69] sm:$0xff]
        %v1276 = vld [vmem:[%s977 + $0x79] sm:$0xff]
        %v1277 = vld [vmem:[%s977 + $0x81] sm:$0xff]
        %v1278 = vld [vmem:[%s977 + $0x91] sm:$0xff]
        %v1279 = vld [vmem:[%s977 + $0x99] sm:$0xff]
        %v1280 = vld [vmem:[%s977 + $0xa9] sm:$0xff]
        %v1281 = vld [vmem:[%s977 + $0xb1] sm:$0xff]
        %v1282 = vld [vmem:[%s977 + $0xc1] sm:$0xff]
        %v1283 = vld [vmem:[%s977 + $0xc9] sm:$0xff]
        %v1284 = vld [vmem:[%s977 + $0xd9] sm:$0xff]
        %v1285 = vld [vmem:[%s977 + $0xe1] sm:$0xff]
        %v1286 = vld [vmem:[%s977 + $0xf1] sm:$0xff]
        %v1287 = vld [vmem:[%s977 + $0xf9] sm:$0xff]
        %v1288 = vld [vmem:[%s977 + $0x109] sm:$0xff]
        %v1289 = vld [vmem:[%s977 + $0x111] sm:$0xff]
        %v1290 = vld [vmem:[%s977 + $0x121] sm:$0xff]
        %v1291 = vld [vmem:[%s977 + $0x129] sm:$0xff]
        %v1292 = vld [vmem:[%s977 + $0x139] sm:$0xff]
        %v1293 = vld [vmem:[%s977 + $0x141] sm:$0xff]
        %v1294 = vld [vmem:[%s977 + $0x151] sm:$0xff]
        %v1295 = vld [vmem:[%s977 + $0x159] sm:$0xff]
        %v1296 = vld [vmem:[%s977 + $0x169] sm:$0xff]
        %v1297 = vld [vmem:[%s977 + $0x171] sm:$0xff]
        %1298 = vst [vmem:[#allocation3 + $0x20] sm:$0xff] %v1266
        %1299 = vst [vmem:[#allocation3 + $0x68] sm:$0xff] %v1267
        %1300 = vst [vmem:[#allocation3 + $0xb0] sm:$0xff] %v1268
        %1301 = vst [vmem:[#allocation3 + $0xf8] sm:$0xff] %v1269
        %1302 = vst [vmem:[#allocation3 + $0x140] sm:$0xff] %v1270
        %1303 = vst [vmem:[#allocation3 + $0x188] sm:$0xff] %v1271
        %1304 = vst [vmem:[#allocation3 + $0x1d0] sm:$0xff] %v1272
        %1305 = vst [vmem:[#allocation3 + $0x218] sm:$0xff] %v1273
        %1306 = vst [vmem:[#allocation3 + $0x260] sm:$0xff] %v1274
        %1307 = vst [vmem:[#allocation3 + $0x2a8] sm:$0xff] %v1275
        %1308 = vst [vmem:[#allocation3 + $0x2f0] sm:$0xff] %v1276
        %1309 = vst [vmem:[#allocation3 + $0x338] sm:$0xff] %v1277
        %1310 = vst [vmem:[#allocation3 + $0x380] sm:$0xff] %v1278
        %1311 = vst [vmem:[#allocation3 + $0x3c8] sm:$0xff] %v1279
        %1312 = vst [vmem:[#allocation3 + $0x410] sm:$0xff] %v1280
        %1313 = vst [vmem:[#allocation3 + $0x458] sm:$0xff] %v1281
        %1314 = vst [vmem:[#allocation3 + $0x4a0] sm:$0xff] %v1282
        %1315 = vst [vmem:[#allocation3 + $0x4e8] sm:$0xff] %v1283
        %1316 = vst [vmem:[#allocation3 + $0x530] sm:$0xff] %v1284
        %1317 = vst [vmem:[#allocation3 + $0x578] sm:$0xff] %v1285
        %1318 = vst [vmem:[#allocation3 + $0x5c0] sm:$0xff] %v1286
        %1319 = vst [vmem:[#allocation3 + $0x608] sm:$0xff] %v1287
        %1320 = vst [vmem:[#allocation3 + $0x650] sm:$0xff] %v1288
        %1321 = vst [vmem:[#allocation3 + $0x698] sm:$0xff] %v1289
        %1322 = vst [vmem:[#allocation3 + $0x6e0] sm:$0xff] %v1290
        %1323 = vst [vmem:[#allocation3 + $0x728] sm:$0xff] %v1291
        %1324 = vst [vmem:[#allocation3 + $0x770] sm:$0xff] %v1292
        %1325 = vst [vmem:[#allocation3 + $0x7b8] sm:$0xff] %v1293
        %1326 = vst [vmem:[#allocation3 + $0x800] sm:$0xff] %v1294
        %1327 = vst [vmem:[#allocation3 + $0x848] sm:$0xff] %v1295
        %1328 = vst [vmem:[#allocation3 + $0x890] sm:$0xff] %v1296
        %1329 = vst [vmem:[#allocation3 + $0x8d8] sm:$0xff] %v1297
        %v1330 = vld [vmem:[%s977 + $0x2] sm:$0xff]
        %v1331 = vld [vmem:[%s977 + $0xa] sm:$0xff]
        %v1332 = vld [vmem:[%s977 + $0x1a] sm:$0xff]
        %v1333 = vld [vmem:[%s977 + $0x22] sm:$0xff]
        %v1334 = vld [vmem:[%s977 + $0x32] sm:$0xff]
        %v1335 = vld [vmem:[%s977 + $0x3a] sm:$0xff]
        %v1336 = vld [vmem:[%s977 + $0x4a] sm:$0xff]
        %v1337 = vld [vmem:[%s977 + $0x52] sm:$0xff]
        %v1338 = vld [vmem:[%s977 + $0x62] sm:$0xff]
        %v1339 = vld [vmem:[%s977 + $0x6a] sm:$0xff]
        %v1340 = vld [vmem:[%s977 + $0x7a] sm:$0xff]
        %v1341 = vld [vmem:[%s977 + $0x82] sm:$0xff]
        %v1342 = vld [vmem:[%s977 + $0x92] sm:$0xff]
        %v1343 = vld [vmem:[%s977 + $0x9a] sm:$0xff]
        %v1344 = vld [vmem:[%s977 + $0xaa] sm:$0xff]
        %v1345 = vld [vmem:[%s977 + $0xb2] sm:$0xff]
        %v1346 = vld [vmem:[%s977 + $0xc2] sm:$0xff]
        %v1347 = vld [vmem:[%s977 + $0xca] sm:$0xff]
        %v1348 = vld [vmem:[%s977 + $0xda] sm:$0xff]
        %v1349 = vld [vmem:[%s977 + $0xe2] sm:$0xff]
        %v1350 = vld [vmem:[%s977 + $0xf2] sm:$0xff]
        %v1351 = vld [vmem:[%s977 + $0xfa] sm:$0xff]
        %v1352 = vld [vmem:[%s977 + $0x10a] sm:$0xff]
        %v1353 = vld [vmem:[%s977 + $0x112] sm:$0xff]
        %v1354 = vld [vmem:[%s977 + $0x122] sm:$0xff]
        %v1355 = vld [vmem:[%s977 + $0x12a] sm:$0xff]
        %v1356 = vld [vmem:[%s977 + $0x13a] sm:$0xff]
        %v1357 = vld [vmem:[%s977 + $0x142] sm:$0xff]
        %v1358 = vld [vmem:[%s977 + $0x152] sm:$0xff]
        %v1359 = vld [vmem:[%s977 + $0x15a] sm:$0xff]
        %v1360 = vld [vmem:[%s977 + $0x16a] sm:$0xff]
        %v1361 = vld [vmem:[%s977 + $0x172] sm:$0xff]
        %1362 = vst [vmem:[#allocation3 + $0x28] sm:$0xff] %v1330
        %1363 = vst [vmem:[#allocation3 + $0x70] sm:$0xff] %v1331
        %1364 = vst [vmem:[#allocation3 + $0xb8] sm:$0xff] %v1332
        %1365 = vst [vmem:[#allocation3 + $0x100] sm:$0xff] %v1333
        %1366 = vst [vmem:[#allocation3 + $0x148] sm:$0xff] %v1334
        %1367 = vst [vmem:[#allocation3 + $0x190] sm:$0xff] %v1335
        %1368 = vst [vmem:[#allocation3 + $0x1d8] sm:$0xff] %v1336
        %1369 = vst [vmem:[#allocation3 + $0x220] sm:$0xff] %v1337
        %1370 = vst [vmem:[#allocation3 + $0x268] sm:$0xff] %v1338
        %1371 = vst [vmem:[#allocation3 + $0x2b0] sm:$0xff] %v1339
        %1372 = vst [vmem:[#allocation3 + $0x2f8] sm:$0xff] %v1340
        %1373 = vst [vmem:[#allocation3 + $0x340] sm:$0xff] %v1341
        %1374 = vst [vmem:[#allocation3 + $0x388] sm:$0xff] %v1342
        %1375 = vst [vmem:[#allocation3 + $0x3d0] sm:$0xff] %v1343
        %1376 = vst [vmem:[#allocation3 + $0x418] sm:$0xff] %v1344
        %1377 = vst [vmem:[#allocation3 + $0x460] sm:$0xff] %v1345
        %1378 = vst [vmem:[#allocation3 + $0x4a8] sm:$0xff] %v1346
        %1379 = vst [vmem:[#allocation3 + $0x4f0] sm:$0xff] %v1347
        %1380 = vst [vmem:[#allocation3 + $0x538] sm:$0xff] %v1348
        %1381 = vst [vmem:[#allocation3 + $0x580] sm:$0xff] %v1349
        %1382 = vst [vmem:[#allocation3 + $0x5c8] sm:$0xff] %v1350
        %1383 = vst [vmem:[#allocation3 + $0x610] sm:$0xff] %v1351
        %1384 = vst [vmem:[#allocation3 + $0x658] sm:$0xff] %v1352
        %1385 = vst [vmem:[#allocation3 + $0x6a0] sm:$0xff] %v1353
        %1386 = vst [vmem:[#allocation3 + $0x6e8] sm:$0xff] %v1354
        %1387 = vst [vmem:[#allocation3 + $0x730] sm:$0xff] %v1355
        %1388 = vst [vmem:[#allocation3 + $0x778] sm:$0xff] %v1356
        %1389 = vst [vmem:[#allocation3 + $0x7c0] sm:$0xff] %v1357
        %1390 = vst [vmem:[#allocation3 + $0x808] sm:$0xff] %v1358
        %1391 = vst [vmem:[#allocation3 + $0x850] sm:$0xff] %v1359
        %1392 = vst [vmem:[#allocation3 + $0x898] sm:$0xff] %v1360
        %1393 = vst [vmem:[#allocation3 + $0x8e0] sm:$0xff] %v1361
        %s1394 = scalar_lea.vmem [#allocation2], 48
        %v1395 = vld [vmem:[%s1394] sm:$0xff]
        %v1396 = vld [vmem:[%s1394 + $0x8] sm:$0xff]
        %v1397 = vld [vmem:[%s1394 + $0x18] sm:$0xff]
        %v1398 = vld [vmem:[%s1394 + $0x20] sm:$0xff]
        %v1399 = vld [vmem:[%s1394 + $0x30] sm:$0xff]
        %v1400 = vld [vmem:[%s1394 + $0x38] sm:$0xff]
        %v1401 = vld [vmem:[%s1394 + $0x48] sm:$0xff]
        %v1402 = vld [vmem:[%s1394 + $0x50] sm:$0xff]
        %v1403 = vld [vmem:[%s1394 + $0x60] sm:$0xff]
        %v1404 = vld [vmem:[%s1394 + $0x68] sm:$0xff]
        %v1405 = vld [vmem:[%s1394 + $0x78] sm:$0xff]
        %v1406 = vld [vmem:[%s1394 + $0x80] sm:$0xff]
        %v1407 = vld [vmem:[%s1394 + $0x90] sm:$0xff]
        %v1408 = vld [vmem:[%s1394 + $0x98] sm:$0xff]
        %v1409 = vld [vmem:[%s1394 + $0xa8] sm:$0xff]
        %v1410 = vld [vmem:[%s1394 + $0xb0] sm:$0xff]
        %v1411 = vld [vmem:[%s1394 + $0xc0] sm:$0xff]
        %v1412 = vld [vmem:[%s1394 + $0xc8] sm:$0xff]
        %v1413 = vld [vmem:[%s1394 + $0xd8] sm:$0xff]
        %v1414 = vld [vmem:[%s1394 + $0xe0] sm:$0xff]
        %v1415 = vld [vmem:[%s1394 + $0xf0] sm:$0xff]
        %v1416 = vld [vmem:[%s1394 + $0xf8] sm:$0xff]
        %v1417 = vld [vmem:[%s1394 + $0x108] sm:$0xff]
        %v1418 = vld [vmem:[%s1394 + $0x110] sm:$0xff]
        %v1419 = vld [vmem:[%s1394 + $0x120] sm:$0xff]
        %v1420 = vld [vmem:[%s1394 + $0x128] sm:$0xff]
        %v1421 = vld [vmem:[%s1394 + $0x138] sm:$0xff]
        %v1422 = vld [vmem:[%s1394 + $0x140] sm:$0xff]
        %v1423 = vld [vmem:[%s1394 + $0x150] sm:$0xff]
        %v1424 = vld [vmem:[%s1394 + $0x158] sm:$0xff]
        %v1425 = vld [vmem:[%s1394 + $0x168] sm:$0xff]
        %v1426 = vld [vmem:[%s1394 + $0x170] sm:$0xff]
        %1427 = vst [vmem:[#allocation3 + $0x30] sm:$0xff] %v1395
        %1428 = vst [vmem:[#allocation3 + $0x78] sm:$0xff] %v1396
        %1429 = vst [vmem:[#allocation3 + $0xc0] sm:$0xff] %v1397
        %1430 = vst [vmem:[#allocation3 + $0x108] sm:$0xff] %v1398
        %1431 = vst [vmem:[#allocation3 + $0x150] sm:$0xff] %v1399
        %1432 = vst [vmem:[#allocation3 + $0x198] sm:$0xff] %v1400
        %1433 = vst [vmem:[#allocation3 + $0x1e0] sm:$0xff] %v1401
        %1434 = vst [vmem:[#allocation3 + $0x228] sm:$0xff] %v1402
        %1435 = vst [vmem:[#allocation3 + $0x270] sm:$0xff] %v1403
        %1436 = vst [vmem:[#allocation3 + $0x2b8] sm:$0xff] %v1404
        %1437 = vst [vmem:[#allocation3 + $0x300] sm:$0xff] %v1405
        %1438 = vst [vmem:[#allocation3 + $0x348] sm:$0xff] %v1406
        %1439 = vst [vmem:[#allocation3 + $0x390] sm:$0xff] %v1407
        %1440 = vst [vmem:[#allocation3 + $0x3d8] sm:$0xff] %v1408
        %1441 = vst [vmem:[#allocation3 + $0x420] sm:$0xff] %v1409
        %1442 = vst [vmem:[#allocation3 + $0x468] sm:$0xff] %v1410
        %1443 = vst [vmem:[#allocation3 + $0x4b0] sm:$0xff] %v1411
        %1444 = vst [vmem:[#allocation3 + $0x4f8] sm:$0xff] %v1412
        %1445 = vst [vmem:[#allocation3 + $0x540] sm:$0xff] %v1413
        %1446 = vst [vmem:[#allocation3 + $0x588] sm:$0xff] %v1414
        %1447 = vst [vmem:[#allocation3 + $0x5d0] sm:$0xff] %v1415
        %1448 = vst [vmem:[#allocation3 + $0x618] sm:$0xff] %v1416
        %1449 = vst [vmem:[#allocation3 + $0x660] sm:$0xff] %v1417
        %1450 = vst [vmem:[#allocation3 + $0x6a8] sm:$0xff] %v1418
        %1451 = vst [vmem:[#allocation3 + $0x6f0] sm:$0xff] %v1419
        %1452 = vst [vmem:[#allocation3 + $0x738] sm:$0xff] %v1420
        %1453 = vst [vmem:[#allocation3 + $0x780] sm:$0xff] %v1421
        %1454 = vst [vmem:[#allocation3 + $0x7c8] sm:$0xff] %v1422
        %1455 = vst [vmem:[#allocation3 + $0x810] sm:$0xff] %v1423
        %1456 = vst [vmem:[#allocation3 + $0x858] sm:$0xff] %v1424
        %1457 = vst [vmem:[#allocation3 + $0x8a0] sm:$0xff] %v1425
        %1458 = vst [vmem:[#allocation3 + $0x8e8] sm:$0xff] %v1426
        %v1459 = vld [vmem:[%s1394 + $0x1] sm:$0xff]
        %v1460 = vld [vmem:[%s1394 + $0x9] sm:$0xff]
        %v1461 = vld [vmem:[%s1394 + $0x19] sm:$0xff]
        %v1462 = vld [vmem:[%s1394 + $0x21] sm:$0xff]
        %v1463 = vld [vmem:[%s1394 + $0x31] sm:$0xff]
        %v1464 = vld [vmem:[%s1394 + $0x39] sm:$0xff]
        %v1465 = vld [vmem:[%s1394 + $0x49] sm:$0xff]
        %v1466 = vld [vmem:[%s1394 + $0x51] sm:$0xff]
        %v1467 = vld [vmem:[%s1394 + $0x61] sm:$0xff]
        %v1468 = vld [vmem:[%s1394 + $0x69] sm:$0xff]
        %v1469 = vld [vmem:[%s1394 + $0x79] sm:$0xff]
        %v1470 = vld [vmem:[%s1394 + $0x81] sm:$0xff]
        %v1471 = vld [vmem:[%s1394 + $0x91] sm:$0xff]
        %v1472 = vld [vmem:[%s1394 + $0x99] sm:$0xff]
        %v1473 = vld [vmem:[%s1394 + $0xa9] sm:$0xff]
        %v1474 = vld [vmem:[%s1394 + $0xb1] sm:$0xff]
        %v1475 = vld [vmem:[%s1394 + $0xc1] sm:$0xff]
        %v1476 = vld [vmem:[%s1394 + $0xc9] sm:$0xff]
        %v1477 = vld [vmem:[%s1394 + $0xd9] sm:$0xff]
        %v1478 = vld [vmem:[%s1394 + $0xe1] sm:$0xff]
        %v1479 = vld [vmem:[%s1394 + $0xf1] sm:$0xff]
        %v1480 = vld [vmem:[%s1394 + $0xf9] sm:$0xff]
        %v1481 = vld [vmem:[%s1394 + $0x109] sm:$0xff]
        %v1482 = vld [vmem:[%s1394 + $0x111] sm:$0xff]
        %v1483 = vld [vmem:[%s1394 + $0x121] sm:$0xff]
        %v1484 = vld [vmem:[%s1394 + $0x129] sm:$0xff]
        %v1485 = vld [vmem:[%s1394 + $0x139] sm:$0xff]
        %v1486 = vld [vmem:[%s1394 + $0x141] sm:$0xff]
        %v1487 = vld [vmem:[%s1394 + $0x151] sm:$0xff]
        %v1488 = vld [vmem:[%s1394 + $0x159] sm:$0xff]
        %v1489 = vld [vmem:[%s1394 + $0x169] sm:$0xff]
        %v1490 = vld [vmem:[%s1394 + $0x171] sm:$0xff]
        %1491 = vst [vmem:[#allocation3 + $0x38] sm:$0xff] %v1459
        %1492 = vst [vmem:[#allocation3 + $0x80] sm:$0xff] %v1460
        %1493 = vst [vmem:[#allocation3 + $0xc8] sm:$0xff] %v1461
        %1494 = vst [vmem:[#allocation3 + $0x110] sm:$0xff] %v1462
        %1495 = vst [vmem:[#allocation3 + $0x158] sm:$0xff] %v1463
        %1496 = vst [vmem:[#allocation3 + $0x1a0] sm:$0xff] %v1464
        %1497 = vst [vmem:[#allocation3 + $0x1e8] sm:$0xff] %v1465
        %1498 = vst [vmem:[#allocation3 + $0x230] sm:$0xff] %v1466
        %1499 = vst [vmem:[#allocation3 + $0x278] sm:$0xff] %v1467
        %1500 = vst [vmem:[#allocation3 + $0x2c0] sm:$0xff] %v1468
        %1501 = vst [vmem:[#allocation3 + $0x308] sm:$0xff] %v1469
        %1502 = vst [vmem:[#allocation3 + $0x350] sm:$0xff] %v1470
        %1503 = vst [vmem:[#allocation3 + $0x398] sm:$0xff] %v1471
        %1504 = vst [vmem:[#allocation3 + $0x3e0] sm:$0xff] %v1472
        %1505 = vst [vmem:[#allocation3 + $0x428] sm:$0xff] %v1473
        %1506 = vst [vmem:[#allocation3 + $0x470] sm:$0xff] %v1474
        %1507 = vst [vmem:[#allocation3 + $0x4b8] sm:$0xff] %v1475
        %1508 = vst [vmem:[#allocation3 + $0x500] sm:$0xff] %v1476
        %1509 = vst [vmem:[#allocation3 + $0x548] sm:$0xff] %v1477
        %1510 = vst [vmem:[#allocation3 + $0x590] sm:$0xff] %v1478
        %1511 = vst [vmem:[#allocation3 + $0x5d8] sm:$0xff] %v1479
        %1512 = vst [vmem:[#allocation3 + $0x620] sm:$0xff] %v1480
        %1513 = vst [vmem:[#allocation3 + $0x668] sm:$0xff] %v1481
        %1514 = vst [vmem:[#allocation3 + $0x6b0] sm:$0xff] %v1482
        %1515 = vst [vmem:[#allocation3 + $0x6f8] sm:$0xff] %v1483
        %1516 = vst [vmem:[#allocation3 + $0x740] sm:$0xff] %v1484
        %1517 = vst [vmem:[#allocation3 + $0x788] sm:$0xff] %v1485
        %1518 = vst [vmem:[#allocation3 + $0x7d0] sm:$0xff] %v1486
        %1519 = vst [vmem:[#allocation3 + $0x818] sm:$0xff] %v1487
        %1520 = vst [vmem:[#allocation3 + $0x860] sm:$0xff] %v1488
        %1521 = vst [vmem:[#allocation3 + $0x8a8] sm:$0xff] %v1489
        %1522 = vst [vmem:[#allocation3 + $0x8f0] sm:$0xff] %v1490
        %v1523 = vld [vmem:[%s1394 + $0x2] sm:$0xff]
        %v1524 = vld [vmem:[%s1394 + $0xa] sm:$0xff]
        %v1525 = vld [vmem:[%s1394 + $0x1a] sm:$0xff]
        %v1526 = vld [vmem:[%s1394 + $0x22] sm:$0xff]
        %v1527 = vld [vmem:[%s1394 + $0x32] sm:$0xff]
        %v1528 = vld [vmem:[%s1394 + $0x3a] sm:$0xff]
        %v1529 = vld [vmem:[%s1394 + $0x4a] sm:$0xff]
        %v1530 = vld [vmem:[%s1394 + $0x52] sm:$0xff]
        %v1531 = vld [vmem:[%s1394 + $0x62] sm:$0xff]
        %v1532 = vld [vmem:[%s1394 + $0x6a] sm:$0xff]
        %v1533 = vld [vmem:[%s1394 + $0x7a] sm:$0xff]
        %v1534 = vld [vmem:[%s1394 + $0x82] sm:$0xff]
        %v1535 = vld [vmem:[%s1394 + $0x92] sm:$0xff]
        %v1536 = vld [vmem:[%s1394 + $0x9a] sm:$0xff]
        %v1537 = vld [vmem:[%s1394 + $0xaa] sm:$0xff]
        %v1538 = vld [vmem:[%s1394 + $0xb2] sm:$0xff]
        %v1539 = vld [vmem:[%s1394 + $0xc2] sm:$0xff]
        %v1540 = vld [vmem:[%s1394 + $0xca] sm:$0xff]
        %v1541 = vld [vmem:[%s1394 + $0xda] sm:$0xff]
        %v1542 = vld [vmem:[%s1394 + $0xe2] sm:$0xff]
        %v1543 = vld [vmem:[%s1394 + $0xf2] sm:$0xff]
        %v1544 = vld [vmem:[%s1394 + $0xfa] sm:$0xff]
        %v1545 = vld [vmem:[%s1394 + $0x10a] sm:$0xff]
        %v1546 = vld [vmem:[%s1394 + $0x112] sm:$0xff]
        %v1547 = vld [vmem:[%s1394 + $0x122] sm:$0xff]
        %v1548 = vld [vmem:[%s1394 + $0x12a] sm:$0xff]
        %v1549 = vld [vmem:[%s1394 + $0x13a] sm:$0xff]
        %v1550 = vld [vmem:[%s1394 + $0x142] sm:$0xff]
        %v1551 = vld [vmem:[%s1394 + $0x152] sm:$0xff]
        %v1552 = vld [vmem:[%s1394 + $0x15a] sm:$0xff]
        %v1553 = vld [vmem:[%s1394 + $0x16a] sm:$0xff]
        %v1554 = vld [vmem:[%s1394 + $0x172] sm:$0xff]
        %1555 = vst [vmem:[#allocation3 + $0x40] sm:$0xff] %v1523
        %1556 = vst [vmem:[#allocation3 + $0x88] sm:$0xff] %v1524
        %1557 = vst [vmem:[#allocation3 + $0xd0] sm:$0xff] %v1525
        %1558 = vst [vmem:[#allocation3 + $0x118] sm:$0xff] %v1526
        %1559 = vst [vmem:[#allocation3 + $0x160] sm:$0xff] %v1527
        %1560 = vst [vmem:[#allocation3 + $0x1a8] sm:$0xff] %v1528
        %1561 = vst [vmem:[#allocation3 + $0x1f0] sm:$0xff] %v1529
        %1562 = vst [vmem:[#allocation3 + $0x238] sm:$0xff] %v1530
        %1563 = vst [vmem:[#allocation3 + $0x280] sm:$0xff] %v1531
        %1564 = vst [vmem:[#allocation3 + $0x2c8] sm:$0xff] %v1532
        %1565 = vst [vmem:[#allocation3 + $0x310] sm:$0xff] %v1533
        %1566 = vst [vmem:[#allocation3 + $0x358] sm:$0xff] %v1534
        %1567 = vst [vmem:[#allocation3 + $0x3a0] sm:$0xff] %v1535
        %1568 = vst [vmem:[#allocation3 + $0x3e8] sm:$0xff] %v1536
        %1569 = vst [vmem:[#allocation3 + $0x430] sm:$0xff] %v1537
        %1570 = vst [vmem:[#allocation3 + $0x478] sm:$0xff] %v1538
        %1571 = vst [vmem:[#allocation3 + $0x4c0] sm:$0xff] %v1539
        %1572 = vst [vmem:[#allocation3 + $0x508] sm:$0xff] %v1540
        %1573 = vst [vmem:[#allocation3 + $0x550] sm:$0xff] %v1541
        %1574 = vst [vmem:[#allocation3 + $0x598] sm:$0xff] %v1542
        %1575 = vst [vmem:[#allocation3 + $0x5e0] sm:$0xff] %v1543
        %1576 = vst [vmem:[#allocation3 + $0x628] sm:$0xff] %v1544
        %1577 = vst [vmem:[#allocation3 + $0x670] sm:$0xff] %v1545
        %1578 = vst [vmem:[#allocation3 + $0x6b8] sm:$0xff] %v1546
        %1579 = vst [vmem:[#allocation3 + $0x700] sm:$0xff] %v1547
        %1580 = vst [vmem:[#allocation3 + $0x748] sm:$0xff] %v1548
        %1581 = vst [vmem:[#allocation3 + $0x790] sm:$0xff] %v1549
        %1582 = vst [vmem:[#allocation3 + $0x7d8] sm:$0xff] %v1550
        %1583 = vst [vmem:[#allocation3 + $0x820] sm:$0xff] %v1551
        %1584 = vst [vmem:[#allocation3 + $0x868] sm:$0xff] %v1552
        %1585 = vst [vmem:[#allocation3 + $0x8b0] sm:$0xff] %v1553
        %1586 = vst [vmem:[#allocation3 + $0x8f8] sm:$0xff] %v1554
        %v1587 = vld [vmem:[#allocation3] sm:$0xff]
        %v1588 = vld [vmem:[#allocation3 + $0x8] sm:$0xff]
        %v1589 = vld [vmem:[#allocation3 + $0x10] sm:$0xff]
        %v1590 = vld [vmem:[#allocation3 + $0x18] sm:$0xff]
        %v1591 = vld [vmem:[#allocation3 + $0x20] sm:$0xff]
        %v1592 = vld [vmem:[#allocation3 + $0x28] sm:$0xff]
        %v1593 = vld [vmem:[#allocation3 + $0x30] sm:$0xff]
        %v1594 = vld [vmem:[#allocation3 + $0x38] sm:$0xff]
        %v1595 = vld [vmem:[#allocation3 + $0x40] sm:$0xff]
        %v1596 = vld [vmem:[#allocation3 + $0x48] sm:$0xff]
        %v1597 = vld [vmem:[#allocation3 + $0x50] sm:$0xff]
        %v1598 = vld [vmem:[#allocation3 + $0x58] sm:$0xff]
        %v1599 = vld [vmem:[#allocation3 + $0x60] sm:$0xff]
        %v1600 = vld [vmem:[#allocation3 + $0x68] sm:$0xff]
        %v1601 = vld [vmem:[#allocation3 + $0x70] sm:$0xff]
        %v1602 = vld [vmem:[#allocation3 + $0x78] sm:$0xff]
        %v1603 = vld [vmem:[#allocation3 + $0x80] sm:$0xff]
        %v1604 = vld [vmem:[#allocation3 + $0x88] sm:$0xff]
        %v1605 = vld [vmem:[#allocation3 + $0x90] sm:$0xff]
        %v1606 = vld [vmem:[#allocation3 + $0x98] sm:$0xff]
        %v1607 = vld [vmem:[#allocation3 + $0xa0] sm:$0xff]
        %v1608 = vld [vmem:[#allocation3 + $0xa8] sm:$0xff]
        %v1609 = vld [vmem:[#allocation3 + $0xb0] sm:$0xff]
        %v1610 = vld [vmem:[#allocation3 + $0xb8] sm:$0xff]
        %v1611 = vld [vmem:[#allocation3 + $0xc0] sm:$0xff]
        %v1612 = vld [vmem:[#allocation3 + $0xc8] sm:$0xff]
        %v1613 = vld [vmem:[#allocation3 + $0xd0] sm:$0xff]
        %v1614 = vld [vmem:[#allocation3 + $0xd8] sm:$0xff]
        %v1615 = vld [vmem:[#allocation3 + $0xe0] sm:$0xff]
        %v1616 = vld [vmem:[#allocation3 + $0xe8] sm:$0xff]
        %v1617 = vld [vmem:[#allocation3 + $0xf0] sm:$0xff]
        %v1618 = vld [vmem:[#allocation3 + $0xf8] sm:$0xff]
        %v1619 = vld [vmem:[#allocation3 + $0x100] sm:$0xff]
        %v1620 = vld [vmem:[#allocation3 + $0x108] sm:$0xff]
        %v1621 = vld [vmem:[#allocation3 + $0x110] sm:$0xff]
        %v1622 = vld [vmem:[#allocation3 + $0x118] sm:$0xff]
        %v1623 = vld [vmem:[#allocation3 + $0x120] sm:$0xff]
        %v1624 = vld [vmem:[#allocation3 + $0x128] sm:$0xff]
        %v1625 = vld [vmem:[#allocation3 + $0x130] sm:$0xff]
        %v1626 = vld [vmem:[#allocation3 + $0x138] sm:$0xff]
        %v1627 = vld [vmem:[#allocation3 + $0x140] sm:$0xff]
        %v1628 = vld [vmem:[#allocation3 + $0x148] sm:$0xff]
        %v1629 = vld [vmem:[#allocation3 + $0x150] sm:$0xff]
        %v1630 = vld [vmem:[#allocation3 + $0x158] sm:$0xff]
        %v1631 = vld [vmem:[#allocation3 + $0x160] sm:$0xff]
        %v1632 = vld [vmem:[#allocation3 + $0x168] sm:$0xff]
        %v1633 = vld [vmem:[#allocation3 + $0x170] sm:$0xff]
        %v1634 = vld [vmem:[#allocation3 + $0x178] sm:$0xff]
        %v1635 = vld [vmem:[#allocation3 + $0x180] sm:$0xff]
        %v1636 = vld [vmem:[#allocation3 + $0x188] sm:$0xff]
        %v1637 = vld [vmem:[#allocation3 + $0x190] sm:$0xff]
        %v1638 = vld [vmem:[#allocation3 + $0x198] sm:$0xff]
        %v1639 = vld [vmem:[#allocation3 + $0x1a0] sm:$0xff]
        %v1640 = vld [vmem:[#allocation3 + $0x1a8] sm:$0xff]
        %v1641 = vld [vmem:[#allocation3 + $0x1b0] sm:$0xff]
        %v1642 = vld [vmem:[#allocation3 + $0x1b8] sm:$0xff]
        %v1643 = vld [vmem:[#allocation3 + $0x1c0] sm:$0xff]
        %v1644 = vld [vmem:[#allocation3 + $0x1c8] sm:$0xff]
        %v1645 = vld [vmem:[#allocation3 + $0x1d0] sm:$0xff]
        %v1646 = vld [vmem:[#allocation3 + $0x1d8] sm:$0xff]
        %v1647 = vld [vmem:[#allocation3 + $0x1e0] sm:$0xff]
        %v1648 = vld [vmem:[#allocation3 + $0x1e8] sm:$0xff]
        %v1649 = vld [vmem:[#allocation3 + $0x1f0] sm:$0xff]
        %v1650 = vld [vmem:[#allocation3 + $0x1f8] sm:$0xff]
        %v1651 = vld [vmem:[#allocation3 + $0x200] sm:$0xff]
        %v1652 = vld [vmem:[#allocation3 + $0x208] sm:$0xff]
        %v1653 = vld [vmem:[#allocation3 + $0x210] sm:$0xff]
        %v1654 = vld [vmem:[#allocation3 + $0x218] sm:$0xff]
        %v1655 = vld [vmem:[#allocation3 + $0x220] sm:$0xff]
        %v1656 = vld [vmem:[#allocation3 + $0x228] sm:$0xff]
        %v1657 = vld [vmem:[#allocation3 + $0x230] sm:$0xff]
        %v1658 = vld [vmem:[#allocation3 + $0x238] sm:$0xff]
        %v1659 = vld [vmem:[#allocation3 + $0x240] sm:$0xff]
        %v1660 = vld [vmem:[#allocation3 + $0x248] sm:$0xff]
        %v1661 = vld [vmem:[#allocation3 + $0x250] sm:$0xff]
        %v1662 = vld [vmem:[#allocation3 + $0x258] sm:$0xff]
        %v1663 = vld [vmem:[#allocation3 + $0x260] sm:$0xff]
        %v1664 = vld [vmem:[#allocation3 + $0x268] sm:$0xff]
        %v1665 = vld [vmem:[#allocation3 + $0x270] sm:$0xff]
        %v1666 = vld [vmem:[#allocation3 + $0x278] sm:$0xff]
        %v1667 = vld [vmem:[#allocation3 + $0x280] sm:$0xff]
        %v1668 = vld [vmem:[#allocation3 + $0x288] sm:$0xff]
        %v1669 = vld [vmem:[#allocation3 + $0x290] sm:$0xff]
        %v1670 = vld [vmem:[#allocation3 + $0x298] sm:$0xff]
        %v1671 = vld [vmem:[#allocation3 + $0x2a0] sm:$0xff]
        %v1672 = vld [vmem:[#allocation3 + $0x2a8] sm:$0xff]
        %v1673 = vld [vmem:[#allocation3 + $0x2b0] sm:$0xff]
        %v1674 = vld [vmem:[#allocation3 + $0x2b8] sm:$0xff]
        %v1675 = vld [vmem:[#allocation3 + $0x2c0] sm:$0xff]
        %v1676 = vld [vmem:[#allocation3 + $0x2c8] sm:$0xff]
        %v1677 = vld [vmem:[#allocation3 + $0x2d0] sm:$0xff]
        %v1678 = vld [vmem:[#allocation3 + $0x2d8] sm:$0xff]
        %v1679 = vld [vmem:[#allocation3 + $0x2e0] sm:$0xff]
        %v1680 = vld [vmem:[#allocation3 + $0x2e8] sm:$0xff]
        %v1681 = vld [vmem:[#allocation3 + $0x2f0] sm:$0xff]
        %v1682 = vld [vmem:[#allocation3 + $0x2f8] sm:$0xff]
        %v1683 = vld [vmem:[#allocation3 + $0x300] sm:$0xff]
        %v1684 = vld [vmem:[#allocation3 + $0x308] sm:$0xff]
        %v1685 = vld [vmem:[#allocation3 + $0x310] sm:$0xff]
        %v1686 = vld [vmem:[#allocation3 + $0x318] sm:$0xff]
        %v1687 = vld [vmem:[#allocation3 + $0x320] sm:$0xff]
        %v1688 = vld [vmem:[#allocation3 + $0x328] sm:$0xff]
        %v1689 = vld [vmem:[#allocation3 + $0x330] sm:$0xff]
        %v1690 = vld [vmem:[#allocation3 + $0x338] sm:$0xff]
        %v1691 = vld [vmem:[#allocation3 + $0x340] sm:$0xff]
        %v1692 = vld [vmem:[#allocation3 + $0x348] sm:$0xff]
        %v1693 = vld [vmem:[#allocation3 + $0x350] sm:$0xff]
        %v1694 = vld [vmem:[#allocation3 + $0x358] sm:$0xff]
        %v1695 = vld [vmem:[#allocation3 + $0x360] sm:$0xff]
        %v1696 = vld [vmem:[#allocation3 + $0x368] sm:$0xff]
        %v1697 = vld [vmem:[#allocation3 + $0x370] sm:$0xff]
        %v1698 = vld [vmem:[#allocation3 + $0x378] sm:$0xff]
        %v1699 = vld [vmem:[#allocation3 + $0x380] sm:$0xff]
        %v1700 = vld [vmem:[#allocation3 + $0x388] sm:$0xff]
        %v1701 = vld [vmem:[#allocation3 + $0x390] sm:$0xff]
        %v1702 = vld [vmem:[#allocation3 + $0x398] sm:$0xff]
        %v1703 = vld [vmem:[#allocation3 + $0x3a0] sm:$0xff]
        %v1704 = vld [vmem:[#allocation3 + $0x3a8] sm:$0xff]
        %v1705 = vld [vmem:[#allocation3 + $0x3b0] sm:$0xff]
        %v1706 = vld [vmem:[#allocation3 + $0x3b8] sm:$0xff]
        %v1707 = vld [vmem:[#allocation3 + $0x3c0] sm:$0xff]
        %v1708 = vld [vmem:[#allocation3 + $0x3c8] sm:$0xff]
        %v1709 = vld [vmem:[#allocation3 + $0x3d0] sm:$0xff]
        %v1710 = vld [vmem:[#allocation3 + $0x3d8] sm:$0xff]
        %v1711 = vld [vmem:[#allocation3 + $0x3e0] sm:$0xff]
        %v1712 = vld [vmem:[#allocation3 + $0x3e8] sm:$0xff]
        %v1713 = vld [vmem:[#allocation3 + $0x3f0] sm:$0xff]
        %v1714 = vld [vmem:[#allocation3 + $0x3f8] sm:$0xff]
        %v1715 = vld [vmem:[#allocation3 + $0x400] sm:$0xff]
        %v1716 = vld [vmem:[#allocation3 + $0x408] sm:$0xff]
        %v1717 = vld [vmem:[#allocation3 + $0x410] sm:$0xff]
        %v1718 = vld [vmem:[#allocation3 + $0x418] sm:$0xff]
        %v1719 = vld [vmem:[#allocation3 + $0x420] sm:$0xff]
        %v1720 = vld [vmem:[#allocation3 + $0x428] sm:$0xff]
        %v1721 = vld [vmem:[#allocation3 + $0x430] sm:$0xff]
        %v1722 = vld [vmem:[#allocation3 + $0x438] sm:$0xff]
        %v1723 = vld [vmem:[#allocation3 + $0x440] sm:$0xff]
        %v1724 = vld [vmem:[#allocation3 + $0x448] sm:$0xff]
        %v1725 = vld [vmem:[#allocation3 + $0x450] sm:$0xff]
        %v1726 = vld [vmem:[#allocation3 + $0x458] sm:$0xff]
        %v1727 = vld [vmem:[#allocation3 + $0x460] sm:$0xff]
        %v1728 = vld [vmem:[#allocation3 + $0x468] sm:$0xff]
        %v1729 = vld [vmem:[#allocation3 + $0x470] sm:$0xff]
        %v1730 = vld [vmem:[#allocation3 + $0x478] sm:$0xff]
        %v1731 = vld [vmem:[#allocation3 + $0x480] sm:$0xff]
        %v1732 = vld [vmem:[#allocation3 + $0x488] sm:$0xff]
        %v1733 = vld [vmem:[#allocation3 + $0x490] sm:$0xff]
        %v1734 = vld [vmem:[#allocation3 + $0x498] sm:$0xff]
        %v1735 = vld [vmem:[#allocation3 + $0x4a0] sm:$0xff]
        %v1736 = vld [vmem:[#allocation3 + $0x4a8] sm:$0xff]
        %v1737 = vld [vmem:[#allocation3 + $0x4b0] sm:$0xff]
        %v1738 = vld [vmem:[#allocation3 + $0x4b8] sm:$0xff]
        %v1739 = vld [vmem:[#allocation3 + $0x4c0] sm:$0xff]
        %v1740 = vld [vmem:[#allocation3 + $0x4c8] sm:$0xff]
        %v1741 = vld [vmem:[#allocation3 + $0x4d0] sm:$0xff]
        %v1742 = vld [vmem:[#allocation3 + $0x4d8] sm:$0xff]
        %v1743 = vld [vmem:[#allocation3 + $0x4e0] sm:$0xff]
        %v1744 = vld [vmem:[#allocation3 + $0x4e8] sm:$0xff]
        %v1745 = vld [vmem:[#allocation3 + $0x4f0] sm:$0xff]
        %v1746 = vld [vmem:[#allocation3 + $0x4f8] sm:$0xff]
        %v1747 = vld [vmem:[#allocation3 + $0x500] sm:$0xff]
        %v1748 = vld [vmem:[#allocation3 + $0x508] sm:$0xff]
        %v1749 = vld [vmem:[#allocation3 + $0x510] sm:$0xff]
        %v1750 = vld [vmem:[#allocation3 + $0x518] sm:$0xff]
        %v1751 = vld [vmem:[#allocation3 + $0x520] sm:$0xff]
        %v1752 = vld [vmem:[#allocation3 + $0x528] sm:$0xff]
        %v1753 = vld [vmem:[#allocation3 + $0x530] sm:$0xff]
        %v1754 = vld [vmem:[#allocation3 + $0x538] sm:$0xff]
        %v1755 = vld [vmem:[#allocation3 + $0x540] sm:$0xff]
        %v1756 = vld [vmem:[#allocation3 + $0x548] sm:$0xff]
        %v1757 = vld [vmem:[#allocation3 + $0x550] sm:$0xff]
        %v1758 = vld [vmem:[#allocation3 + $0x558] sm:$0xff]
        %v1759 = vld [vmem:[#allocation3 + $0x560] sm:$0xff]
        %v1760 = vld [vmem:[#allocation3 + $0x568] sm:$0xff]
        %v1761 = vld [vmem:[#allocation3 + $0x570] sm:$0xff]
        %v1762 = vld [vmem:[#allocation3 + $0x578] sm:$0xff]
        %v1763 = vld [vmem:[#allocation3 + $0x580] sm:$0xff]
        %v1764 = vld [vmem:[#allocation3 + $0x588] sm:$0xff]
        %v1765 = vld [vmem:[#allocation3 + $0x590] sm:$0xff]
        %v1766 = vld [vmem:[#allocation3 + $0x598] sm:$0xff]
        %v1767 = vld [vmem:[#allocation3 + $0x5a0] sm:$0xff]
        %v1768 = vld [vmem:[#allocation3 + $0x5a8] sm:$0xff]
        %v1769 = vld [vmem:[#allocation3 + $0x5b0] sm:$0xff]
        %v1770 = vld [vmem:[#allocation3 + $0x5b8] sm:$0xff]
        %v1771 = vld [vmem:[#allocation3 + $0x5c0] sm:$0xff]
        %v1772 = vld [vmem:[#allocation3 + $0x5c8] sm:$0xff]
        %v1773 = vld [vmem:[#allocation3 + $0x5d0] sm:$0xff]
        %v1774 = vld [vmem:[#allocation3 + $0x5d8] sm:$0xff]
        %v1775 = vld [vmem:[#allocation3 + $0x5e0] sm:$0xff]
        %v1776 = vld [vmem:[#allocation3 + $0x5e8] sm:$0xff]
        %v1777 = vld [vmem:[#allocation3 + $0x5f0] sm:$0xff]
        %v1778 = vld [vmem:[#allocation3 + $0x5f8] sm:$0xff]
        %v1779 = vld [vmem:[#allocation3 + $0x600] sm:$0xff]
        %v1780 = vld [vmem:[#allocation3 + $0x608] sm:$0xff]
        %v1781 = vld [vmem:[#allocation3 + $0x610] sm:$0xff]
        %v1782 = vld [vmem:[#allocation3 + $0x618] sm:$0xff]
        %v1783 = vld [vmem:[#allocation3 + $0x620] sm:$0xff]
        %v1784 = vld [vmem:[#allocation3 + $0x628] sm:$0xff]
        %v1785 = vld [vmem:[#allocation3 + $0x630] sm:$0xff]
        %v1786 = vld [vmem:[#allocation3 + $0x638] sm:$0xff]
        %v1787 = vld [vmem:[#allocation3 + $0x640] sm:$0xff]
        %v1788 = vld [vmem:[#allocation3 + $0x648] sm:$0xff]
        %v1789 = vld [vmem:[#allocation3 + $0x650] sm:$0xff]
        %v1790 = vld [vmem:[#allocation3 + $0x658] sm:$0xff]
        %v1791 = vld [vmem:[#allocation3 + $0x660] sm:$0xff]
        %v1792 = vld [vmem:[#allocation3 + $0x668] sm:$0xff]
        %v1793 = vld [vmem:[#allocation3 + $0x670] sm:$0xff]
        %v1794 = vld [vmem:[#allocation3 + $0x678] sm:$0xff]
        %v1795 = vld [vmem:[#allocation3 + $0x680] sm:$0xff]
        %v1796 = vld [vmem:[#allocation3 + $0x688] sm:$0xff]
        %v1797 = vld [vmem:[#allocation3 + $0x690] sm:$0xff]
        %v1798 = vld [vmem:[#allocation3 + $0x698] sm:$0xff]
        %v1799 = vld [vmem:[#allocation3 + $0x6a0] sm:$0xff]
        %v1800 = vld [vmem:[#allocation3 + $0x6a8] sm:$0xff]
        %v1801 = vld [vmem:[#allocation3 + $0x6b0] sm:$0xff]
        %v1802 = vld [vmem:[#allocation3 + $0x6b8] sm:$0xff]
        %v1803 = vld [vmem:[#allocation3 + $0x6c0] sm:$0xff]
        %v1804 = vld [vmem:[#allocation3 + $0x6c8] sm:$0xff]
        %v1805 = vld [vmem:[#allocation3 + $0x6d0] sm:$0xff]
        %v1806 = vld [vmem:[#allocation3 + $0x6d8] sm:$0xff]
        %v1807 = vld [vmem:[#allocation3 + $0x6e0] sm:$0xff]
        %v1808 = vld [vmem:[#allocation3 + $0x6e8] sm:$0xff]
        %v1809 = vld [vmem:[#allocation3 + $0x6f0] sm:$0xff]
        %v1810 = vld [vmem:[#allocation3 + $0x6f8] sm:$0xff]
        %v1811 = vld [vmem:[#allocation3 + $0x700] sm:$0xff]
        %v1812 = vld [vmem:[#allocation3 + $0x708] sm:$0xff]
        %v1813 = vld [vmem:[#allocation3 + $0x710] sm:$0xff]
        %v1814 = vld [vmem:[#allocation3 + $0x718] sm:$0xff]
        %v1815 = vld [vmem:[#allocation3 + $0x720] sm:$0xff]
        %v1816 = vld [vmem:[#allocation3 + $0x728] sm:$0xff]
        %v1817 = vld [vmem:[#allocation3 + $0x730] sm:$0xff]
        %v1818 = vld [vmem:[#allocation3 + $0x738] sm:$0xff]
        %v1819 = vld [vmem:[#allocation3 + $0x740] sm:$0xff]
        %v1820 = vld [vmem:[#allocation3 + $0x748] sm:$0xff]
        %v1821 = vld [vmem:[#allocation3 + $0x750] sm:$0xff]
        %v1822 = vld [vmem:[#allocation3 + $0x758] sm:$0xff]
        %v1823 = vld [vmem:[#allocation3 + $0x760] sm:$0xff]
        %v1824 = vld [vmem:[#allocation3 + $0x768] sm:$0xff]
        %v1825 = vld [vmem:[#allocation3 + $0x770] sm:$0xff]
        %v1826 = vld [vmem:[#allocation3 + $0x778] sm:$0xff]
        %v1827 = vld [vmem:[#allocation3 + $0x780] sm:$0xff]
        %v1828 = vld [vmem:[#allocation3 + $0x788] sm:$0xff]
        %v1829 = vld [vmem:[#allocation3 + $0x790] sm:$0xff]
        %v1830 = vld [vmem:[#allocation3 + $0x798] sm:$0xff]
        %v1831 = vld [vmem:[#allocation3 + $0x7a0] sm:$0xff]
        %v1832 = vld [vmem:[#allocation3 + $0x7a8] sm:$0xff]
        %v1833 = vld [vmem:[#allocation3 + $0x7b0] sm:$0xff]
        %v1834 = vld [vmem:[#allocation3 + $0x7b8] sm:$0xff]
        %v1835 = vld [vmem:[#allocation3 + $0x7c0] sm:$0xff]
        %v1836 = vld [vmem:[#allocation3 + $0x7c8] sm:$0xff]
        %v1837 = vld [vmem:[#allocation3 + $0x7d0] sm:$0xff]
        %v1838 = vld [vmem:[#allocation3 + $0x7d8] sm:$0xff]
        %v1839 = vld [vmem:[#allocation3 + $0x7e0] sm:$0xff]
        %v1840 = vld [vmem:[#allocation3 + $0x7e8] sm:$0xff]
        %v1841 = vld [vmem:[#allocation3 + $0x7f0] sm:$0xff]
        %v1842 = vld [vmem:[#allocation3 + $0x7f8] sm:$0xff]
        %v1843 = vld [vmem:[#allocation3 + $0x800] sm:$0xff]
        %v1844 = vld [vmem:[#allocation3 + $0x808] sm:$0xff]
        %v1845 = vld [vmem:[#allocation3 + $0x810] sm:$0xff]
        %v1846 = vld [vmem:[#allocation3 + $0x818] sm:$0xff]
        %v1847 = vld [vmem:[#allocation3 + $0x820] sm:$0xff]
        %v1848 = vld [vmem:[#allocation3 + $0x828] sm:$0xff]
        %v1849 = vld [vmem:[#allocation3 + $0x830] sm:$0xff]
        %v1850 = vld [vmem:[#allocation3 + $0x838] sm:$0xff]
        %v1851 = vld [vmem:[#allocation3 + $0x840] sm:$0xff]
        %v1852 = vld [vmem:[#allocation3 + $0x848] sm:$0xff]
        %v1853 = vld [vmem:[#allocation3 + $0x850] sm:$0xff]
        %v1854 = vld [vmem:[#allocation3 + $0x858] sm:$0xff]
        %v1855 = vld [vmem:[#allocation3 + $0x860] sm:$0xff]
        %v1856 = vld [vmem:[#allocation3 + $0x868] sm:$0xff]
        %v1857 = vld [vmem:[#allocation3 + $0x870] sm:$0xff]
        %v1858 = vld [vmem:[#allocation3 + $0x878] sm:$0xff]
        %v1859 = vld [vmem:[#allocation3 + $0x880] sm:$0xff]
        %v1860 = vld [vmem:[#allocation3 + $0x888] sm:$0xff]
        %v1861 = vld [vmem:[#allocation3 + $0x890] sm:$0xff]
        %v1862 = vld [vmem:[#allocation3 + $0x898] sm:$0xff]
        %v1863 = vld [vmem:[#allocation3 + $0x8a0] sm:$0xff]
        %v1864 = vld [vmem:[#allocation3 + $0x8a8] sm:$0xff]
        %v1865 = vld [vmem:[#allocation3 + $0x8b0] sm:$0xff]
        %v1866 = vld [vmem:[#allocation3 + $0x8b8] sm:$0xff]
        %v1867 = vld [vmem:[#allocation3 + $0x8c0] sm:$0xff]
        %v1868 = vld [vmem:[#allocation3 + $0x8c8] sm:$0xff]
        %v1869 = vld [vmem:[#allocation3 + $0x8d0] sm:$0xff]
        %v1870 = vld [vmem:[#allocation3 + $0x8d8] sm:$0xff]
        %v1871 = vld [vmem:[#allocation3 + $0x8e0] sm:$0xff]
        %v1872 = vld [vmem:[#allocation3 + $0x8e8] sm:$0xff]
        %v1873 = vld [vmem:[#allocation3 + $0x8f0] sm:$0xff]
        %v1874 = vld [vmem:[#allocation3 + $0x8f8] sm:$0xff]
        %v1875 = vld [vmem:[#allocation4] sm:$0xff]
        %v1876 = vld [vmem:[#allocation4 + $0x8] sm:$0xff]
        %v1877 = vld [vmem:[#allocation4 + $0x10] sm:$0xff]
        %v1878 = vld [vmem:[#allocation4 + $0x18] sm:$0xff]
        %v1879 = vld [vmem:[#allocation4 + $0x20] sm:$0xff]
        %v1880 = vld [vmem:[#allocation4 + $0x28] sm:$0xff]
        %v1881 = vld [vmem:[#allocation4 + $0x30] sm:$0xff]
        %v1882 = vld [vmem:[#allocation4 + $0x38] sm:$0xff]
        %v1883 = vld [vmem:[#allocation4 + $0x40] sm:$0xff]
        %v1884 = vld [vmem:[#allocation4 + $0x48] sm:$0xff]
        %v1885 = vld [vmem:[#allocation4 + $0x50] sm:$0xff]
        %v1886 = vld [vmem:[#allocation4 + $0x58] sm:$0xff]
        %v1887 = vld [vmem:[#allocation4 + $0x60] sm:$0xff]
        %v1888 = vld [vmem:[#allocation4 + $0x68] sm:$0xff]
        %v1889 = vld [vmem:[#allocation4 + $0x70] sm:$0xff]
        %v1890 = vld [vmem:[#allocation4 + $0x78] sm:$0xff]
        %v1891 = vld [vmem:[#allocation4 + $0x80] sm:$0xff]
        %v1892 = vld [vmem:[#allocation4 + $0x88] sm:$0xff]
        %v1893 = vld [vmem:[#allocation4 + $0x90] sm:$0xff]
        %v1894 = vld [vmem:[#allocation4 + $0x98] sm:$0xff]
        %v1895 = vld [vmem:[#allocation4 + $0xa0] sm:$0xff]
        %v1896 = vld [vmem:[#allocation4 + $0xa8] sm:$0xff]
        %v1897 = vld [vmem:[#allocation4 + $0xb0] sm:$0xff]
        %v1898 = vld [vmem:[#allocation4 + $0xb8] sm:$0xff]
        %v1899 = vld [vmem:[#allocation4 + $0xc0] sm:$0xff]
        %v1900 = vld [vmem:[#allocation4 + $0xc8] sm:$0xff]
        %v1901 = vld [vmem:[#allocation4 + $0xd0] sm:$0xff]
        %v1902 = vld [vmem:[#allocation4 + $0xd8] sm:$0xff]
        %v1903 = vld [vmem:[#allocation4 + $0xe0] sm:$0xff]
        %v1904 = vld [vmem:[#allocation4 + $0xe8] sm:$0xff]
        %v1905 = vld [vmem:[#allocation4 + $0xf0] sm:$0xff]
        %v1906 = vld [vmem:[#allocation4 + $0xf8] sm:$0xff]
        %v1907 = vld [vmem:[#allocation4 + $0x100] sm:$0xff]
        %v1908 = vld [vmem:[#allocation4 + $0x108] sm:$0xff]
        %v1909 = vld [vmem:[#allocation4 + $0x110] sm:$0xff]
        %v1910 = vld [vmem:[#allocation4 + $0x118] sm:$0xff]
        %v1911 = vld [vmem:[#allocation4 + $0x120] sm:$0xff]
        %v1912 = vld [vmem:[#allocation4 + $0x128] sm:$0xff]
        %v1913 = vld [vmem:[#allocation4 + $0x130] sm:$0xff]
        %v1914 = vld [vmem:[#allocation4 + $0x138] sm:$0xff]
        %v1915 = vld [vmem:[#allocation4 + $0x140] sm:$0xff]
        %v1916 = vld [vmem:[#allocation4 + $0x148] sm:$0xff]
        %v1917 = vld [vmem:[#allocation4 + $0x150] sm:$0xff]
        %v1918 = vld [vmem:[#allocation4 + $0x158] sm:$0xff]
        %v1919 = vld [vmem:[#allocation4 + $0x160] sm:$0xff]
        %v1920 = vld [vmem:[#allocation4 + $0x168] sm:$0xff]
        %v1921 = vld [vmem:[#allocation4 + $0x170] sm:$0xff]
        %v1922 = vld [vmem:[#allocation4 + $0x178] sm:$0xff]
        %v1923 = vld [vmem:[#allocation4 + $0x180] sm:$0xff]
        %v1924 = vld [vmem:[#allocation4 + $0x188] sm:$0xff]
        %v1925 = vld [vmem:[#allocation4 + $0x190] sm:$0xff]
        %v1926 = vld [vmem:[#allocation4 + $0x198] sm:$0xff]
        %v1927 = vld [vmem:[#allocation4 + $0x1a0] sm:$0xff]
        %v1928 = vld [vmem:[#allocation4 + $0x1a8] sm:$0xff]
        %v1929 = vld [vmem:[#allocation4 + $0x1b0] sm:$0xff]
        %v1930 = vld [vmem:[#allocation4 + $0x1b8] sm:$0xff]
        %v1931 = vld [vmem:[#allocation4 + $0x1c0] sm:$0xff]
        %v1932 = vld [vmem:[#allocation4 + $0x1c8] sm:$0xff]
        %v1933 = vld [vmem:[#allocation4 + $0x1d0] sm:$0xff]
        %v1934 = vld [vmem:[#allocation4 + $0x1d8] sm:$0xff]
        %v1935 = vld [vmem:[#allocation4 + $0x1e0] sm:$0xff]
        %v1936 = vld [vmem:[#allocation4 + $0x1e8] sm:$0xff]
        %v1937 = vld [vmem:[#allocation4 + $0x1f0] sm:$0xff]
        %v1938 = vld [vmem:[#allocation4 + $0x1f8] sm:$0xff]
        %v1939 = vld [vmem:[#allocation4 + $0x200] sm:$0xff]
        %v1940 = vld [vmem:[#allocation4 + $0x208] sm:$0xff]
        %v1941 = vld [vmem:[#allocation4 + $0x210] sm:$0xff]
        %v1942 = vld [vmem:[#allocation4 + $0x218] sm:$0xff]
        %v1943 = vld [vmem:[#allocation4 + $0x220] sm:$0xff]
        %v1944 = vld [vmem:[#allocation4 + $0x228] sm:$0xff]
        %v1945 = vld [vmem:[#allocation4 + $0x230] sm:$0xff]
        %v1946 = vld [vmem:[#allocation4 + $0x238] sm:$0xff]
        %v1947 = vld [vmem:[#allocation4 + $0x240] sm:$0xff]
        %v1948 = vld [vmem:[#allocation4 + $0x248] sm:$0xff]
        %v1949 = vld [vmem:[#allocation4 + $0x250] sm:$0xff]
        %v1950 = vld [vmem:[#allocation4 + $0x258] sm:$0xff]
        %v1951 = vld [vmem:[#allocation4 + $0x260] sm:$0xff]
        %v1952 = vld [vmem:[#allocation4 + $0x268] sm:$0xff]
        %v1953 = vld [vmem:[#allocation4 + $0x270] sm:$0xff]
        %v1954 = vld [vmem:[#allocation4 + $0x278] sm:$0xff]
        %v1955 = vld [vmem:[#allocation4 + $0x280] sm:$0xff]
        %v1956 = vld [vmem:[#allocation4 + $0x288] sm:$0xff]
        %v1957 = vld [vmem:[#allocation4 + $0x290] sm:$0xff]
        %v1958 = vld [vmem:[#allocation4 + $0x298] sm:$0xff]
        %v1959 = vld [vmem:[#allocation4 + $0x2a0] sm:$0xff]
        %v1960 = vld [vmem:[#allocation4 + $0x2a8] sm:$0xff]
        %v1961 = vld [vmem:[#allocation4 + $0x2b0] sm:$0xff]
        %v1962 = vld [vmem:[#allocation4 + $0x2b8] sm:$0xff]
        %v1963 = vld [vmem:[#allocation4 + $0x2c0] sm:$0xff]
        %v1964 = vld [vmem:[#allocation4 + $0x2c8] sm:$0xff]
        %v1965 = vld [vmem:[#allocation4 + $0x2d0] sm:$0xff]
        %v1966 = vld [vmem:[#allocation4 + $0x2d8] sm:$0xff]
        %v1967 = vld [vmem:[#allocation4 + $0x2e0] sm:$0xff]
        %v1968 = vld [vmem:[#allocation4 + $0x2e8] sm:$0xff]
        %v1969 = vld [vmem:[#allocation4 + $0x2f0] sm:$0xff]
        %v1970 = vld [vmem:[#allocation4 + $0x2f8] sm:$0xff]
        %v1971 = vld [vmem:[#allocation4 + $0x300] sm:$0xff]
        %v1972 = vld [vmem:[#allocation4 + $0x308] sm:$0xff]
        %v1973 = vld [vmem:[#allocation4 + $0x310] sm:$0xff]
        %v1974 = vld [vmem:[#allocation4 + $0x318] sm:$0xff]
        %v1975 = vld [vmem:[#allocation4 + $0x320] sm:$0xff]
        %v1976 = vld [vmem:[#allocation4 + $0x328] sm:$0xff]
        %v1977 = vld [vmem:[#allocation4 + $0x330] sm:$0xff]
        %v1978 = vld [vmem:[#allocation4 + $0x338] sm:$0xff]
        %v1979 = vld [vmem:[#allocation4 + $0x340] sm:$0xff]
        %v1980 = vld [vmem:[#allocation4 + $0x348] sm:$0xff]
        %v1981 = vld [vmem:[#allocation4 + $0x350] sm:$0xff]
        %v1982 = vld [vmem:[#allocation4 + $0x358] sm:$0xff]
        %v1983 = vld [vmem:[#allocation4 + $0x360] sm:$0xff]
        %v1984 = vld [vmem:[#allocation4 + $0x368] sm:$0xff]
        %v1985 = vld [vmem:[#allocation4 + $0x370] sm:$0xff]
        %v1986 = vld [vmem:[#allocation4 + $0x378] sm:$0xff]
        %v1987 = vld [vmem:[#allocation4 + $0x380] sm:$0xff]
        %v1988 = vld [vmem:[#allocation4 + $0x388] sm:$0xff]
        %v1989 = vld [vmem:[#allocation4 + $0x390] sm:$0xff]
        %v1990 = vld [vmem:[#allocation4 + $0x398] sm:$0xff]
        %v1991 = vld [vmem:[#allocation4 + $0x3a0] sm:$0xff]
        %v1992 = vld [vmem:[#allocation4 + $0x3a8] sm:$0xff]
        %v1993 = vld [vmem:[#allocation4 + $0x3b0] sm:$0xff]
        %v1994 = vld [vmem:[#allocation4 + $0x3b8] sm:$0xff]
        %v1995 = vld [vmem:[#allocation4 + $0x3c0] sm:$0xff]
        %v1996 = vld [vmem:[#allocation4 + $0x3c8] sm:$0xff]
        %v1997 = vld [vmem:[#allocation4 + $0x3d0] sm:$0xff]
        %v1998 = vld [vmem:[#allocation4 + $0x3d8] sm:$0xff]
        %v1999 = vld [vmem:[#allocation4 + $0x3e0] sm:$0xff]
        %v2000 = vld [vmem:[#allocation4 + $0x3e8] sm:$0xff]
        %v2001 = vld [vmem:[#allocation4 + $0x3f0] sm:$0xff]
        %v2002 = vld [vmem:[#allocation4 + $0x3f8] sm:$0xff]
        %v2003 = vld [vmem:[#allocation4 + $0x400] sm:$0xff]
        %v2004 = vld [vmem:[#allocation4 + $0x408] sm:$0xff]
        %v2005 = vld [vmem:[#allocation4 + $0x410] sm:$0xff]
        %v2006 = vld [vmem:[#allocation4 + $0x418] sm:$0xff]
        %v2007 = vld [vmem:[#allocation4 + $0x420] sm:$0xff]
        %v2008 = vld [vmem:[#allocation4 + $0x428] sm:$0xff]
        %v2009 = vld [vmem:[#allocation4 + $0x430] sm:$0xff]
        %v2010 = vld [vmem:[#allocation4 + $0x438] sm:$0xff]
        %v2011 = vld [vmem:[#allocation4 + $0x440] sm:$0xff]
        %v2012 = vld [vmem:[#allocation4 + $0x448] sm:$0xff]
        %v2013 = vld [vmem:[#allocation4 + $0x450] sm:$0xff]
        %v2014 = vld [vmem:[#allocation4 + $0x458] sm:$0xff]
        %v2015 = vld [vmem:[#allocation4 + $0x460] sm:$0xff]
        %v2016 = vld [vmem:[#allocation4 + $0x468] sm:$0xff]
        %v2017 = vld [vmem:[#allocation4 + $0x470] sm:$0xff]
        %v2018 = vld [vmem:[#allocation4 + $0x478] sm:$0xff]
        %2019 = vmatprep.subr.mxu0 0.0
        %2020 = vmatpush1.msra.mxu0 %v1875
        %2021 = vmatprep.subr.mxu0 0.0
        %2022 = vmatpush1.msra.mxu0 %v1876
        %2023 = vmatprep.subr.mxu0 0.0
        %2024 = vmatpush1.msra.mxu0 %v1877
        %2025 = vmatprep.subr.mxu0 0.0
        %2026 = vmatpush1.msra.mxu0 %v1878
        %2027 = vmatprep.subr.mxu0 0.0
        %2028 = vmatpush1.msra.mxu0 %v1879
        %2029 = vmatprep.subr.mxu0 0.0
        %2030 = vmatpush1.msra.mxu0 %v1880
        %2031 = vmatprep.subr.mxu0 0.0
        %2032 = vmatpush1.msra.mxu0 %v1881
        %2033 = vmatprep.subr.mxu0 0.0
        %2034 = vmatpush1.msra.mxu0 %v1882
        %2035 = vmatprep.subr.mxu0 0.0
        %2036 = vmatpush1.msra.mxu0 %v1883
        %2037 = vmatprep.subr.mxu0 0.0
        %2038 = vmatpush1.msra.mxu0 %v1884
        %2039 = vmatprep.subr.mxu0 0.0
        %2040 = vmatpush1.msra.mxu0 %v1885
        %2041 = vmatprep.subr.mxu0 0.0
        %2042 = vmatpush1.msra.mxu0 %v1886
        %2043 = vmatprep.subr.mxu0 0.0
        %2044 = vmatpush1.msra.mxu0 %v1887
        %2045 = vmatprep.subr.mxu0 0.0
        %2046 = vmatpush1.msra.mxu0 %v1888
        %2047 = vmatprep.subr.mxu0 0.0
        %2048 = vmatpush1.msra.mxu0 %v1889
        %2049 = vmatprep.subr.mxu0 0.0
        %2050 = vmatpush1.msra.mxu0 %v1890
        %2051 = vmatprep.subr.mxu0 0.0
        %2052 = vmatpush1.msra.mxu0 %v1891
        %2053 = vmatprep.subr.mxu0 0.0
        %2054 = vmatpush1.msra.mxu0 %v1892
        %2055 = vmatprep.subr.mxu0 0.0
        %2056 = vmatpush1.msra.mxu0 %v1893
        %2057 = vmatprep.subr.mxu0 0.0
        %2058 = vmatpush1.msra.mxu0 %v1894
        %2059 = vmatprep.subr.mxu0 0.0
        %2060 = vmatpush1.msra.mxu0 %v1895
        %2061 = vmatprep.subr.mxu0 0.0
        %2062 = vmatpush1.msra.mxu0 %v1896
        %2063 = vmatprep.subr.mxu0 0.0
        %2064 = vmatpush1.msra.mxu0 %v1897
        %2065 = vmatprep.subr.mxu0 0.0
        %2066 = vmatpush1.msra.mxu0 %v1898
        %2067 = vmatprep.subr.mxu0 0.0
        %2068 = vmatpush1.msra.mxu0 %v1899
        %2069 = vmatprep.subr.mxu0 0.0
        %2070 = vmatpush1.msra.mxu0 %v1900
        %2071 = vmatprep.subr.mxu0 0.0
        %2072 = vmatpush1.msra.mxu0 %v1901
        %2073 = vmatprep.subr.mxu0 0.0
        %2074 = vmatpush1.msra.mxu0 %v1902
        %2075 = vmatprep.subr.mxu0 0.0
        %2076 = vmatpush1.msra.mxu0 %v1903
        %2077 = vmatprep.subr.mxu0 0.0
        %2078 = vmatpush1.msra.mxu0 %v1904
        %2079 = vmatprep.subr.mxu0 0.0
        %2080 = vmatpush1.msra.mxu0 %v1905
        %2081 = vmatprep.subr.mxu0 0.0
        %2082 = vmatpush1.msra.mxu0 %v1906
        %2083 = vmatprep.mubr.f32.mxu0 %v1588
        %2084 = vmatmul.mubr.f32.gmra.mrb[0].mxu0 %v1587
        %v2085 = vpop.f32.mrb[0].mxu0
        %v2086 = vadd.f32 0.0, %v2085
        %v2087 = vpop.f32.mrb[0].mxu0
        %2088 = vmatprep.mubr.f32.mxu0 %v1597
        %2089 = vmatmul.mubr.f32.gmra.mrb[0].mxu0 %v1596
        %v2090 = vpop.f32.mrb[0].mxu0
        %v2091 = vadd.f32 0.0, %v2090
        %v2092 = vpop.f32.mrb[0].mxu0
        %2093 = vmatprep.mubr.f32.mxu0 %v1606
        %2094 = vmatmul.mubr.f32.gmra.mrb[0].mxu0 %v1605
        %v2095 = vpop.f32.mrb[0].mxu0
        %v2096 = vadd.f32 0.0, %v2095
        %v2097 = vpop.f32.mrb[0].mxu0
        %2098 = vmatprep.mubr.f32.mxu0 %v1615
        %2099 = vmatmul.mubr.f32.gmra.mrb[0].mxu0 %v1614
        %v2100 = vpop.f32.mrb[0].mxu0
        %v2101 = vadd.f32 0.0, %v2100
        %v2102 = vpop.f32.mrb[0].mxu0
        %2103 = vmatprep.mubr.f32.mxu0 %v1624
        %2104 = vmatmul.mubr.f32.gmra.mrb[0].mxu0 %v1623
        %v2105 = vpop.f32.mrb[0].mxu0
        %v2106 = vadd.f32 0.0, %v2105
        %v2107 = vpop.f32.mrb[0].mxu0
        %2108 = vmatprep.mubr.f32.mxu0 %v1633
        %2109 = vmatmul.mubr.f32.gmra.mrb[0].mxu0 %v1632
        %v2110 = vpop.f32.mrb[0].mxu0
        %v2111 = vadd.f32 0.0, %v2110
        %v2112 = vpop.f32.mrb[0].mxu0
        %2113 = vmatprep.mubr.f32.mxu0 %v1642
        %2114 = vmatmul.mubr.f32.gmra.mrb[0].mxu0 %v1641
        %v2115 = vpop.f32.mrb[0].mxu0
        %v2116 = vadd.f32 0.0, %v2115
        %v2117 = vpop.f32.mrb[0].mxu0
        %2118 = vmatprep.mubr.f32.mxu0 %v1651
        %2119 = vmatmul.mubr.f32.gmra.mrb[0].mxu0 %v1650
        %v2120 = vpop.f32.mrb[0].mxu0
        %v2121 = vadd.f32 0.0, %v2120
        %v2122 = vpop.f32.mrb[0].mxu0
        %2123 = vmatprep.mubr.f32.mxu0 %v1660
        %2124 = vmatmul.mubr.f32.gmra.mrb[0].mxu0 %v1659
        %v2125 = vpop.f32.mrb[0].mxu0
        %v2126 = vadd.f32 0.0, %v2125
        %v2127 = vpop.f32.mrb[0].mxu0
        %2128 = vmatprep.mubr.f32.mxu0 %v1669
        %2129 = vmatmul.mubr.f32.gmra.mrb[0].mxu0 %v1668
        %v2130 = vpop.f32.mrb[0].mxu0
        %v2131 = vadd.f32 0.0, %v2130
        %v2132 = vpop.f32.mrb[0].mxu0
        %2133 = vmatprep.mubr.f32.mxu0 %v1678
        %2134 = vmatmul.mubr.f32.gmra.mrb[0].mxu0 %v1677
        %v2135 = vpop.f32.mrb[0].mxu0
        %v2136 = vadd.f32 0.0, %v2135
        %v2137 = vpop.f32.mrb[0].mxu0
        %2138 = vmatprep.mubr.f32.mxu0 %v1687
        %2139 = vmatmul.mubr.f32.gmra.mrb[0].mxu0 %v1686
        %v2140 = vpop.f32.mrb[0].mxu0
        %v2141 = vadd.f32 0.0, %v2140
        %v2142 = vpop.f32.mrb[0].mxu0
        %2143 = vmatprep.mubr.f32.mxu0 %v1696
        %2144 = vmatmul.mubr.f32.gmra.mrb[0].mxu0 %v1695
        %v2145 = vpop.f32.mrb[0].mxu0
        %v2146 = vadd.f32 0.0, %v2145
        %v2147 = vpop.f32.mrb[0].mxu0
        %2148 = vmatprep.mubr.f32.mxu0 %v1705
        %2149 = vmatmul.mubr.f32.gmra.mrb[0].mxu0 %v1704
        %v2150 = vpop.f32.mrb[0].mxu0
        %v2151 = vadd.f32 0.0, %v2150
        %v2152 = vpop.f32.mrb[0].mxu0
        %2153 = vmatprep.mubr.f32.mxu0 %v1714
        %2154 = vmatmul.mubr.f32.gmra.mrb[0].mxu0 %v1713
        %v2155 = vpop.f32.mrb[0].mxu0
        %v2156 = vadd.f32 0.0, %v2155
        %v2157 = vpop.f32.mrb[0].mxu0
        %2158 = vmatprep.mubr.f32.mxu0 %v1723
        %2159 = vmatmul.mubr.f32.gmra.mrb[0].mxu0 %v1722
        %v2160 = vpop.f32.mrb[0].mxu0
        %v2161 = vadd.f32 0.0, %v2160
        %v2162 = vpop.f32.mrb[0].mxu0
        %2163 = vmatprep.mubr.f32.mxu0 %v1732
        %2164 = vmatmul.mubr.f32.gmra.mrb[0].mxu0 %v1731
        %v2165 = vpop.f32.mrb[0].mxu0
        %v2166 = vadd.f32 0.0, %v2165
        %v2167 = vpop.f32.mrb[0].mxu0
        %2168 = vmatprep.mubr.f32.mxu0 %v1741
        %2169 = vmatmul.mubr.f32.gmra.mrb[0].mxu0 %v1740
        %v2170 = vpop.f32.mrb[0].mxu0
        %v2171 = vadd.f32 0.0, %v2170
        %v2172 = vpop.f32.mrb[0].mxu0
        %2173 = vmatprep.mubr.f32.mxu0 %v1750
        %2174 = vmatmul.mubr.f32.gmra.mrb[0].mxu0 %v1749
        %v2175 = vpop.f32.mrb[0].mxu0
        %v2176 = vadd.f32 0.0, %v2175
        %v2177 = vpop.f32.mrb[0].mxu0
        %2178 = vmatprep.mubr.f32.mxu0 %v1759
        %2179 = vmatmul.mubr.f32.gmra.mrb[0].mxu0 %v1758
        %v2180 = vpop.f32.mrb[0].mxu0
        %v2181 = vadd.f32 0.0, %v2180
        %v2182 = vpop.f32.mrb[0].mxu0
        %2183 = vmatprep.mubr.f32.mxu0 %v1768
        %2184 = vmatmul.mubr.f32.gmra.mrb[0].mxu0 %v1767
        %v2185 = vpop.f32.mrb[0].mxu0
        %v2186 = vadd.f32 0.0, %v2185
        %v2187 = vpop.f32.mrb[0].mxu0
        %2188 = vmatprep.mubr.f32.mxu0 %v1777
        %2189 = vmatmul.mubr.f32.gmra.mrb[0].mxu0 %v1776
        %v2190 = vpop.f32.mrb[0].mxu0
        %v2191 = vadd.f32 0.0, %v2190
        %v2192 = vpop.f32.mrb[0].mxu0
        %2193 = vmatprep.mubr.f32.mxu0 %v1786
        %2194 = vmatmul.mubr.f32.gmra.mrb[0].mxu0 %v1785
        %v2195 = vpop.f32.mrb[0].mxu0
        %v2196 = vadd.f32 0.0, %v2195
        %v2197 = vpop.f32.mrb[0].mxu0
        %2198 = vmatprep.mubr.f32.mxu0 %v1795
        %2199 = vmatmul.mubr.f32.gmra.mrb[0].mxu0 %v1794
        %v2200 = vpop.f32.mrb[0].mxu0
        %v2201 = vadd.f32 0.0, %v2200
        %v2202 = vpop.f32.mrb[0].mxu0
        %2203 = vmatprep.mubr.f32.mxu0 %v1804
        %2204 = vmatmul.mubr.f32.gmra.mrb[0].mxu0 %v1803
        %v2205 = vpop.f32.mrb[0].mxu0
        %v2206 = vadd.f32 0.0, %v2205
        %v2207 = vpop.f32.mrb[0].mxu0
        %2208 = vmatprep.mubr.f32.mxu0 %v1813
        %2209 = vmatmul.mubr.f32.gmra.mrb[0].mxu0 %v1812
        %v2210 = vpop.f32.mrb[0].mxu0
        %v2211 = vadd.f32 0.0, %v2210
        %v2212 = vpop.f32.mrb[0].mxu0
        %2213 = vmatprep.mubr.f32.mxu0 %v1822
        %2214 = vmatmul.mubr.f32.gmra.mrb[0].mxu0 %v1821
        %v2215 = vpop.f32.mrb[0].mxu0
        %v2216 = vadd.f32 0.0, %v2215
        %v2217 = vpop.f32.mrb[0].mxu0
        %2218 = vmatprep.mubr.f32.mxu0 %v1831
        %2219 = vmatmul.mubr.f32.gmra.mrb[0].mxu0 %v1830
        %v2220 = vpop.f32.mrb[0].mxu0
        %v2221 = vadd.f32 0.0, %v2220
        %v2222 = vpop.f32.mrb[0].mxu0
        %2223 = vmatprep.mubr.f32.mxu0 %v1840
        %2224 = vmatmul.mubr.f32.gmra.mrb[0].mxu0 %v1839
        %v2225 = vpop.f32.mrb[0].mxu0
        %v2226 = vadd.f32 0.0, %v2225
        %v2227 = vpop.f32.mrb[0].mxu0
        %2228 = vmatprep.mubr.f32.mxu0 %v1849
        %2229 = vmatmul.mubr.f32.gmra.mrb[0].mxu0 %v1848
        %v2230 = vpop.f32.mrb[0].mxu0
        %v2231 = vadd.f32 0.0, %v2230
        %v2232 = vpop.f32.mrb[0].mxu0
        %2233 = vmatprep.mubr.f32.mxu0 %v1858
        %2234 = vmatmul.mubr.f32.gmra.mrb[0].mxu0 %v1857
        %v2235 = vpop.f32.mrb[0].mxu0
        %v2236 = vadd.f32 0.0, %v2235
        %v2237 = vpop.f32.mrb[0].mxu0
        %2238 = vmatprep.mubr.f32.mxu0 %v1867
        %2239 = vmatmul.mubr.f32.gmra.mrb[0].mxu0 %v1866
        %v2240 = vpop.f32.mrb[0].mxu0
        %v2241 = vadd.f32 0.0, %v2240
        %v2242 = vpop.f32.mrb[0].mxu0
        %2243 = vdwg.mxu0
        %2244 = vmatprep.subr.mxu0 0.0
        %2245 = vmatpush1.msra.mxu0 %v1907
        %2246 = vmatprep.subr.mxu0 0.0
        %2247 = vmatpush1.msra.mxu0 %v1908
        %2248 = vmatprep.subr.mxu0 0.0
        %2249 = vmatpush1.msra.mxu0 %v1909
        %2250 = vmatprep.subr.mxu0 0.0
        %2251 = vmatpush1.msra.mxu0 %v1910
        %2252 = vmatprep.subr.mxu0 0.0
        %2253 = vmatpush1.msra.mxu0 %v1911
        %2254 = vmatprep.subr.mxu0 0.0
        %2255 = vmatpush1.msra.mxu0 %v1912
        %2256 = vmatprep.subr.mxu0 0.0
        %2257 = vmatpush1.msra.mxu0 %v1913
        %2258 = vmatprep.subr.mxu0 0.0
        %2259 = vmatpush1.msra.mxu0 %v1914
        %2260 = vmatprep.subr.mxu0 0.0
        %2261 = vmatpush1.msra.mxu0 %v1915
        %2262 = vmatprep.subr.mxu0 0.0
        %2263 = vmatpush1.msra.mxu0 %v1916
        %2264 = vmatprep.subr.mxu0 0.0
        %2265 = vmatpush1.msra.mxu0 %v1917
        %2266 = vmatprep.subr.mxu0 0.0
        %2267 = vmatpush1.msra.mxu0 %v1918
        %2268 = vmatprep.subr.mxu0 0.0
        %2269 = vmatpush1.msra.mxu0 %v1919
        %2270 = vmatprep.subr.mxu0 0.0
        %2271 = vmatpush1.msra.mxu0 %v1920
        %2272 = vmatprep.subr.mxu0 0.0
        %2273 = vmatpush1.msra.mxu0 %v1921
        %2274 = vmatprep.subr.mxu0 0.0
        %2275 = vmatpush1.msra.mxu0 %v1922
        %2276 = vmatprep.subr.mxu0 0.0
        %2277 = vmatpush1.msra.mxu0 %v1923
        %2278 = vmatprep.subr.mxu0 0.0
        %2279 = vmatpush1.msra.mxu0 %v1924
        %2280 = vmatprep.subr.mxu0 0.0
        %2281 = vmatpush1.msra.mxu0 %v1925
        %2282 = vmatprep.subr.mxu0 0.0
        %2283 = vmatpush1.msra.mxu0 %v1926
        %2284 = vmatprep.subr.mxu0 0.0
        %2285 = vmatpush1.msra.mxu0 %v1927
        %2286 = vmatprep.subr.mxu0 0.0
        %2287 = vmatpush1.msra.mxu0 %v1928
        %2288 = vmatprep.subr.mxu0 0.0
        %2289 = vmatpush1.msra.mxu0 %v1929
        %2290 = vmatprep.subr.mxu0 0.0
        %2291 = vmatpush1.msra.mxu0 %v1930
        %2292 = vmatprep.subr.mxu0 0.0
        %2293 = vmatpush1.msra.mxu0 %v1931
        %2294 = vmatprep.subr.mxu0 0.0
        %2295 = vmatpush1.msra.mxu0 %v1932
        %2296 = vmatprep.subr.mxu0 0.0
        %2297 = vmatpush1.msra.mxu0 %v1933
        %2298 = vmatprep.subr.mxu0 0.0
        %2299 = vmatpush1.msra.mxu0 %v1934
        %2300 = vmatprep.subr.mxu0 0.0
        %2301 = vmatpush1.msra.mxu0 %v1935
        %2302 = vmatprep.subr.mxu0 0.0
        %2303 = vmatpush1.msra.mxu0 %v1936
        %2304 = vmatprep.subr.mxu0 0.0
        %2305 = vmatpush1.msra.mxu0 %v1937
        %2306 = vmatprep.subr.mxu0 0.0
        %2307 = vmatpush1.msra.mxu0 %v1938
        %2308 = vmatprep.mubr.f32.mxu0 %v1590
        %2309 = vmatmul.mubr.f32.gmra.mrb[0].mxu0 %v1589
        %v2310 = vpop.f32.mrb[0].mxu0
        %v2311 = vadd.f32 %v2086, %v2310
        %v2312 = vpop.f32.mrb[0].mxu0
        %2313 = vmatprep.mubr.f32.mxu0 %v1599
        %2314 = vmatmul.mubr.f32.gmra.mrb[0].mxu0 %v1598
        %v2315 = vpop.f32.mrb[0].mxu0
        %v2316 = vadd.f32 %v2091, %v2315
        %v2317 = vpop.f32.mrb[0].mxu0
        %2318 = vmatprep.mubr.f32.mxu0 %v1608
        %2319 = vmatmul.mubr.f32.gmra.mrb[0].mxu0 %v1607
        %v2320 = vpop.f32.mrb[0].mxu0
        %v2321 = vadd.f32 %v2096, %v2320
        %v2322 = vpop.f32.mrb[0].mxu0
        %2323 = vmatprep.mubr.f32.mxu0 %v1617
        %2324 = vmatmul.mubr.f32.gmra.mrb[0].mxu0 %v1616
        %v2325 = vpop.f32.mrb[0].mxu0
        %v2326 = vadd.f32 %v2101, %v2325
        %v2327 = vpop.f32.mrb[0].mxu0
        %2328 = vmatprep.mubr.f32.mxu0 %v1626
        %2329 = vmatmul.mubr.f32.gmra.mrb[0].mxu0 %v1625
        %v2330 = vpop.f32.mrb[0].mxu0
        %v2331 = vadd.f32 %v2106, %v2330
        %v2332 = vpop.f32.mrb[0].mxu0
        %2333 = vmatprep.mubr.f32.mxu0 %v1635
        %2334 = vmatmul.mubr.f32.gmra.mrb[0].mxu0 %v1634
        %v2335 = vpop.f32.mrb[0].mxu0
        %v2336 = vadd.f32 %v2111, %v2335
        %v2337 = vpop.f32.mrb[0].mxu0
        %2338 = vmatprep.mubr.f32.mxu0 %v1644
        %2339 = vmatmul.mubr.f32.gmra.mrb[0].mxu0 %v1643
        %v2340 = vpop.f32.mrb[0].mxu0
        %v2341 = vadd.f32 %v2116, %v2340
        %v2342 = vpop.f32.mrb[0].mxu0
        %2343 = vmatprep.mubr.f32.mxu0 %v1653
        %2344 = vmatmul.mubr.f32.gmra.mrb[0].mxu0 %v1652
        %v2345 = vpop.f32.mrb[0].mxu0
        %v2346 = vadd.f32 %v2121, %v2345
        %v2347 = vpop.f32.mrb[0].mxu0
        %2348 = vmatprep.mubr.f32.mxu0 %v1662
        %2349 = vmatmul.mubr.f32.gmra.mrb[0].mxu0 %v1661
        %v2350 = vpop.f32.mrb[0].mxu0
        %v2351 = vadd.f32 %v2126, %v2350
        %v2352 = vpop.f32.mrb[0].mxu0
        %2353 = vmatprep.mubr.f32.mxu0 %v1671
        %2354 = vmatmul.mubr.f32.gmra.mrb[0].mxu0 %v1670
        %v2355 = vpop.f32.mrb[0].mxu0
        %v2356 = vadd.f32 %v2131, %v2355
        %v2357 = vpop.f32.mrb[0].mxu0
        %2358 = vmatprep.mubr.f32.mxu0 %v1680
        %2359 = vmatmul.mubr.f32.gmra.mrb[0].mxu0 %v1679
        %v2360 = vpop.f32.mrb[0].mxu0
        %v2361 = vadd.f32 %v2136, %v2360
        %v2362 = vpop.f32.mrb[0].mxu0
        %2363 = vmatprep.mubr.f32.mxu0 %v1689
        %2364 = vmatmul.mubr.f32.gmra.mrb[0].mxu0 %v1688
        %v2365 = vpop.f32.mrb[0].mxu0
        %v2366 = vadd.f32 %v2141, %v2365
        %v2367 = vpop.f32.mrb[0].mxu0
        %2368 = vmatprep.mubr.f32.mxu0 %v1698
        %2369 = vmatmul.mubr.f32.gmra.mrb[0].mxu0 %v1697
        %v2370 = vpop.f32.mrb[0].mxu0
        %v2371 = vadd.f32 %v2146, %v2370
        %v2372 = vpop.f32.mrb[0].mxu0
        %2373 = vmatprep.mubr.f32.mxu0 %v1707
        %2374 = vmatmul.mubr.f32.gmra.mrb[0].mxu0 %v1706
        %v2375 = vpop.f32.mrb[0].mxu0
        %v2376 = vadd.f32 %v2151, %v2375
        %v2377 = vpop.f32.mrb[0].mxu0
        %2378 = vmatprep.mubr.f32.mxu0 %v1716
        %2379 = vmatmul.mubr.f32.gmra.mrb[0].mxu0 %v1715
        %v2380 = vpop.f32.mrb[0].mxu0
        %v2381 = vadd.f32 %v2156, %v2380
        %v2382 = vpop.f32.mrb[0].mxu0
        %2383 = vmatprep.mubr.f32.mxu0 %v1725
        %2384 = vmatmul.mubr.f32.gmra.mrb[0].mxu0 %v1724
        %v2385 = vpop.f32.mrb[0].mxu0
        %v2386 = vadd.f32 %v2161, %v2385
        %v2387 = vpop.f32.mrb[0].mxu0
        %2388 = vmatprep.mubr.f32.mxu0 %v1734
        %2389 = vmatmul.mubr.f32.gmra.mrb[0].mxu0 %v1733
        %v2390 = vpop.f32.mrb[0].mxu0
        %v2391 = vadd.f32 %v2166, %v2390
        %v2392 = vpop.f32.mrb[0].mxu0
        %2393 = vmatprep.mubr.f32.mxu0 %v1743
        %2394 = vmatmul.mubr.f32.gmra.mrb[0].mxu0 %v1742
        %v2395 = vpop.f32.mrb[0].mxu0
        %v2396 = vadd.f32 %v2171, %v2395
        %v2397 = vpop.f32.mrb[0].mxu0
        %2398 = vmatprep.mubr.f32.mxu0 %v1752
        %2399 = vmatmul.mubr.f32.gmra.mrb[0].mxu0 %v1751
        %v2400 = vpop.f32.mrb[0].mxu0
        %v2401 = vadd.f32 %v2176, %v2400
        %v2402 = vpop.f32.mrb[0].mxu0
        %2403 = vmatprep.mubr.f32.mxu0 %v1761
        %2404 = vmatmul.mubr.f32.gmra.mrb[0].mxu0 %v1760
        %v2405 = vpop.f32.mrb[0].mxu0
        %v2406 = vadd.f32 %v2181, %v2405
        %v2407 = vpop.f32.mrb[0].mxu0
        %2408 = vmatprep.mubr.f32.mxu0 %v1770
        %2409 = vmatmul.mubr.f32.gmra.mrb[0].mxu0 %v1769
        %v2410 = vpop.f32.mrb[0].mxu0
        %v2411 = vadd.f32 %v2186, %v2410
        %v2412 = vpop.f32.mrb[0].mxu0
        %2413 = vmatprep.mubr.f32.mxu0 %v1779
        %2414 = vmatmul.mubr.f32.gmra.mrb[0].mxu0 %v1778
        %v2415 = vpop.f32.mrb[0].mxu0
        %v2416 = vadd.f32 %v2191, %v2415
        %v2417 = vpop.f32.mrb[0].mxu0
        %2418 = vmatprep.mubr.f32.mxu0 %v1788
        %2419 = vmatmul.mubr.f32.gmra.mrb[0].mxu0 %v1787
        %v2420 = vpop.f32.mrb[0].mxu0
        %v2421 = vadd.f32 %v2196, %v2420
        %v2422 = vpop.f32.mrb[0].mxu0
        %2423 = vmatprep.mubr.f32.mxu0 %v1797
        %2424 = vmatmul.mubr.f32.gmra.mrb[0].mxu0 %v1796
        %v2425 = vpop.f32.mrb[0].mxu0
        %v2426 = vadd.f32 %v2201, %v2425
        %v2427 = vpop.f32.mrb[0].mxu0
        %2428 = vmatprep.mubr.f32.mxu0 %v1806
        %2429 = vmatmul.mubr.f32.gmra.mrb[0].mxu0 %v1805
        %v2430 = vpop.f32.mrb[0].mxu0
        %v2431 = vadd.f32 %v2206, %v2430
        %v2432 = vpop.f32.mrb[0].mxu0
        %2433 = vmatprep.mubr.f32.mxu0 %v1815
        %2434 = vmatmul.mubr.f32.gmra.mrb[0].mxu0 %v1814
        %v2435 = vpop.f32.mrb[0].mxu0
        %v2436 = vadd.f32 %v2211, %v2435
        %v2437 = vpop.f32.mrb[0].mxu0
        %2438 = vmatprep.mubr.f32.mxu0 %v1824
        %2439 = vmatmul.mubr.f32.gmra.mrb[0].mxu0 %v1823
        %v2440 = vpop.f32.mrb[0].mxu0
        %v2441 = vadd.f32 %v2216, %v2440
        %v2442 = vpop.f32.mrb[0].mxu0
        %2443 = vmatprep.mubr.f32.mxu0 %v1833
        %2444 = vmatmul.mubr.f32.gmra.mrb[0].mxu0 %v1832
        %v2445 = vpop.f32.mrb[0].mxu0
        %v2446 = vadd.f32 %v2221, %v2445
        %v2447 = vpop.f32.mrb[0].mxu0
        %2448 = vmatprep.mubr.f32.mxu0 %v1842
        %2449 = vmatmul.mubr.f32.gmra.mrb[0].mxu0 %v1841
        %v2450 = vpop.f32.mrb[0].mxu0
        %v2451 = vadd.f32 %v2226, %v2450
        %v2452 = vpop.f32.mrb[0].mxu0
        %2453 = vmatprep.mubr.f32.mxu0 %v1851
        %2454 = vmatmul.mubr.f32.gmra.mrb[0].mxu0 %v1850
        %v2455 = vpop.f32.mrb[0].mxu0
        %v2456 = vadd.f32 %v2231, %v2455
        %v2457 = vpop.f32.mrb[0].mxu0
        %2458 = vmatprep.mubr.f32.mxu0 %v1860
        %2459 = vmatmul.mubr.f32.gmra.mrb[0].mxu0 %v1859
        %v2460 = vpop.f32.mrb[0].mxu0
        %v2461 = vadd.f32 %v2236, %v2460
        %v2462 = vpop.f32.mrb[0].mxu0
        %2463 = vmatprep.mubr.f32.mxu0 %v1869
        %2464 = vmatmul.mubr.f32.gmra.mrb[0].mxu0 %v1868
        %v2465 = vpop.f32.mrb[0].mxu0
        %v2466 = vadd.f32 %v2241, %v2465
        %v2467 = vpop.f32.mrb[0].mxu0
        %2468 = vdwg.mxu0
        %2469 = vmatprep.subr.mxu0 0.0
        %2470 = vmatpush1.msra.mxu0 %v1939
        %2471 = vmatprep.subr.mxu0 0.0
        %2472 = vmatpush1.msra.mxu0 %v1940
        %2473 = vmatprep.subr.mxu0 0.0
        %2474 = vmatpush1.msra.mxu0 %v1941
        %2475 = vmatprep.subr.mxu0 0.0
        %2476 = vmatpush1.msra.mxu0 %v1942
        %2477 = vmatprep.subr.mxu0 0.0
        %2478 = vmatpush1.msra.mxu0 %v1943
        %2479 = vmatprep.subr.mxu0 0.0
        %2480 = vmatpush1.msra.mxu0 %v1944
        %2481 = vmatprep.subr.mxu0 0.0
        %2482 = vmatpush1.msra.mxu0 %v1945
        %2483 = vmatprep.subr.mxu0 0.0
        %2484 = vmatpush1.msra.mxu0 %v1946
        %2485 = vmatprep.subr.mxu0 0.0
        %2486 = vmatpush1.msra.mxu0 %v1947
        %2487 = vmatprep.subr.mxu0 0.0
        %2488 = vmatpush1.msra.mxu0 %v1948
        %2489 = vmatprep.subr.mxu0 0.0
        %2490 = vmatpush1.msra.mxu0 %v1949
        %2491 = vmatprep.subr.mxu0 0.0
        %2492 = vmatpush1.msra.mxu0 %v1950
        %2493 = vmatprep.subr.mxu0 0.0
        %2494 = vmatpush1.msra.mxu0 %v1951
        %2495 = vmatprep.subr.mxu0 0.0
        %2496 = vmatpush1.msra.mxu0 %v1952
        %2497 = vmatprep.subr.mxu0 0.0
        %2498 = vmatpush1.msra.mxu0 %v1953
        %2499 = vmatprep.subr.mxu0 0.0
        %2500 = vmatpush1.msra.mxu0 %v1954
        %2501 = vmatprep.subr.mxu0 0.0
        %2502 = vmatpush1.msra.mxu0 %v1955
        %2503 = vmatprep.subr.mxu0 0.0
        %2504 = vmatpush1.msra.mxu0 %v1956
        %2505 = vmatprep.subr.mxu0 0.0
        %2506 = vmatpush1.msra.mxu0 %v1957
        %2507 = vmatprep.subr.mxu0 0.0
        %2508 = vmatpush1.msra.mxu0 %v1958
        %2509 = vmatprep.subr.mxu0 0.0
        %2510 = vmatpush1.msra.mxu0 %v1959
        %2511 = vmatprep.subr.mxu0 0.0
        %2512 = vmatpush1.msra.mxu0 %v1960
        %2513 = vmatprep.subr.mxu0 0.0
        %2514 = vmatpush1.msra.mxu0 %v1961
        %2515 = vmatprep.subr.mxu0 0.0
        %2516 = vmatpush1.msra.mxu0 %v1962
        %2517 = vmatprep.subr.mxu0 0.0
        %2518 = vmatpush1.msra.mxu0 %v1963
        %2519 = vmatprep.subr.mxu0 0.0
        %2520 = vmatpush1.msra.mxu0 %v1964
        %2521 = vmatprep.subr.mxu0 0.0
        %2522 = vmatpush1.msra.mxu0 %v1965
        %2523 = vmatprep.subr.mxu0 0.0
        %2524 = vmatpush1.msra.mxu0 %v1966
        %2525 = vmatprep.subr.mxu0 0.0
        %2526 = vmatpush1.msra.mxu0 %v1967
        %2527 = vmatprep.subr.mxu0 0.0
        %2528 = vmatpush1.msra.mxu0 %v1968
        %2529 = vmatprep.subr.mxu0 0.0
        %2530 = vmatpush1.msra.mxu0 %v1969
        %2531 = vmatprep.subr.mxu0 0.0
        %2532 = vmatpush1.msra.mxu0 %v1970
        %2533 = vmatprep.mubr.f32.mxu0 %v1592
        %2534 = vmatmul.mubr.f32.gmra.mrb[0].mxu0 %v1591
        %v2535 = vpop.f32.mrb[0].mxu0
        %v2536 = vadd.f32 %v2311, %v2535
        %v2537 = vpop.f32.mrb[0].mxu0
        %2538 = vmatprep.mubr.f32.mxu0 %v1601
        %2539 = vmatmul.mubr.f32.gmra.mrb[0].mxu0 %v1600
        %v2540 = vpop.f32.mrb[0].mxu0
        %v2541 = vadd.f32 %v2316, %v2540
        %v2542 = vpop.f32.mrb[0].mxu0
        %2543 = vmatprep.mubr.f32.mxu0 %v1610
        %2544 = vmatmul.mubr.f32.gmra.mrb[0].mxu0 %v1609
        %v2545 = vpop.f32.mrb[0].mxu0
        %v2546 = vadd.f32 %v2321, %v2545
        %v2547 = vpop.f32.mrb[0].mxu0
        %2548 = vmatprep.mubr.f32.mxu0 %v1619
        %2549 = vmatmul.mubr.f32.gmra.mrb[0].mxu0 %v1618
        %v2550 = vpop.f32.mrb[0].mxu0
        %v2551 = vadd.f32 %v2326, %v2550
        %v2552 = vpop.f32.mrb[0].mxu0
        %2553 = vmatprep.mubr.f32.mxu0 %v1628
        %2554 = vmatmul.mubr.f32.gmra.mrb[0].mxu0 %v1627
        %v2555 = vpop.f32.mrb[0].mxu0
        %v2556 = vadd.f32 %v2331, %v2555
        %v2557 = vpop.f32.mrb[0].mxu0
        %2558 = vmatprep.mubr.f32.mxu0 %v1637
        %2559 = vmatmul.mubr.f32.gmra.mrb[0].mxu0 %v1636
        %v2560 = vpop.f32.mrb[0].mxu0
        %v2561 = vadd.f32 %v2336, %v2560
        %v2562 = vpop.f32.mrb[0].mxu0
        %2563 = vmatprep.mubr.f32.mxu0 %v1646
        %2564 = vmatmul.mubr.f32.gmra.mrb[0].mxu0 %v1645
        %v2565 = vpop.f32.mrb[0].mxu0
        %v2566 = vadd.f32 %v2341, %v2565
        %v2567 = vpop.f32.mrb[0].mxu0
        %2568 = vmatprep.mubr.f32.mxu0 %v1655
        %2569 = vmatmul.mubr.f32.gmra.mrb[0].mxu0 %v1654
        %v2570 = vpop.f32.mrb[0].mxu0
        %v2571 = vadd.f32 %v2346, %v2570
        %v2572 = vpop.f32.mrb[0].mxu0
        %2573 = vmatprep.mubr.f32.mxu0 %v1664
        %2574 = vmatmul.mubr.f32.gmra.mrb[0].mxu0 %v1663
        %v2575 = vpop.f32.mrb[0].mxu0
        %v2576 = vadd.f32 %v2351, %v2575
        %v2577 = vpop.f32.mrb[0].mxu0
        %2578 = vmatprep.mubr.f32.mxu0 %v1673
        %2579 = vmatmul.mubr.f32.gmra.mrb[0].mxu0 %v1672
        %v2580 = vpop.f32.mrb[0].mxu0
        %v2581 = vadd.f32 %v2356, %v2580
        %v2582 = vpop.f32.mrb[0].mxu0
        %2583 = vmatprep.mubr.f32.mxu0 %v1682
        %2584 = vmatmul.mubr.f32.gmra.mrb[0].mxu0 %v1681
        %v2585 = vpop.f32.mrb[0].mxu0
        %v2586 = vadd.f32 %v2361, %v2585
        %v2587 = vpop.f32.mrb[0].mxu0
        %2588 = vmatprep.mubr.f32.mxu0 %v1691
        %2589 = vmatmul.mubr.f32.gmra.mrb[0].mxu0 %v1690
        %v2590 = vpop.f32.mrb[0].mxu0
        %v2591 = vadd.f32 %v2366, %v2590
        %v2592 = vpop.f32.mrb[0].mxu0
        %2593 = vmatprep.mubr.f32.mxu0 %v1700
        %2594 = vmatmul.mubr.f32.gmra.mrb[0].mxu0 %v1699
        %v2595 = vpop.f32.mrb[0].mxu0
        %v2596 = vadd.f32 %v2371, %v2595
        %v2597 = vpop.f32.mrb[0].mxu0
        %2598 = vmatprep.mubr.f32.mxu0 %v1709
        %2599 = vmatmul.mubr.f32.gmra.mrb[0].mxu0 %v1708
        %v2600 = vpop.f32.mrb[0].mxu0
        %v2601 = vadd.f32 %v2376, %v2600
        %v2602 = vpop.f32.mrb[0].mxu0
        %2603 = vmatprep.mubr.f32.mxu0 %v1718
        %2604 = vmatmul.mubr.f32.gmra.mrb[0].mxu0 %v1717
        %v2605 = vpop.f32.mrb[0].mxu0
        %v2606 = vadd.f32 %v2381, %v2605
        %v2607 = vpop.f32.mrb[0].mxu0
        %2608 = vmatprep.mubr.f32.mxu0 %v1727
        %2609 = vmatmul.mubr.f32.gmra.mrb[0].mxu0 %v1726
        %v2610 = vpop.f32.mrb[0].mxu0
        %v2611 = vadd.f32 %v2386, %v2610
        %v2612 = vpop.f32.mrb[0].mxu0
        %2613 = vmatprep.mubr.f32.mxu0 %v1736
        %2614 = vmatmul.mubr.f32.gmra.mrb[0].mxu0 %v1735
        %v2615 = vpop.f32.mrb[0].mxu0
        %v2616 = vadd.f32 %v2391, %v2615
        %v2617 = vpop.f32.mrb[0].mxu0
        %2618 = vmatprep.mubr.f32.mxu0 %v1745
        %2619 = vmatmul.mubr.f32.gmra.mrb[0].mxu0 %v1744
        %v2620 = vpop.f32.mrb[0].mxu0
        %v2621 = vadd.f32 %v2396, %v2620
        %v2622 = vpop.f32.mrb[0].mxu0
        %2623 = vmatprep.mubr.f32.mxu0 %v1754
        %2624 = vmatmul.mubr.f32.gmra.mrb[0].mxu0 %v1753
        %v2625 = vpop.f32.mrb[0].mxu0
        %v2626 = vadd.f32 %v2401, %v2625
        %v2627 = vpop.f32.mrb[0].mxu0
        %2628 = vmatprep.mubr.f32.mxu0 %v1763
        %2629 = vmatmul.mubr.f32.gmra.mrb[0].mxu0 %v1762
        %v2630 = vpop.f32.mrb[0].mxu0
        %v2631 = vadd.f32 %v2406, %v2630
        %v2632 = vpop.f32.mrb[0].mxu0
        %2633 = vmatprep.mubr.f32.mxu0 %v1772
        %2634 = vmatmul.mubr.f32.gmra.mrb[0].mxu0 %v1771
        %v2635 = vpop.f32.mrb[0].mxu0
        %v2636 = vadd.f32 %v2411, %v2635
        %v2637 = vpop.f32.mrb[0].mxu0
        %2638 = vmatprep.mubr.f32.mxu0 %v1781
        %2639 = vmatmul.mubr.f32.gmra.mrb[0].mxu0 %v1780
        %v2640 = vpop.f32.mrb[0].mxu0
        %v2641 = vadd.f32 %v2416, %v2640
        %v2642 = vpop.f32.mrb[0].mxu0
        %2643 = vmatprep.mubr.f32.mxu0 %v1790
        %2644 = vmatmul.mubr.f32.gmra.mrb[0].mxu0 %v1789
        %v2645 = vpop.f32.mrb[0].mxu0
        %v2646 = vadd.f32 %v2421, %v2645
        %v2647 = vpop.f32.mrb[0].mxu0
        %2648 = vmatprep.mubr.f32.mxu0 %v1799
        %2649 = vmatmul.mubr.f32.gmra.mrb[0].mxu0 %v1798
        %v2650 = vpop.f32.mrb[0].mxu0
        %v2651 = vadd.f32 %v2426, %v2650
        %v2652 = vpop.f32.mrb[0].mxu0
        %2653 = vmatprep.mubr.f32.mxu0 %v1808
        %2654 = vmatmul.mubr.f32.gmra.mrb[0].mxu0 %v1807
        %v2655 = vpop.f32.mrb[0].mxu0
        %v2656 = vadd.f32 %v2431, %v2655
        %v2657 = vpop.f32.mrb[0].mxu0
        %2658 = vmatprep.mubr.f32.mxu0 %v1817
        %2659 = vmatmul.mubr.f32.gmra.mrb[0].mxu0 %v1816
        %v2660 = vpop.f32.mrb[0].mxu0
        %v2661 = vadd.f32 %v2436, %v2660
        %v2662 = vpop.f32.mrb[0].mxu0
        %2663 = vmatprep.mubr.f32.mxu0 %v1826
        %2664 = vmatmul.mubr.f32.gmra.mrb[0].mxu0 %v1825
        %v2665 = vpop.f32.mrb[0].mxu0
        %v2666 = vadd.f32 %v2441, %v2665
        %v2667 = vpop.f32.mrb[0].mxu0
        %2668 = vmatprep.mubr.f32.mxu0 %v1835
        %2669 = vmatmul.mubr.f32.gmra.mrb[0].mxu0 %v1834
        %v2670 = vpop.f32.mrb[0].mxu0
        %v2671 = vadd.f32 %v2446, %v2670
        %v2672 = vpop.f32.mrb[0].mxu0
        %2673 = vmatprep.mubr.f32.mxu0 %v1844
        %2674 = vmatmul.mubr.f32.gmra.mrb[0].mxu0 %v1843
        %v2675 = vpop.f32.mrb[0].mxu0
        %v2676 = vadd.f32 %v2451, %v2675
        %v2677 = vpop.f32.mrb[0].mxu0
        %2678 = vmatprep.mubr.f32.mxu0 %v1853
        %2679 = vmatmul.mubr.f32.gmra.mrb[0].mxu0 %v1852
        %v2680 = vpop.f32.mrb[0].mxu0
        %v2681 = vadd.f32 %v2456, %v2680
        %v2682 = vpop.f32.mrb[0].mxu0
        %2683 = vmatprep.mubr.f32.mxu0 %v1862
        %2684 = vmatmul.mubr.f32.gmra.mrb[0].mxu0 %v1861
        %v2685 = vpop.f32.mrb[0].mxu0
        %v2686 = vadd.f32 %v2461, %v2685
        %v2687 = vpop.f32.mrb[0].mxu0
        %2688 = vmatprep.mubr.f32.mxu0 %v1871
        %2689 = vmatmul.mubr.f32.gmra.mrb[0].mxu0 %v1870
        %v2690 = vpop.f32.mrb[0].mxu0
        %v2691 = vadd.f32 %v2466, %v2690
        %v2692 = vpop.f32.mrb[0].mxu0
        %2693 = vdwg.mxu0
        %2694 = vmatprep.subr.mxu0 0.0
        %2695 = vmatpush1.msra.mxu0 %v1971
        %2696 = vmatprep.subr.mxu0 0.0
        %2697 = vmatpush1.msra.mxu0 %v1972
        %2698 = vmatprep.subr.mxu0 0.0
        %2699 = vmatpush1.msra.mxu0 %v1973
        %2700 = vmatprep.subr.mxu0 0.0
        %2701 = vmatpush1.msra.mxu0 %v1974
        %2702 = vmatprep.subr.mxu0 0.0
        %2703 = vmatpush1.msra.mxu0 %v1975
        %2704 = vmatprep.subr.mxu0 0.0
        %2705 = vmatpush1.msra.mxu0 %v1976
        %2706 = vmatprep.subr.mxu0 0.0
        %2707 = vmatpush1.msra.mxu0 %v1977
        %2708 = vmatprep.subr.mxu0 0.0
        %2709 = vmatpush1.msra.mxu0 %v1978
        %2710 = vmatprep.subr.mxu0 0.0
        %2711 = vmatpush1.msra.mxu0 %v1979
        %2712 = vmatprep.subr.mxu0 0.0
        %2713 = vmatpush1.msra.mxu0 %v1980
        %2714 = vmatprep.subr.mxu0 0.0
        %2715 = vmatpush1.msra.mxu0 %v1981
        %2716 = vmatprep.subr.mxu0 0.0
        %2717 = vmatpush1.msra.mxu0 %v1982
        %2718 = vmatprep.subr.mxu0 0.0
        %2719 = vmatpush1.msra.mxu0 %v1983
        %2720 = vmatprep.subr.mxu0 0.0
        %2721 = vmatpush1.msra.mxu0 %v1984
        %2722 = vmatprep.subr.mxu0 0.0
        %2723 = vmatpush1.msra.mxu0 %v1985
        %2724 = vmatprep.subr.mxu0 0.0
        %2725 = vmatpush1.msra.mxu0 %v1986
        %2726 = vmatprep.subr.mxu0 0.0
        %2727 = vmatpush1.msra.mxu0 %v1987
        %2728 = vmatprep.subr.mxu0 0.0
        %2729 = vmatpush1.msra.mxu0 %v1988
        %2730 = vmatprep.subr.mxu0 0.0
        %2731 = vmatpush1.msra.mxu0 %v1989
        %2732 = vmatprep.subr.mxu0 0.0
        %2733 = vmatpush1.msra.mxu0 %v1990
        %2734 = vmatprep.subr.mxu0 0.0
        %2735 = vmatpush1.msra.mxu0 %v1991
        %2736 = vmatprep.subr.mxu0 0.0
        %2737 = vmatpush1.msra.mxu0 %v1992
        %2738 = vmatprep.subr.mxu0 0.0
        %2739 = vmatpush1.msra.mxu0 %v1993
        %2740 = vmatprep.subr.mxu0 0.0
        %2741 = vmatpush1.msra.mxu0 %v1994
        %2742 = vmatprep.subr.mxu0 0.0
        %2743 = vmatpush1.msra.mxu0 %v1995
        %2744 = vmatprep.subr.mxu0 0.0
        %2745 = vmatpush1.msra.mxu0 %v1996
        %2746 = vmatprep.subr.mxu0 0.0
        %2747 = vmatpush1.msra.mxu0 %v1997
        %2748 = vmatprep.subr.mxu0 0.0
        %2749 = vmatpush1.msra.mxu0 %v1998
        %2750 = vmatprep.subr.mxu0 0.0
        %2751 = vmatpush1.msra.mxu0 %v1999
        %2752 = vmatprep.subr.mxu0 0.0
        %2753 = vmatpush1.msra.mxu0 %v2000
        %2754 = vmatprep.subr.mxu0 0.0
        %2755 = vmatpush1.msra.mxu0 %v2001
        %2756 = vmatprep.subr.mxu0 0.0
        %2757 = vmatpush1.msra.mxu0 %v2002
        %2758 = vmatprep.mubr.f32.mxu0 %v1594
        %2759 = vmatmul.mubr.f32.gmra.mrb[0].mxu0 %v1593
        %v2760 = vpop.f32.mrb[0].mxu0
        %v2761 = vadd.f32 %v2536, %v2760
        %v2762 = vpop.f32.mrb[0].mxu0
        %2763 = vmatprep.mubr.f32.mxu0 %v1603
        %2764 = vmatmul.mubr.f32.gmra.mrb[0].mxu0 %v1602
        %v2765 = vpop.f32.mrb[0].mxu0
        %v2766 = vadd.f32 %v2541, %v2765
        %v2767 = vpop.f32.mrb[0].mxu0
        %2768 = vmatprep.mubr.f32.mxu0 %v1612
        %2769 = vmatmul.mubr.f32.gmra.mrb[0].mxu0 %v1611
        %v2770 = vpop.f32.mrb[0].mxu0
        %v2771 = vadd.f32 %v2546, %v2770
        %v2772 = vpop.f32.mrb[0].mxu0
        %2773 = vmatprep.mubr.f32.mxu0 %v1621
        %2774 = vmatmul.mubr.f32.gmra.mrb[0].mxu0 %v1620
        %v2775 = vpop.f32.mrb[0].mxu0
        %v2776 = vadd.f32 %v2551, %v2775
        %v2777 = vpop.f32.mrb[0].mxu0
        %2778 = vmatprep.mubr.f32.mxu0 %v1630
        %2779 = vmatmul.mubr.f32.gmra.mrb[0].mxu0 %v1629
        %v2780 = vpop.f32.mrb[0].mxu0
        %v2781 = vadd.f32 %v2556, %v2780
        %v2782 = vpop.f32.mrb[0].mxu0
        %2783 = vmatprep.mubr.f32.mxu0 %v1639
        %2784 = vmatmul.mubr.f32.gmra.mrb[0].mxu0 %v1638
        %v2785 = vpop.f32.mrb[0].mxu0
        %v2786 = vadd.f32 %v2561, %v2785
        %v2787 = vpop.f32.mrb[0].mxu0
        %2788 = vmatprep.mubr.f32.mxu0 %v1648
        %2789 = vmatmul.mubr.f32.gmra.mrb[0].mxu0 %v1647
        %v2790 = vpop.f32.mrb[0].mxu0
        %v2791 = vadd.f32 %v2566, %v2790
        %v2792 = vpop.f32.mrb[0].mxu0
        %2793 = vmatprep.mubr.f32.mxu0 %v1657
        %2794 = vmatmul.mubr.f32.gmra.mrb[0].mxu0 %v1656
        %v2795 = vpop.f32.mrb[0].mxu0
        %v2796 = vadd.f32 %v2571, %v2795
        %v2797 = vpop.f32.mrb[0].mxu0
        %2798 = vmatprep.mubr.f32.mxu0 %v1666
        %2799 = vmatmul.mubr.f32.gmra.mrb[0].mxu0 %v1665
        %v2800 = vpop.f32.mrb[0].mxu0
        %v2801 = vadd.f32 %v2576, %v2800
        %v2802 = vpop.f32.mrb[0].mxu0
        %2803 = vmatprep.mubr.f32.mxu0 %v1675
        %2804 = vmatmul.mubr.f32.gmra.mrb[0].mxu0 %v1674
        %v2805 = vpop.f32.mrb[0].mxu0
        %v2806 = vadd.f32 %v2581, %v2805
        %v2807 = vpop.f32.mrb[0].mxu0
        %2808 = vmatprep.mubr.f32.mxu0 %v1684
        %2809 = vmatmul.mubr.f32.gmra.mrb[0].mxu0 %v1683
        %v2810 = vpop.f32.mrb[0].mxu0
        %v2811 = vadd.f32 %v2586, %v2810
        %v2812 = vpop.f32.mrb[0].mxu0
        %2813 = vmatprep.mubr.f32.mxu0 %v1693
        %2814 = vmatmul.mubr.f32.gmra.mrb[0].mxu0 %v1692
        %v2815 = vpop.f32.mrb[0].mxu0
        %v2816 = vadd.f32 %v2591, %v2815
        %v2817 = vpop.f32.mrb[0].mxu0
        %2818 = vmatprep.mubr.f32.mxu0 %v1702
        %2819 = vmatmul.mubr.f32.gmra.mrb[0].mxu0 %v1701
        %v2820 = vpop.f32.mrb[0].mxu0
        %v2821 = vadd.f32 %v2596, %v2820
        %v2822 = vpop.f32.mrb[0].mxu0
        %2823 = vmatprep.mubr.f32.mxu0 %v1711
        %2824 = vmatmul.mubr.f32.gmra.mrb[0].mxu0 %v1710
        %v2825 = vpop.f32.mrb[0].mxu0
        %v2826 = vadd.f32 %v2601, %v2825
        %v2827 = vpop.f32.mrb[0].mxu0
        %2828 = vmatprep.mubr.f32.mxu0 %v1720
        %2829 = vmatmul.mubr.f32.gmra.mrb[0].mxu0 %v1719
        %v2830 = vpop.f32.mrb[0].mxu0
        %v2831 = vadd.f32 %v2606, %v2830
        %v2832 = vpop.f32.mrb[0].mxu0
        %2833 = vmatprep.mubr.f32.mxu0 %v1729
        %2834 = vmatmul.mubr.f32.gmra.mrb[0].mxu0 %v1728
        %v2835 = vpop.f32.mrb[0].mxu0
        %v2836 = vadd.f32 %v2611, %v2835
        %v2837 = vpop.f32.mrb[0].mxu0
        %2838 = vmatprep.mubr.f32.mxu0 %v1738
        %2839 = vmatmul.mubr.f32.gmra.mrb[0].mxu0 %v1737
        %v2840 = vpop.f32.mrb[0].mxu0
        %v2841 = vadd.f32 %v2616, %v2840
        %v2842 = vpop.f32.mrb[0].mxu0
        %2843 = vmatprep.mubr.f32.mxu0 %v1747
        %2844 = vmatmul.mubr.f32.gmra.mrb[0].mxu0 %v1746
        %v2845 = vpop.f32.mrb[0].mxu0
        %v2846 = vadd.f32 %v2621, %v2845
        %v2847 = vpop.f32.mrb[0].mxu0
        %2848 = vmatprep.mubr.f32.mxu0 %v1756
        %2849 = vmatmul.mubr.f32.gmra.mrb[0].mxu0 %v1755
        %v2850 = vpop.f32.mrb[0].mxu0
        %v2851 = vadd.f32 %v2626, %v2850
        %v2852 = vpop.f32.mrb[0].mxu0
        %2853 = vmatprep.mubr.f32.mxu0 %v1765
        %2854 = vmatmul.mubr.f32.gmra.mrb[0].mxu0 %v1764
        %v2855 = vpop.f32.mrb[0].mxu0
        %v2856 = vadd.f32 %v2631, %v2855
        %v2857 = vpop.f32.mrb[0].mxu0
        %2858 = vmatprep.mubr.f32.mxu0 %v1774
        %2859 = vmatmul.mubr.f32.gmra.mrb[0].mxu0 %v1773
        %v2860 = vpop.f32.mrb[0].mxu0
        %v2861 = vadd.f32 %v2636, %v2860
        %v2862 = vpop.f32.mrb[0].mxu0
        %2863 = vmatprep.mubr.f32.mxu0 %v1783
        %2864 = vmatmul.mubr.f32.gmra.mrb[0].mxu0 %v1782
        %v2865 = vpop.f32.mrb[0].mxu0
        %v2866 = vadd.f32 %v2641, %v2865
        %v2867 = vpop.f32.mrb[0].mxu0
        %2868 = vmatprep.mubr.f32.mxu0 %v1792
        %2869 = vmatmul.mubr.f32.gmra.mrb[0].mxu0 %v1791
        %v2870 = vpop.f32.mrb[0].mxu0
        %v2871 = vadd.f32 %v2646, %v2870
        %v2872 = vpop.f32.mrb[0].mxu0
        %2873 = vmatprep.mubr.f32.mxu0 %v1801
        %2874 = vmatmul.mubr.f32.gmra.mrb[0].mxu0 %v1800
        %v2875 = vpop.f32.mrb[0].mxu0
        %v2876 = vadd.f32 %v2651, %v2875
        %v2877 = vpop.f32.mrb[0].mxu0
        %2878 = vmatprep.mubr.f32.mxu0 %v1810
        %2879 = vmatmul.mubr.f32.gmra.mrb[0].mxu0 %v1809
        %v2880 = vpop.f32.mrb[0].mxu0
        %v2881 = vadd.f32 %v2656, %v2880
        %v2882 = vpop.f32.mrb[0].mxu0
        %2883 = vmatprep.mubr.f32.mxu0 %v1819
        %2884 = vmatmul.mubr.f32.gmra.mrb[0].mxu0 %v1818
        %v2885 = vpop.f32.mrb[0].mxu0
        %v2886 = vadd.f32 %v2661, %v2885
        %v2887 = vpop.f32.mrb[0].mxu0
        %2888 = vmatprep.mubr.f32.mxu0 %v1828
        %2889 = vmatmul.mubr.f32.gmra.mrb[0].mxu0 %v1827
        %v2890 = vpop.f32.mrb[0].mxu0
        %v2891 = vadd.f32 %v2666, %v2890
        %v2892 = vpop.f32.mrb[0].mxu0
        %2893 = vmatprep.mubr.f32.mxu0 %v1837
        %2894 = vmatmul.mubr.f32.gmra.mrb[0].mxu0 %v1836
        %v2895 = vpop.f32.mrb[0].mxu0
        %v2896 = vadd.f32 %v2671, %v2895
        %v2897 = vpop.f32.mrb[0].mxu0
        %2898 = vmatprep.mubr.f32.mxu0 %v1846
        %2899 = vmatmul.mubr.f32.gmra.mrb[0].mxu0 %v1845
        %v2900 = vpop.f32.mrb[0].mxu0
        %v2901 = vadd.f32 %v2676, %v2900
        %v2902 = vpop.f32.mrb[0].mxu0
        %2903 = vmatprep.mubr.f32.mxu0 %v1855
        %2904 = vmatmul.mubr.f32.gmra.mrb[0].mxu0 %v1854
        %v2905 = vpop.f32.mrb[0].mxu0
        %v2906 = vadd.f32 %v2681, %v2905
        %v2907 = vpop.f32.mrb[0].mxu0
        %2908 = vmatprep.mubr.f32.mxu0 %v1864
        %2909 = vmatmul.mubr.f32.gmra.mrb[0].mxu0 %v1863
        %v2910 = vpop.f32.mrb[0].mxu0
        %v2911 = vadd.f32 %v2686, %v2910
        %v2912 = vpop.f32.mrb[0].mxu0
        %2913 = vmatprep.mubr.f32.mxu0 %v1873
        %2914 = vmatmul.mubr.f32.gmra.mrb[0].mxu0 %v1872
        %v2915 = vpop.f32.mrb[0].mxu0
        %v2916 = vadd.f32 %v2691, %v2915
        %v2917 = vpop.f32.mrb[0].mxu0
        %2918 = vdwg.mxu0
        %2919 = vmatprep.subr.mxu0 0.0
        %2920 = vmatpush1.msra.mxu0 %v2003
        %2921 = vmatprep.subr.mxu0 0.0
        %2922 = vmatpush1.msra.mxu0 %v2004
        %2923 = vmatprep.subr.mxu0 0.0
        %2924 = vmatpush1.msra.mxu0 %v2005
        %2925 = vmatprep.subr.mxu0 0.0
        %2926 = vmatpush1.msra.mxu0 %v2006
        %2927 = vmatprep.subr.mxu0 0.0
        %2928 = vmatpush1.msra.mxu0 %v2007
        %2929 = vmatprep.subr.mxu0 0.0
        %2930 = vmatpush1.msra.mxu0 %v2008
        %2931 = vmatprep.subr.mxu0 0.0
        %2932 = vmatpush1.msra.mxu0 %v2009
        %2933 = vmatprep.subr.mxu0 0.0
        %2934 = vmatpush1.msra.mxu0 %v2010
        %2935 = vmatprep.subr.mxu0 0.0
        %2936 = vmatpush1.msra.mxu0 %v2011
        %2937 = vmatprep.subr.mxu0 0.0
        %2938 = vmatpush1.msra.mxu0 %v2012
        %2939 = vmatprep.subr.mxu0 0.0
        %2940 = vmatpush1.msra.mxu0 %v2013
        %2941 = vmatprep.subr.mxu0 0.0
        %2942 = vmatpush1.msra.mxu0 %v2014
        %2943 = vmatprep.subr.mxu0 0.0
        %2944 = vmatpush1.msra.mxu0 %v2015
        %2945 = vmatprep.subr.mxu0 0.0
        %2946 = vmatpush1.msra.mxu0 %v2016
        %2947 = vmatprep.subr.mxu0 0.0
        %2948 = vmatpush1.msra.mxu0 %v2017
        %2949 = vmatprep.subr.mxu0 0.0
        %2950 = vmatpush1.msra.mxu0 %v2018
        %2951 = vmatprep.subr.mxu0 0.0
        %2952 = vmatpush1.msra.mxu0 0.0
        %2953 = vmatprep.subr.mxu0 0.0
        %2954 = vmatpush1.msra.mxu0 0.0
        %2955 = vmatprep.subr.mxu0 0.0
        %2956 = vmatpush1.msra.mxu0 0.0
        %2957 = vmatprep.subr.mxu0 0.0
        %2958 = vmatpush1.msra.mxu0 0.0
        %2959 = vmatprep.subr.mxu0 0.0
        %2960 = vmatpush1.msra.mxu0 0.0
        %2961 = vmatprep.subr.mxu0 0.0
        %2962 = vmatpush1.msra.mxu0 0.0
        %2963 = vmatprep.subr.mxu0 0.0
        %2964 = vmatpush1.msra.mxu0 0.0
        %2965 = vmatprep.subr.mxu0 0.0
        %2966 = vmatpush1.msra.mxu0 0.0
        %2967 = vmatprep.subr.mxu0 0.0
        %2968 = vmatpush1.msra.mxu0 0.0
        %2969 = vmatprep.subr.mxu0 0.0
        %2970 = vmatpush1.msra.mxu0 0.0
        %2971 = vmatprep.subr.mxu0 0.0
        %2972 = vmatpush1.msra.mxu0 0.0
        %2973 = vmatprep.subr.mxu0 0.0
        %2974 = vmatpush1.msra.mxu0 0.0
        %2975 = vmatprep.subr.mxu0 0.0
        %2976 = vmatpush1.msra.mxu0 0.0
        %2977 = vmatprep.subr.mxu0 0.0
        %2978 = vmatpush1.msra.mxu0 0.0
        %2979 = vmatprep.subr.mxu0 0.0
        %2980 = vmatpush1.msra.mxu0 0.0
        %2981 = vmatprep.subr.mxu0 0.0
        %2982 = vmatpush1.msra.mxu0 0.0
        %2983 = vmatprep.mubr.f32.mxu0 0.0
        %2984 = vmatmul.mubr.f32.gmra.mrb[0].mxu0 %v1595
        %v2985 = vpop.f32.mrb[0].mxu0
        %v2986 = vadd.f32 %v2761, %v2985
        %v2987 = vpop.f32.mrb[0].mxu0
        %2988 = vmatprep.mubr.f32.mxu0 0.0
        %2989 = vmatmul.mubr.f32.gmra.mrb[0].mxu0 %v1604
        %v2990 = vpop.f32.mrb[0].mxu0
        %v2991 = vadd.f32 %v2766, %v2990
        %v2992 = vpop.f32.mrb[0].mxu0
        %2993 = vmatprep.mubr.f32.mxu0 0.0
        %2994 = vmatmul.mubr.f32.gmra.mrb[0].mxu0 %v1613
        %v2995 = vpop.f32.mrb[0].mxu0
        %v2996 = vadd.f32 %v2771, %v2995
        %v2997 = vpop.f32.mrb[0].mxu0
        %2998 = vmatprep.mubr.f32.mxu0 0.0
        %2999 = vmatmul.mubr.f32.gmra.mrb[0].mxu0 %v1622
        %v3000 = vpop.f32.mrb[0].mxu0
        %v3001 = vadd.f32 %v2776, %v3000
        %v3002 = vpop.f32.mrb[0].mxu0
        %3003 = vmatprep.mubr.f32.mxu0 0.0
        %3004 = vmatmul.mubr.f32.gmra.mrb[0].mxu0 %v1631
        %v3005 = vpop.f32.mrb[0].mxu0
        %v3006 = vadd.f32 %v2781, %v3005
        %v3007 = vpop.f32.mrb[0].mxu0
        %3008 = vmatprep.mubr.f32.mxu0 0.0
        %3009 = vmatmul.mubr.f32.gmra.mrb[0].mxu0 %v1640
        %v3010 = vpop.f32.mrb[0].mxu0
        %v3011 = vadd.f32 %v2786, %v3010
        %v3012 = vpop.f32.mrb[0].mxu0
        %3013 = vmatprep.mubr.f32.mxu0 0.0
        %3014 = vmatmul.mubr.f32.gmra.mrb[0].mxu0 %v1649
        %v3015 = vpop.f32.mrb[0].mxu0
        %v3016 = vadd.f32 %v2791, %v3015
        %v3017 = vpop.f32.mrb[0].mxu0
        %3018 = vmatprep.mubr.f32.mxu0 0.0
        %3019 = vmatmul.mubr.f32.gmra.mrb[0].mxu0 %v1658
        %v3020 = vpop.f32.mrb[0].mxu0
        %v3021 = vadd.f32 %v2796, %v3020
        %v3022 = vpop.f32.mrb[0].mxu0
        %3023 = vmatprep.mubr.f32.mxu0 0.0
        %3024 = vmatmul.mubr.f32.gmra.mrb[0].mxu0 %v1667
        %v3025 = vpop.f32.mrb[0].mxu0
        %v3026 = vadd.f32 %v2801, %v3025
        %v3027 = vpop.f32.mrb[0].mxu0
        %3028 = vmatprep.mubr.f32.mxu0 0.0
        %3029 = vmatmul.mubr.f32.gmra.mrb[0].mxu0 %v1676
        %v3030 = vpop.f32.mrb[0].mxu0
        %v3031 = vadd.f32 %v2806, %v3030
        %v3032 = vpop.f32.mrb[0].mxu0
        %3033 = vmatprep.mubr.f32.mxu0 0.0
        %3034 = vmatmul.mubr.f32.gmra.mrb[0].mxu0 %v1685
        %v3035 = vpop.f32.mrb[0].mxu0
        %v3036 = vadd.f32 %v2811, %v3035
        %v3037 = vpop.f32.mrb[0].mxu0
        %3038 = vmatprep.mubr.f32.mxu0 0.0
        %3039 = vmatmul.mubr.f32.gmra.mrb[0].mxu0 %v1694
        %v3040 = vpop.f32.mrb[0].mxu0
        %v3041 = vadd.f32 %v2816, %v3040
        %v3042 = vpop.f32.mrb[0].mxu0
        %3043 = vmatprep.mubr.f32.mxu0 0.0
        %3044 = vmatmul.mubr.f32.gmra.mrb[0].mxu0 %v1703
        %v3045 = vpop.f32.mrb[0].mxu0
        %v3046 = vadd.f32 %v2821, %v3045
        %v3047 = vpop.f32.mrb[0].mxu0
        %3048 = vmatprep.mubr.f32.mxu0 0.0
        %3049 = vmatmul.mubr.f32.gmra.mrb[0].mxu0 %v1712
        %v3050 = vpop.f32.mrb[0].mxu0
        %v3051 = vadd.f32 %v2826, %v3050
        %v3052 = vpop.f32.mrb[0].mxu0
        %3053 = vmatprep.mubr.f32.mxu0 0.0
        %3054 = vmatmul.mubr.f32.gmra.mrb[0].mxu0 %v1721
        %v3055 = vpop.f32.mrb[0].mxu0
        %v3056 = vadd.f32 %v2831, %v3055
        %v3057 = vpop.f32.mrb[0].mxu0
        %3058 = vmatprep.mubr.f32.mxu0 0.0
        %3059 = vmatmul.mubr.f32.gmra.mrb[0].mxu0 %v1730
        %v3060 = vpop.f32.mrb[0].mxu0
        %v3061 = vadd.f32 %v2836, %v3060
        %v3062 = vpop.f32.mrb[0].mxu0
        %3063 = vmatprep.mubr.f32.mxu0 0.0
        %3064 = vmatmul.mubr.f32.gmra.mrb[0].mxu0 %v1739
        %v3065 = vpop.f32.mrb[0].mxu0
        %v3066 = vadd.f32 %v2841, %v3065
        %v3067 = vpop.f32.mrb[0].mxu0
        %3068 = vmatprep.mubr.f32.mxu0 0.0
        %3069 = vmatmul.mubr.f32.gmra.mrb[0].mxu0 %v1748
        %v3070 = vpop.f32.mrb[0].mxu0
        %v3071 = vadd.f32 %v2846, %v3070
        %v3072 = vpop.f32.mrb[0].mxu0
        %3073 = vmatprep.mubr.f32.mxu0 0.0
        %3074 = vmatmul.mubr.f32.gmra.mrb[0].mxu0 %v1757
        %v3075 = vpop.f32.mrb[0].mxu0
        %v3076 = vadd.f32 %v2851, %v3075
        %v3077 = vpop.f32.mrb[0].mxu0
        %3078 = vmatprep.mubr.f32.mxu0 0.0
        %3079 = vmatmul.mubr.f32.gmra.mrb[0].mxu0 %v1766
        %v3080 = vpop.f32.mrb[0].mxu0
        %v3081 = vadd.f32 %v2856, %v3080
        %v3082 = vpop.f32.mrb[0].mxu0
        %3083 = vmatprep.mubr.f32.mxu0 0.0
        %3084 = vmatmul.mubr.f32.gmra.mrb[0].mxu0 %v1775
        %v3085 = vpop.f32.mrb[0].mxu0
        %v3086 = vadd.f32 %v2861, %v3085
        %v3087 = vpop.f32.mrb[0].mxu0
        %3088 = vmatprep.mubr.f32.mxu0 0.0
        %3089 = vmatmul.mubr.f32.gmra.mrb[0].mxu0 %v1784
        %v3090 = vpop.f32.mrb[0].mxu0
        %v3091 = vadd.f32 %v2866, %v3090
        %v3092 = vpop.f32.mrb[0].mxu0
        %3093 = vmatprep.mubr.f32.mxu0 0.0
        %3094 = vmatmul.mubr.f32.gmra.mrb[0].mxu0 %v1793
        %v3095 = vpop.f32.mrb[0].mxu0
        %v3096 = vadd.f32 %v2871, %v3095
        %v3097 = vpop.f32.mrb[0].mxu0
        %3098 = vmatprep.mubr.f32.mxu0 0.0
        %3099 = vmatmul.mubr.f32.gmra.mrb[0].mxu0 %v1802
        %v3100 = vpop.f32.mrb[0].mxu0
        %v3101 = vadd.f32 %v2876, %v3100
        %v3102 = vpop.f32.mrb[0].mxu0
        %3103 = vmatprep.mubr.f32.mxu0 0.0
        %3104 = vmatmul.mubr.f32.gmra.mrb[0].mxu0 %v1811
        %v3105 = vpop.f32.mrb[0].mxu0
        %v3106 = vadd.f32 %v2881, %v3105
        %v3107 = vpop.f32.mrb[0].mxu0
        %3108 = vmatprep.mubr.f32.mxu0 0.0
        %3109 = vmatmul.mubr.f32.gmra.mrb[0].mxu0 %v1820
        %v3110 = vpop.f32.mrb[0].mxu0
        %v3111 = vadd.f32 %v2886, %v3110
        %v3112 = vpop.f32.mrb[0].mxu0
        %3113 = vmatprep.mubr.f32.mxu0 0.0
        %3114 = vmatmul.mubr.f32.gmra.mrb[0].mxu0 %v1829
        %v3115 = vpop.f32.mrb[0].mxu0
        %v3116 = vadd.f32 %v2891, %v3115
        %v3117 = vpop.f32.mrb[0].mxu0
        %3118 = vmatprep.mubr.f32.mxu0 0.0
        %3119 = vmatmul.mubr.f32.gmra.mrb[0].mxu0 %v1838
        %v3120 = vpop.f32.mrb[0].mxu0
        %v3121 = vadd.f32 %v2896, %v3120
        %v3122 = vpop.f32.mrb[0].mxu0
        %3123 = vmatprep.mubr.f32.mxu0 0.0
        %3124 = vmatmul.mubr.f32.gmra.mrb[0].mxu0 %v1847
        %v3125 = vpop.f32.mrb[0].mxu0
        %v3126 = vadd.f32 %v2901, %v3125
        %v3127 = vpop.f32.mrb[0].mxu0
        %3128 = vmatprep.mubr.f32.mxu0 0.0
        %3129 = vmatmul.mubr.f32.gmra.mrb[0].mxu0 %v1856
        %v3130 = vpop.f32.mrb[0].mxu0
        %v3131 = vadd.f32 %v2906, %v3130
        %v3132 = vpop.f32.mrb[0].mxu0
        %3133 = vmatprep.mubr.f32.mxu0 0.0
        %3134 = vmatmul.mubr.f32.gmra.mrb[0].mxu0 %v1865
        %v3135 = vpop.f32.mrb[0].mxu0
        %v3136 = vadd.f32 %v2911, %v3135
        %v3137 = vpop.f32.mrb[0].mxu0
        %3138 = vmatprep.mubr.f32.mxu0 0.0
        %3139 = vmatmul.mubr.f32.gmra.mrb[0].mxu0 %v1874
        %v3140 = vpop.f32.mrb[0].mxu0
        %v3141 = vadd.f32 %v2916, %v3140
        %v3142 = vpop.f32.mrb[0].mxu0
        %3143 = vdwg.mxu0
        %v3144 = vld [vmem:[%s7] sm:$0x1]
        %v3146 = vlaneseq
        %v3147 = vshrl.u32 %v3146, 7
        %v3148 = vsub.s32 0, %v3147
        %v3149 = vrot.slane %v3144, %v3148
        %v3151 = vmul.f32 %v2986, %v3149
        %v3152 = vmul.f32 %v2991, %v3149
        %v3153 = vmul.f32 %v2996, %v3149
        %v3154 = vmul.f32 %v3001, %v3149
        %v3155 = vmul.f32 %v3006, %v3149
        %v3156 = vmul.f32 %v3011, %v3149
        %v3157 = vmul.f32 %v3016, %v3149
        %v3158 = vmul.f32 %v3021, %v3149
        %v3159 = vmul.f32 %v3026, %v3149
        %v3160 = vmul.f32 %v3031, %v3149
        %v3161 = vmul.f32 %v3036, %v3149
        %v3162 = vmul.f32 %v3041, %v3149
        %v3163 = vmul.f32 %v3046, %v3149
        %v3164 = vmul.f32 %v3051, %v3149
        %v3165 = vmul.f32 %v3056, %v3149
        %v3166 = vmul.f32 %v3061, %v3149
        %v3167 = vmul.f32 %v3066, %v3149
        %v3168 = vmul.f32 %v3071, %v3149
        %v3169 = vmul.f32 %v3076, %v3149
        %v3170 = vmul.f32 %v3081, %v3149
        %v3171 = vmul.f32 %v3086, %v3149
        %v3172 = vmul.f32 %v3091, %v3149
        %v3173 = vmul.f32 %v3096, %v3149
        %v3174 = vmul.f32 %v3101, %v3149
        %v3175 = vmul.f32 %v3106, %v3149
        %v3176 = vmul.f32 %v3111, %v3149
        %v3177 = vmul.f32 %v3116, %v3149
        %v3178 = vmul.f32 %v3121, %v3149
        %v3179 = vmul.f32 %v3126, %v3149
        %v3180 = vmul.f32 %v3131, %v3149
        %v3181 = vmul.f32 %v3136, %v3149
        %v3182 = vmul.f32 %v3141, %v3149
        %v3183 = vld [vmem:[%s8] sm:$0x1]
        %v3185 = vlaneseq
        %v3186 = vshrl.u32 %v3185, 7
        %v3187 = vsub.s32 0, %v3186
        %v3188 = vrot.slane %v3183, %v3187
        %v3190 = vadd.f32 %v3151, %v3188
        %v3191 = vadd.f32 %v3152, %v3188
        %v3192 = vadd.f32 %v3153, %v3188
        %v3193 = vadd.f32 %v3154, %v3188
        %v3194 = vadd.f32 %v3155, %v3188
        %v3195 = vadd.f32 %v3156, %v3188
        %v3196 = vadd.f32 %v3157, %v3188
        %v3197 = vadd.f32 %v3158, %v3188
        %v3198 = vadd.f32 %v3159, %v3188
        %v3199 = vadd.f32 %v3160, %v3188
        %v3200 = vadd.f32 %v3161, %v3188
        %v3201 = vadd.f32 %v3162, %v3188
        %v3202 = vadd.f32 %v3163, %v3188
        %v3203 = vadd.f32 %v3164, %v3188
        %v3204 = vadd.f32 %v3165, %v3188
        %v3205 = vadd.f32 %v3166, %v3188
        %v3206 = vadd.f32 %v3167, %v3188
        %v3207 = vadd.f32 %v3168, %v3188
        %v3208 = vadd.f32 %v3169, %v3188
        %v3209 = vadd.f32 %v3170, %v3188
        %v3210 = vadd.f32 %v3171, %v3188
        %v3211 = vadd.f32 %v3172, %v3188
        %v3212 = vadd.f32 %v3173, %v3188
        %v3213 = vadd.f32 %v3174, %v3188
        %v3214 = vadd.f32 %v3175, %v3188
        %v3215 = vadd.f32 %v3176, %v3188
        %v3216 = vadd.f32 %v3177, %v3188
        %v3217 = vadd.f32 %v3178, %v3188
        %v3218 = vadd.f32 %v3179, %v3188
        %v3219 = vadd.f32 %v3180, %v3188
        %v3220 = vadd.f32 %v3181, %v3188
        %v3221 = vadd.f32 %v3182, %v3188
        %v3222 = vmax.f32 %v3190, 0.0
        %v3223 = vmax.f32 %v3191, 0.0
        %v3224 = vmax.f32 %v3192, 0.0
        %v3225 = vmax.f32 %v3193, 0.0
        %v3226 = vmax.f32 %v3194, 0.0
        %v3227 = vmax.f32 %v3195, 0.0
        %v3228 = vmax.f32 %v3196, 0.0
        %v3229 = vmax.f32 %v3197, 0.0
        %v3230 = vmax.f32 %v3198, 0.0
        %v3231 = vmax.f32 %v3199, 0.0
        %v3232 = vmax.f32 %v3200, 0.0
        %v3233 = vmax.f32 %v3201, 0.0
        %v3234 = vmax.f32 %v3202, 0.0
        %v3235 = vmax.f32 %v3203, 0.0
        %v3236 = vmax.f32 %v3204, 0.0
        %v3237 = vmax.f32 %v3205, 0.0
        %v3238 = vmax.f32 %v3206, 0.0
        %v3239 = vmax.f32 %v3207, 0.0
        %v3240 = vmax.f32 %v3208, 0.0
        %v3241 = vmax.f32 %v3209, 0.0
        %v3242 = vmax.f32 %v3210, 0.0
        %v3243 = vmax.f32 %v3211, 0.0
        %v3244 = vmax.f32 %v3212, 0.0
        %v3245 = vmax.f32 %v3213, 0.0
        %v3246 = vmax.f32 %v3214, 0.0
        %v3247 = vmax.f32 %v3215, 0.0
        %v3248 = vmax.f32 %v3216, 0.0
        %v3249 = vmax.f32 %v3217, 0.0
        %v3250 = vmax.f32 %v3218, 0.0
        %v3251 = vmax.f32 %v3219, 0.0
        %v3252 = vmax.f32 %v3220, 0.0
        %v3253 = vmax.f32 %v3221, 0.0
        %v3254 = vld [vmem:[%s3] sm:$0xff]
        %v3255 = vld [vmem:[%s3 + $0x8] sm:$0xff]
        %v3256 = vld [vmem:[%s3 + $0x10] sm:$0xff]
        %v3257 = vld [vmem:[%s3 + $0x18] sm:$0xff]
        %v3258 = vld [vmem:[%s3 + $0x20] sm:$0xff]
        %v3259 = vld [vmem:[%s3 + $0x28] sm:$0xff]
        %v3260 = vld [vmem:[%s3 + $0x30] sm:$0xff]
        %v3261 = vld [vmem:[%s3 + $0x38] sm:$0xff]
        %v3262 = vld [vmem:[%s3 + $0x40] sm:$0xff]
        %v3263 = vld [vmem:[%s3 + $0x48] sm:$0xff]
        %v3264 = vld [vmem:[%s3 + $0x50] sm:$0xff]
        %v3265 = vld [vmem:[%s3 + $0x58] sm:$0xff]
        %v3266 = vld [vmem:[%s3 + $0x60] sm:$0xff]
        %v3267 = vld [vmem:[%s3 + $0x68] sm:$0xff]
        %v3268 = vld [vmem:[%s3 + $0x70] sm:$0xff]
        %v3269 = vld [vmem:[%s3 + $0x78] sm:$0xff]
        %3270 = vmatprep.subr.mxu0 0.0
        %3271 = vmatpush1.msra.mxu0 %v3254
        %3272 = vmatprep.subr.mxu0 0.0
        %3273 = vmatpush1.msra.mxu0 %v3255
        %3274 = vmatprep.subr.mxu0 0.0
        %3275 = vmatpush1.msra.mxu0 %v3256
        %3276 = vmatprep.subr.mxu0 0.0
        %3277 = vmatpush1.msra.mxu0 %v3257
        %3278 = vmatprep.subr.mxu0 0.0
        %3279 = vmatpush1.msra.mxu0 %v3258
        %3280 = vmatprep.subr.mxu0 0.0
        %3281 = vmatpush1.msra.mxu0 %v3259
        %3282 = vmatprep.subr.mxu0 0.0
        %3283 = vmatpush1.msra.mxu0 %v3260
        %3284 = vmatprep.subr.mxu0 0.0
        %3285 = vmatpush1.msra.mxu0 %v3261
        %3286 = vmatprep.subr.mxu0 0.0
        %3287 = vmatpush1.msra.mxu0 %v3262
        %3288 = vmatprep.subr.mxu0 0.0
        %3289 = vmatpush1.msra.mxu0 %v3263
        %3290 = vmatprep.subr.mxu0 0.0
        %3291 = vmatpush1.msra.mxu0 %v3264
        %3292 = vmatprep.subr.mxu0 0.0
        %3293 = vmatpush1.msra.mxu0 %v3265
        %3294 = vmatprep.subr.mxu0 0.0
        %3295 = vmatpush1.msra.mxu0 %v3266
        %3296 = vmatprep.subr.mxu0 0.0
        %3297 = vmatpush1.msra.mxu0 %v3267
        %3298 = vmatprep.subr.mxu0 0.0
        %3299 = vmatpush1.msra.mxu0 %v3268
        %3300 = vmatprep.subr.mxu0 0.0
        %3301 = vmatpush1.msra.mxu0 %v3269
        %3302 = vmatprep.subr.mxu0 0.0
        %3303 = vmatpush1.msra.mxu0 0.0
        %3304 = vmatprep.subr.mxu0 0.0
        %3305 = vmatpush1.msra.mxu0 0.0
        %3306 = vmatprep.subr.mxu0 0.0
        %3307 = vmatpush1.msra.mxu0 0.0
        %3308 = vmatprep.subr.mxu0 0.0
        %3309 = vmatpush1.msra.mxu0 0.0
        %3310 = vmatprep.subr.mxu0 0.0
        %3311 = vmatpush1.msra.mxu0 0.0
        %3312 = vmatprep.subr.mxu0 0.0
        %3313 = vmatpush1.msra.mxu0 0.0
        %3314 = vmatprep.subr.mxu0 0.0
        %3315 = vmatpush1.msra.mxu0 0.0
        %3316 = vmatprep.subr.mxu0 0.0
        %3317 = vmatpush1.msra.mxu0 0.0
        %3318 = vmatprep.subr.mxu0 0.0
        %3319 = vmatpush1.msra.mxu0 0.0
        %3320 = vmatprep.subr.mxu0 0.0
        %3321 = vmatpush1.msra.mxu0 0.0
        %3322 = vmatprep.subr.mxu0 0.0
        %3323 = vmatpush1.msra.mxu0 0.0
        %3324 = vmatprep.subr.mxu0 0.0
        %3325 = vmatpush1.msra.mxu0 0.0
        %3326 = vmatprep.subr.mxu0 0.0
        %3327 = vmatpush1.msra.mxu0 0.0
        %3328 = vmatprep.subr.mxu0 0.0
        %3329 = vmatpush1.msra.mxu0 0.0
        %3330 = vmatprep.subr.mxu0 0.0
        %3331 = vmatpush1.msra.mxu0 0.0
        %3332 = vmatprep.subr.mxu0 0.0
        %3333 = vmatpush1.msra.mxu0 0.0
        %3334 = vmatprep.mubr.f32.mxu0 0.0
        %3335 = vmatmul.mubr.f32.gmra.mrb[0].mxu0 %v3222
        %v3336 = vpop.f32.mrb[0].mxu0
        %v3337 = vadd.f32 0.0, %v3336
        %v3338 = vpop.f32.mrb[0].mxu0
        %3339 = vmatprep.mubr.f32.mxu0 0.0
        %3340 = vmatmul.mubr.f32.gmra.mrb[0].mxu0 %v3223
        %v3341 = vpop.f32.mrb[0].mxu0
        %v3342 = vadd.f32 0.0, %v3341
        %v3343 = vpop.f32.mrb[0].mxu0
        %3344 = vmatprep.mubr.f32.mxu0 0.0
        %3345 = vmatmul.mubr.f32.gmra.mrb[0].mxu0 %v3224
        %v3346 = vpop.f32.mrb[0].mxu0
        %v3347 = vadd.f32 0.0, %v3346
        %v3348 = vpop.f32.mrb[0].mxu0
        %3349 = vmatprep.mubr.f32.mxu0 0.0
        %3350 = vmatmul.mubr.f32.gmra.mrb[0].mxu0 %v3225
        %v3351 = vpop.f32.mrb[0].mxu0
        %v3352 = vadd.f32 0.0, %v3351
        %v3353 = vpop.f32.mrb[0].mxu0
        %3354 = vmatprep.mubr.f32.mxu0 0.0
        %3355 = vmatmul.mubr.f32.gmra.mrb[0].mxu0 %v3226
        %v3356 = vpop.f32.mrb[0].mxu0
        %v3357 = vadd.f32 0.0, %v3356
        %v3358 = vpop.f32.mrb[0].mxu0
        %3359 = vmatprep.mubr.f32.mxu0 0.0
        %3360 = vmatmul.mubr.f32.gmra.mrb[0].mxu0 %v3227
        %v3361 = vpop.f32.mrb[0].mxu0
        %v3362 = vadd.f32 0.0, %v3361
        %v3363 = vpop.f32.mrb[0].mxu0
        %3364 = vmatprep.mubr.f32.mxu0 0.0
        %3365 = vmatmul.mubr.f32.gmra.mrb[0].mxu0 %v3228
        %v3366 = vpop.f32.mrb[0].mxu0
        %v3367 = vadd.f32 0.0, %v3366
        %v3368 = vpop.f32.mrb[0].mxu0
        %3369 = vmatprep.mubr.f32.mxu0 0.0
        %3370 = vmatmul.mubr.f32.gmra.mrb[0].mxu0 %v3229
        %v3371 = vpop.f32.mrb[0].mxu0
        %v3372 = vadd.f32 0.0, %v3371
        %v3373 = vpop.f32.mrb[0].mxu0
        %3374 = vmatprep.mubr.f32.mxu0 0.0
        %3375 = vmatmul.mubr.f32.gmra.mrb[0].mxu0 %v3230
        %v3376 = vpop.f32.mrb[0].mxu0
        %v3377 = vadd.f32 0.0, %v3376
        %v3378 = vpop.f32.mrb[0].mxu0
        %3379 = vmatprep.mubr.f32.mxu0 0.0
        %3380 = vmatmul.mubr.f32.gmra.mrb[0].mxu0 %v3231
        %v3381 = vpop.f32.mrb[0].mxu0
        %v3382 = vadd.f32 0.0, %v3381
        %v3383 = vpop.f32.mrb[0].mxu0
        %3384 = vmatprep.mubr.f32.mxu0 0.0
        %3385 = vmatmul.mubr.f32.gmra.mrb[0].mxu0 %v3232
        %v3386 = vpop.f32.mrb[0].mxu0
        %v3387 = vadd.f32 0.0, %v3386
        %v3388 = vpop.f32.mrb[0].mxu0
        %3389 = vmatprep.mubr.f32.mxu0 0.0
        %3390 = vmatmul.mubr.f32.gmra.mrb[0].mxu0 %v3233
        %v3391 = vpop.f32.mrb[0].mxu0
        %v3392 = vadd.f32 0.0, %v3391
        %v3393 = vpop.f32.mrb[0].mxu0
        %3394 = vmatprep.mubr.f32.mxu0 0.0
        %3395 = vmatmul.mubr.f32.gmra.mrb[0].mxu0 %v3234
        %v3396 = vpop.f32.mrb[0].mxu0
        %v3397 = vadd.f32 0.0, %v3396
        %v3398 = vpop.f32.mrb[0].mxu0
        %3399 = vmatprep.mubr.f32.mxu0 0.0
        %3400 = vmatmul.mubr.f32.gmra.mrb[0].mxu0 %v3235
        %v3401 = vpop.f32.mrb[0].mxu0
        %v3402 = vadd.f32 0.0, %v3401
        %v3403 = vpop.f32.mrb[0].mxu0
        %3404 = vmatprep.mubr.f32.mxu0 0.0
        %3405 = vmatmul.mubr.f32.gmra.mrb[0].mxu0 %v3236
        %v3406 = vpop.f32.mrb[0].mxu0
        %v3407 = vadd.f32 0.0, %v3406
        %v3408 = vpop.f32.mrb[0].mxu0
        %3409 = vmatprep.mubr.f32.mxu0 0.0
        %3410 = vmatmul.mubr.f32.gmra.mrb[0].mxu0 %v3237
        %v3411 = vpop.f32.mrb[0].mxu0
        %v3412 = vadd.f32 0.0, %v3411
        %v3413 = vpop.f32.mrb[0].mxu0
        %3414 = vmatprep.mubr.f32.mxu0 0.0
        %3415 = vmatmul.mubr.f32.gmra.mrb[0].mxu0 %v3238
        %v3416 = vpop.f32.mrb[0].mxu0
        %v3417 = vadd.f32 0.0, %v3416
        %v3418 = vpop.f32.mrb[0].mxu0
        %3419 = vmatprep.mubr.f32.mxu0 0.0
        %3420 = vmatmul.mubr.f32.gmra.mrb[0].mxu0 %v3239
        %v3421 = vpop.f32.mrb[0].mxu0
        %v3422 = vadd.f32 0.0, %v3421
        %v3423 = vpop.f32.mrb[0].mxu0
        %3424 = vmatprep.mubr.f32.mxu0 0.0
        %3425 = vmatmul.mubr.f32.gmra.mrb[0].mxu0 %v3240
        %v3426 = vpop.f32.mrb[0].mxu0
        %v3427 = vadd.f32 0.0, %v3426
        %v3428 = vpop.f32.mrb[0].mxu0
        %3429 = vmatprep.mubr.f32.mxu0 0.0
        %3430 = vmatmul.mubr.f32.gmra.mrb[0].mxu0 %v3241
        %v3431 = vpop.f32.mrb[0].mxu0
        %v3432 = vadd.f32 0.0, %v3431
        %v3433 = vpop.f32.mrb[0].mxu0
        %3434 = vmatprep.mubr.f32.mxu0 0.0
        %3435 = vmatmul.mubr.f32.gmra.mrb[0].mxu0 %v3242
        %v3436 = vpop.f32.mrb[0].mxu0
        %v3437 = vadd.f32 0.0, %v3436
        %v3438 = vpop.f32.mrb[0].mxu0
        %3439 = vmatprep.mubr.f32.mxu0 0.0
        %3440 = vmatmul.mubr.f32.gmra.mrb[0].mxu0 %v3243
        %v3441 = vpop.f32.mrb[0].mxu0
        %v3442 = vadd.f32 0.0, %v3441
        %v3443 = vpop.f32.mrb[0].mxu0
        %3444 = vmatprep.mubr.f32.mxu0 0.0
        %3445 = vmatmul.mubr.f32.gmra.mrb[0].mxu0 %v3244
        %v3446 = vpop.f32.mrb[0].mxu0
        %v3447 = vadd.f32 0.0, %v3446
        %v3448 = vpop.f32.mrb[0].mxu0
        %3449 = vmatprep.mubr.f32.mxu0 0.0
        %3450 = vmatmul.mubr.f32.gmra.mrb[0].mxu0 %v3245
        %v3451 = vpop.f32.mrb[0].mxu0
        %v3452 = vadd.f32 0.0, %v3451
        %v3453 = vpop.f32.mrb[0].mxu0
        %3454 = vmatprep.mubr.f32.mxu0 0.0
        %3455 = vmatmul.mubr.f32.gmra.mrb[0].mxu0 %v3246
        %v3456 = vpop.f32.mrb[0].mxu0
        %v3457 = vadd.f32 0.0, %v3456
        %v3458 = vpop.f32.mrb[0].mxu0
        %3459 = vmatprep.mubr.f32.mxu0 0.0
        %3460 = vmatmul.mubr.f32.gmra.mrb[0].mxu0 %v3247
        %v3461 = vpop.f32.mrb[0].mxu0
        %v3462 = vadd.f32 0.0, %v3461
        %v3463 = vpop.f32.mrb[0].mxu0
        %3464 = vmatprep.mubr.f32.mxu0 0.0
        %3465 = vmatmul.mubr.f32.gmra.mrb[0].mxu0 %v3248
        %v3466 = vpop.f32.mrb[0].mxu0
        %v3467 = vadd.f32 0.0, %v3466
        %v3468 = vpop.f32.mrb[0].mxu0
        %3469 = vmatprep.mubr.f32.mxu0 0.0
        %3470 = vmatmul.mubr.f32.gmra.mrb[0].mxu0 %v3249
        %v3471 = vpop.f32.mrb[0].mxu0
        %v3472 = vadd.f32 0.0, %v3471
        %v3473 = vpop.f32.mrb[0].mxu0
        %3474 = vmatprep.mubr.f32.mxu0 0.0
        %3475 = vmatmul.mubr.f32.gmra.mrb[0].mxu0 %v3250
        %v3476 = vpop.f32.mrb[0].mxu0
        %v3477 = vadd.f32 0.0, %v3476
        %v3478 = vpop.f32.mrb[0].mxu0
        %3479 = vmatprep.mubr.f32.mxu0 0.0
        %3480 = vmatmul.mubr.f32.gmra.mrb[0].mxu0 %v3251
        %v3481 = vpop.f32.mrb[0].mxu0
        %v3482 = vadd.f32 0.0, %v3481
        %v3483 = vpop.f32.mrb[0].mxu0
        %3484 = vmatprep.mubr.f32.mxu0 0.0
        %3485 = vmatmul.mubr.f32.gmra.mrb[0].mxu0 %v3252
        %v3486 = vpop.f32.mrb[0].mxu0
        %v3487 = vadd.f32 0.0, %v3486
        %v3488 = vpop.f32.mrb[0].mxu0
        %3489 = vmatprep.mubr.f32.mxu0 0.0
        %3490 = vmatmul.mubr.f32.gmra.mrb[0].mxu0 %v3253
        %v3491 = vpop.f32.mrb[0].mxu0
        %v3492 = vadd.f32 0.0, %v3491
        %v3493 = vpop.f32.mrb[0].mxu0
        %3494 = vdwg.mxu0
        %v3495 = vld [vmem:[%s9] sm:$0x1]
        %v3497 = vlaneseq
        %v3498 = vshrl.u32 %v3497, 7
        %v3499 = vsub.s32 0, %v3498
        %v3500 = vrot.slane %v3495, %v3499
        %v3502 = vmul.f32 %v3337, %v3500
        %v3503 = vmul.f32 %v3342, %v3500
        %v3504 = vmul.f32 %v3347, %v3500
        %v3505 = vmul.f32 %v3352, %v3500
        %v3506 = vmul.f32 %v3357, %v3500
        %v3507 = vmul.f32 %v3362, %v3500
        %v3508 = vmul.f32 %v3367, %v3500
        %v3509 = vmul.f32 %v3372, %v3500
        %v3510 = vmul.f32 %v3377, %v3500
        %v3511 = vmul.f32 %v3382, %v3500
        %v3512 = vmul.f32 %v3387, %v3500
        %v3513 = vmul.f32 %v3392, %v3500
        %v3514 = vmul.f32 %v3397, %v3500
        %v3515 = vmul.f32 %v3402, %v3500
        %v3516 = vmul.f32 %v3407, %v3500
        %v3517 = vmul.f32 %v3412, %v3500
        %v3518 = vmul.f32 %v3417, %v3500
        %v3519 = vmul.f32 %v3422, %v3500
        %v3520 = vmul.f32 %v3427, %v3500
        %v3521 = vmul.f32 %v3432, %v3500
        %v3522 = vmul.f32 %v3437, %v3500
        %v3523 = vmul.f32 %v3442, %v3500
        %v3524 = vmul.f32 %v3447, %v3500
        %v3525 = vmul.f32 %v3452, %v3500
        %v3526 = vmul.f32 %v3457, %v3500
        %v3527 = vmul.f32 %v3462, %v3500
        %v3528 = vmul.f32 %v3467, %v3500
        %v3529 = vmul.f32 %v3472, %v3500
        %v3530 = vmul.f32 %v3477, %v3500
        %v3531 = vmul.f32 %v3482, %v3500
        %v3532 = vmul.f32 %v3487, %v3500
        %v3533 = vmul.f32 %v3492, %v3500
        %v3534 = vld [vmem:[%s10] sm:$0x1]
        %v3536 = vlaneseq
        %v3537 = vshrl.u32 %v3536, 7
        %v3538 = vsub.s32 0, %v3537
        %v3539 = vrot.slane %v3534, %v3538
        %v3541 = vadd.f32 %v3502, %v3539
        %v3542 = vadd.f32 %v3503, %v3539
        %v3543 = vadd.f32 %v3504, %v3539
        %v3544 = vadd.f32 %v3505, %v3539
        %v3545 = vadd.f32 %v3506, %v3539
        %v3546 = vadd.f32 %v3507, %v3539
        %v3547 = vadd.f32 %v3508, %v3539
        %v3548 = vadd.f32 %v3509, %v3539
        %v3549 = vadd.f32 %v3510, %v3539
        %v3550 = vadd.f32 %v3511, %v3539
        %v3551 = vadd.f32 %v3512, %v3539
        %v3552 = vadd.f32 %v3513, %v3539
        %v3553 = vadd.f32 %v3514, %v3539
        %v3554 = vadd.f32 %v3515, %v3539
        %v3555 = vadd.f32 %v3516, %v3539
        %v3556 = vadd.f32 %v3517, %v3539
        %v3557 = vadd.f32 %v3518, %v3539
        %v3558 = vadd.f32 %v3519, %v3539
        %v3559 = vadd.f32 %v3520, %v3539
        %v3560 = vadd.f32 %v3521, %v3539
        %v3561 = vadd.f32 %v3522, %v3539
        %v3562 = vadd.f32 %v3523, %v3539
        %v3563 = vadd.f32 %v3524, %v3539
        %v3564 = vadd.f32 %v3525, %v3539
        %v3565 = vadd.f32 %v3526, %v3539
        %v3566 = vadd.f32 %v3527, %v3539
        %v3567 = vadd.f32 %v3528, %v3539
        %v3568 = vadd.f32 %v3529, %v3539
        %v3569 = vadd.f32 %v3530, %v3539
        %v3570 = vadd.f32 %v3531, %v3539
        %v3571 = vadd.f32 %v3532, %v3539
        %v3572 = vadd.f32 %v3533, %v3539
        %v3573 = vld [vmem:[%s4] sm:$0xf]
        %v3575 = vsel %vm584, %v3573, 0
        %3577 = vmatprep.subr.mxu0 0.0
        %3578 = vmatpush1.msra.mxu0 %v3575
        %3579 = vmatprep.subr.mxu0 0.0
        %3580 = vmatpush1.msra.mxu0 0.0
        %3581 = vmatprep.subr.mxu0 0.0
        %3582 = vmatpush1.msra.mxu0 0.0
        %3583 = vmatprep.subr.mxu0 0.0
        %3584 = vmatpush1.msra.mxu0 0.0
        %3585 = vmatprep.subr.mxu0 0.0
        %3586 = vmatpush1.msra.mxu0 0.0
        %3587 = vmatprep.subr.mxu0 0.0
        %3588 = vmatpush1.msra.mxu0 0.0
        %3589 = vmatprep.subr.mxu0 0.0
        %3590 = vmatpush1.msra.mxu0 0.0
        %3591 = vmatprep.subr.mxu0 0.0
        %3592 = vmatpush1.msra.mxu0 0.0
        %3593 = vmatprep.subr.mxu0 0.0
        %3594 = vmatpush1.msra.mxu0 0.0
        %3595 = vmatprep.subr.mxu0 0.0
        %3596 = vmatpush1.msra.mxu0 0.0
        %3597 = vmatprep.subr.mxu0 0.0
        %3598 = vmatpush1.msra.mxu0 0.0
        %3599 = vmatprep.subr.mxu0 0.0
        %3600 = vmatpush1.msra.mxu0 0.0
        %3601 = vmatprep.subr.mxu0 0.0
        %3602 = vmatpush1.msra.mxu0 0.0
        %3603 = vmatprep.subr.mxu0 0.0
        %3604 = vmatpush1.msra.mxu0 0.0
        %3605 = vmatprep.subr.mxu0 0.0
        %3606 = vmatpush1.msra.mxu0 0.0
        %3607 = vmatprep.subr.mxu0 0.0
        %3608 = vmatpush1.msra.mxu0 0.0
        %3609 = vmatprep.subr.mxu0 0.0
        %3610 = vmatpush1.msra.mxu0 0.0
        %3611 = vmatprep.subr.mxu0 0.0
        %3612 = vmatpush1.msra.mxu0 0.0
        %3613 = vmatprep.subr.mxu0 0.0
        %3614 = vmatpush1.msra.mxu0 0.0
        %3615 = vmatprep.subr.mxu0 0.0
        %3616 = vmatpush1.msra.mxu0 0.0
        %3617 = vmatprep.subr.mxu0 0.0
        %3618 = vmatpush1.msra.mxu0 0.0
        %3619 = vmatprep.subr.mxu0 0.0
        %3620 = vmatpush1.msra.mxu0 0.0
        %3621 = vmatprep.subr.mxu0 0.0
        %3622 = vmatpush1.msra.mxu0 0.0
        %3623 = vmatprep.subr.mxu0 0.0
        %3624 = vmatpush1.msra.mxu0 0.0
        %3625 = vmatprep.subr.mxu0 0.0
        %3626 = vmatpush1.msra.mxu0 0.0
        %3627 = vmatprep.subr.mxu0 0.0
        %3628 = vmatpush1.msra.mxu0 0.0
        %3629 = vmatprep.subr.mxu0 0.0
        %3630 = vmatpush1.msra.mxu0 0.0
        %3631 = vmatprep.subr.mxu0 0.0
        %3632 = vmatpush1.msra.mxu0 0.0
        %3633 = vmatprep.subr.mxu0 0.0
        %3634 = vmatpush1.msra.mxu0 0.0
        %3635 = vmatprep.subr.mxu0 0.0
        %3636 = vmatpush1.msra.mxu0 0.0
        %3637 = vmatprep.subr.mxu0 0.0
        %3638 = vmatpush1.msra.mxu0 0.0
        %3639 = vmatprep.subr.mxu0 0.0
        %3640 = vmatpush1.msra.mxu0 0.0
        %3641 = vmatprep.mubr.f32.mxu0 0.0
        %3642 = vmatmul.mubr.f32.gmra.mrb[0].mxu0 %v489
        %v3643 = vpop.f32.mrb[0].mxu0
        %v3644 = vadd.f32 0.0, %v3643
        %v3645 = vpop.f32.mrb[0].mxu0
        %3646 = vmatprep.mubr.f32.mxu0 0.0
        %3647 = vmatmul.mubr.f32.gmra.mrb[0].mxu0 %v492
        %v3648 = vpop.f32.mrb[0].mxu0
        %v3649 = vadd.f32 0.0, %v3648
        %v3650 = vpop.f32.mrb[0].mxu0
        %3651 = vmatprep.mubr.f32.mxu0 0.0
        %3652 = vmatmul.mubr.f32.gmra.mrb[0].mxu0 %v495
        %v3653 = vpop.f32.mrb[0].mxu0
        %v3654 = vadd.f32 0.0, %v3653
        %v3655 = vpop.f32.mrb[0].mxu0
        %3656 = vmatprep.mubr.f32.mxu0 0.0
        %3657 = vmatmul.mubr.f32.gmra.mrb[0].mxu0 %v498
        %v3658 = vpop.f32.mrb[0].mxu0
        %v3659 = vadd.f32 0.0, %v3658
        %v3660 = vpop.f32.mrb[0].mxu0
        %3661 = vmatprep.mubr.f32.mxu0 0.0
        %3662 = vmatmul.mubr.f32.gmra.mrb[0].mxu0 %v501
        %v3663 = vpop.f32.mrb[0].mxu0
        %v3664 = vadd.f32 0.0, %v3663
        %v3665 = vpop.f32.mrb[0].mxu0
        %3666 = vmatprep.mubr.f32.mxu0 0.0
        %3667 = vmatmul.mubr.f32.gmra.mrb[0].mxu0 %v504
        %v3668 = vpop.f32.mrb[0].mxu0
        %v3669 = vadd.f32 0.0, %v3668
        %v3670 = vpop.f32.mrb[0].mxu0
        %3671 = vmatprep.mubr.f32.mxu0 0.0
        %3672 = vmatmul.mubr.f32.gmra.mrb[0].mxu0 %v507
        %v3673 = vpop.f32.mrb[0].mxu0
        %v3674 = vadd.f32 0.0, %v3673
        %v3675 = vpop.f32.mrb[0].mxu0
        %3676 = vmatprep.mubr.f32.mxu0 0.0
        %3677 = vmatmul.mubr.f32.gmra.mrb[0].mxu0 %v510
        %v3678 = vpop.f32.mrb[0].mxu0
        %v3679 = vadd.f32 0.0, %v3678
        %v3680 = vpop.f32.mrb[0].mxu0
        %3681 = vmatprep.mubr.f32.mxu0 0.0
        %3682 = vmatmul.mubr.f32.gmra.mrb[0].mxu0 %v513
        %v3683 = vpop.f32.mrb[0].mxu0
        %v3684 = vadd.f32 0.0, %v3683
        %v3685 = vpop.f32.mrb[0].mxu0
        %3686 = vmatprep.mubr.f32.mxu0 0.0
        %3687 = vmatmul.mubr.f32.gmra.mrb[0].mxu0 %v516
        %v3688 = vpop.f32.mrb[0].mxu0
        %v3689 = vadd.f32 0.0, %v3688
        %v3690 = vpop.f32.mrb[0].mxu0
        %3691 = vmatprep.mubr.f32.mxu0 0.0
        %3692 = vmatmul.mubr.f32.gmra.mrb[0].mxu0 %v519
        %v3693 = vpop.f32.mrb[0].mxu0
        %v3694 = vadd.f32 0.0, %v3693
        %v3695 = vpop.f32.mrb[0].mxu0
        %3696 = vmatprep.mubr.f32.mxu0 0.0
        %3697 = vmatmul.mubr.f32.gmra.mrb[0].mxu0 %v522
        %v3698 = vpop.f32.mrb[0].mxu0
        %v3699 = vadd.f32 0.0, %v3698
        %v3700 = vpop.f32.mrb[0].mxu0
        %3701 = vmatprep.mubr.f32.mxu0 0.0
        %3702 = vmatmul.mubr.f32.gmra.mrb[0].mxu0 %v525
        %v3703 = vpop.f32.mrb[0].mxu0
        %v3704 = vadd.f32 0.0, %v3703
        %v3705 = vpop.f32.mrb[0].mxu0
        %3706 = vmatprep.mubr.f32.mxu0 0.0
        %3707 = vmatmul.mubr.f32.gmra.mrb[0].mxu0 %v528
        %v3708 = vpop.f32.mrb[0].mxu0
        %v3709 = vadd.f32 0.0, %v3708
        %v3710 = vpop.f32.mrb[0].mxu0
        %3711 = vmatprep.mubr.f32.mxu0 0.0
        %3712 = vmatmul.mubr.f32.gmra.mrb[0].mxu0 %v531
        %v3713 = vpop.f32.mrb[0].mxu0
        %v3714 = vadd.f32 0.0, %v3713
        %v3715 = vpop.f32.mrb[0].mxu0
        %3716 = vmatprep.mubr.f32.mxu0 0.0
        %3717 = vmatmul.mubr.f32.gmra.mrb[0].mxu0 %v534
        %v3718 = vpop.f32.mrb[0].mxu0
        %v3719 = vadd.f32 0.0, %v3718
        %v3720 = vpop.f32.mrb[0].mxu0
        %3721 = vmatprep.mubr.f32.mxu0 0.0
        %3722 = vmatmul.mubr.f32.gmra.mrb[0].mxu0 %v537
        %v3723 = vpop.f32.mrb[0].mxu0
        %v3724 = vadd.f32 0.0, %v3723
        %v3725 = vpop.f32.mrb[0].mxu0
        %3726 = vmatprep.mubr.f32.mxu0 0.0
        %3727 = vmatmul.mubr.f32.gmra.mrb[0].mxu0 %v540
        %v3728 = vpop.f32.mrb[0].mxu0
        %v3729 = vadd.f32 0.0, %v3728
        %v3730 = vpop.f32.mrb[0].mxu0
        %3731 = vmatprep.mubr.f32.mxu0 0.0
        %3732 = vmatmul.mubr.f32.gmra.mrb[0].mxu0 %v543
        %v3733 = vpop.f32.mrb[0].mxu0
        %v3734 = vadd.f32 0.0, %v3733
        %v3735 = vpop.f32.mrb[0].mxu0
        %3736 = vmatprep.mubr.f32.mxu0 0.0
        %3737 = vmatmul.mubr.f32.gmra.mrb[0].mxu0 %v546
        %v3738 = vpop.f32.mrb[0].mxu0
        %v3739 = vadd.f32 0.0, %v3738
        %v3740 = vpop.f32.mrb[0].mxu0
        %3741 = vmatprep.mubr.f32.mxu0 0.0
        %3742 = vmatmul.mubr.f32.gmra.mrb[0].mxu0 %v549
        %v3743 = vpop.f32.mrb[0].mxu0
        %v3744 = vadd.f32 0.0, %v3743
        %v3745 = vpop.f32.mrb[0].mxu0
        %3746 = vmatprep.mubr.f32.mxu0 0.0
        %3747 = vmatmul.mubr.f32.gmra.mrb[0].mxu0 %v552
        %v3748 = vpop.f32.mrb[0].mxu0
        %v3749 = vadd.f32 0.0, %v3748
        %v3750 = vpop.f32.mrb[0].mxu0
        %3751 = vmatprep.mubr.f32.mxu0 0.0
        %3752 = vmatmul.mubr.f32.gmra.mrb[0].mxu0 %v555
        %v3753 = vpop.f32.mrb[0].mxu0
        %v3754 = vadd.f32 0.0, %v3753
        %v3755 = vpop.f32.mrb[0].mxu0
        %3756 = vmatprep.mubr.f32.mxu0 0.0
        %3757 = vmatmul.mubr.f32.gmra.mrb[0].mxu0 %v558
        %v3758 = vpop.f32.mrb[0].mxu0
        %v3759 = vadd.f32 0.0, %v3758
        %v3760 = vpop.f32.mrb[0].mxu0
        %3761 = vmatprep.mubr.f32.mxu0 0.0
        %3762 = vmatmul.mubr.f32.gmra.mrb[0].mxu0 %v561
        %v3763 = vpop.f32.mrb[0].mxu0
        %v3764 = vadd.f32 0.0, %v3763
        %v3765 = vpop.f32.mrb[0].mxu0
        %3766 = vmatprep.mubr.f32.mxu0 0.0
        %3767 = vmatmul.mubr.f32.gmra.mrb[0].mxu0 %v564
        %v3768 = vpop.f32.mrb[0].mxu0
        %v3769 = vadd.f32 0.0, %v3768
        %v3770 = vpop.f32.mrb[0].mxu0
        %3771 = vmatprep.mubr.f32.mxu0 0.0
        %3772 = vmatmul.mubr.f32.gmra.mrb[0].mxu0 %v567
        %v3773 = vpop.f32.mrb[0].mxu0
        %v3774 = vadd.f32 0.0, %v3773
        %v3775 = vpop.f32.mrb[0].mxu0
        %3776 = vmatprep.mubr.f32.mxu0 0.0
        %3777 = vmatmul.mubr.f32.gmra.mrb[0].mxu0 %v570
        %v3778 = vpop.f32.mrb[0].mxu0
        %v3779 = vadd.f32 0.0, %v3778
        %v3780 = vpop.f32.mrb[0].mxu0
        %3781 = vmatprep.mubr.f32.mxu0 0.0
        %3782 = vmatmul.mubr.f32.gmra.mrb[0].mxu0 %v573
        %v3783 = vpop.f32.mrb[0].mxu0
        %v3784 = vadd.f32 0.0, %v3783
        %v3785 = vpop.f32.mrb[0].mxu0
        %3786 = vmatprep.mubr.f32.mxu0 0.0
        %3787 = vmatmul.mubr.f32.gmra.mrb[0].mxu0 %v576
        %v3788 = vpop.f32.mrb[0].mxu0
        %v3789 = vadd.f32 0.0, %v3788
        %v3790 = vpop.f32.mrb[0].mxu0
        %3791 = vmatprep.mubr.f32.mxu0 0.0
        %3792 = vmatmul.mubr.f32.gmra.mrb[0].mxu0 %v579
        %v3793 = vpop.f32.mrb[0].mxu0
        %v3794 = vadd.f32 0.0, %v3793
        %v3795 = vpop.f32.mrb[0].mxu0
        %3796 = vmatprep.mubr.f32.mxu0 0.0
        %3797 = vmatmul.mubr.f32.gmra.mrb[0].mxu0 %v582
        %v3798 = vpop.f32.mrb[0].mxu0
        %v3799 = vadd.f32 0.0, %v3798
        %v3800 = vpop.f32.mrb[0].mxu0
        %3801 = vdwg.mxu0
        %v3802 = vld [vmem:[%s11] sm:$0x1]
        %v3804 = vlaneseq
        %v3805 = vshrl.u32 %v3804, 7
        %v3806 = vsub.s32 0, %v3805
        %v3807 = vrot.slane %v3802, %v3806
        %v3809 = vmul.f32 %v3644, %v3807
        %v3810 = vmul.f32 %v3649, %v3807
        %v3811 = vmul.f32 %v3654, %v3807
        %v3812 = vmul.f32 %v3659, %v3807
        %v3813 = vmul.f32 %v3664, %v3807
        %v3814 = vmul.f32 %v3669, %v3807
        %v3815 = vmul.f32 %v3674, %v3807
        %v3816 = vmul.f32 %v3679, %v3807
        %v3817 = vmul.f32 %v3684, %v3807
        %v3818 = vmul.f32 %v3689, %v3807
        %v3819 = vmul.f32 %v3694, %v3807
        %v3820 = vmul.f32 %v3699, %v3807
        %v3821 = vmul.f32 %v3704, %v3807
        %v3822 = vmul.f32 %v3709, %v3807
        %v3823 = vmul.f32 %v3714, %v3807
        %v3824 = vmul.f32 %v3719, %v3807
        %v3825 = vmul.f32 %v3724, %v3807
        %v3826 = vmul.f32 %v3729, %v3807
        %v3827 = vmul.f32 %v3734, %v3807
        %v3828 = vmul.f32 %v3739, %v3807
        %v3829 = vmul.f32 %v3744, %v3807
        %v3830 = vmul.f32 %v3749, %v3807
        %v3831 = vmul.f32 %v3754, %v3807
        %v3832 = vmul.f32 %v3759, %v3807
        %v3833 = vmul.f32 %v3764, %v3807
        %v3834 = vmul.f32 %v3769, %v3807
        %v3835 = vmul.f32 %v3774, %v3807
        %v3836 = vmul.f32 %v3779, %v3807
        %v3837 = vmul.f32 %v3784, %v3807
        %v3838 = vmul.f32 %v3789, %v3807
        %v3839 = vmul.f32 %v3794, %v3807
        %v3840 = vmul.f32 %v3799, %v3807
        %v3841 = vld [vmem:[%s12] sm:$0x1]
        %v3843 = vlaneseq
        %v3844 = vshrl.u32 %v3843, 7
        %v3845 = vsub.s32 0, %v3844
        %v3846 = vrot.slane %v3841, %v3845
        %v3848 = vadd.f32 %v3809, %v3846
        %v3849 = vadd.f32 %v3810, %v3846
        %v3850 = vadd.f32 %v3811, %v3846
        %v3851 = vadd.f32 %v3812, %v3846
        %v3852 = vadd.f32 %v3813, %v3846
        %v3853 = vadd.f32 %v3814, %v3846
        %v3854 = vadd.f32 %v3815, %v3846
        %v3855 = vadd.f32 %v3816, %v3846
        %v3856 = vadd.f32 %v3817, %v3846
        %v3857 = vadd.f32 %v3818, %v3846
        %v3858 = vadd.f32 %v3819, %v3846
        %v3859 = vadd.f32 %v3820, %v3846
        %v3860 = vadd.f32 %v3821, %v3846
        %v3861 = vadd.f32 %v3822, %v3846
        %v3862 = vadd.f32 %v3823, %v3846
        %v3863 = vadd.f32 %v3824, %v3846
        %v3864 = vadd.f32 %v3825, %v3846
        %v3865 = vadd.f32 %v3826, %v3846
        %v3866 = vadd.f32 %v3827, %v3846
        %v3867 = vadd.f32 %v3828, %v3846
        %v3868 = vadd.f32 %v3829, %v3846
        %v3869 = vadd.f32 %v3830, %v3846
        %v3870 = vadd.f32 %v3831, %v3846
        %v3871 = vadd.f32 %v3832, %v3846
        %v3872 = vadd.f32 %v3833, %v3846
        %v3873 = vadd.f32 %v3834, %v3846
        %v3874 = vadd.f32 %v3835, %v3846
        %v3875 = vadd.f32 %v3836, %v3846
        %v3876 = vadd.f32 %v3837, %v3846
        %v3877 = vadd.f32 %v3838, %v3846
        %v3878 = vadd.f32 %v3839, %v3846
        %v3879 = vadd.f32 %v3840, %v3846
        %v3880 = vadd.f32 %v3541, %v3848
        %v3881 = vadd.f32 %v3542, %v3849
        %v3882 = vadd.f32 %v3543, %v3850
        %v3883 = vadd.f32 %v3544, %v3851
        %v3884 = vadd.f32 %v3545, %v3852
        %v3885 = vadd.f32 %v3546, %v3853
        %v3886 = vadd.f32 %v3547, %v3854
        %v3887 = vadd.f32 %v3548, %v3855
        %v3888 = vadd.f32 %v3549, %v3856
        %v3889 = vadd.f32 %v3550, %v3857
        %v3890 = vadd.f32 %v3551, %v3858
        %v3891 = vadd.f32 %v3552, %v3859
        %v3892 = vadd.f32 %v3553, %v3860
        %v3893 = vadd.f32 %v3554, %v3861
        %v3894 = vadd.f32 %v3555, %v3862
        %v3895 = vadd.f32 %v3556, %v3863
        %v3896 = vadd.f32 %v3557, %v3864
        %v3897 = vadd.f32 %v3558, %v3865
        %v3898 = vadd.f32 %v3559, %v3866
        %v3899 = vadd.f32 %v3560, %v3867
        %v3900 = vadd.f32 %v3561, %v3868
        %v3901 = vadd.f32 %v3562, %v3869
        %v3902 = vadd.f32 %v3563, %v3870
        %v3903 = vadd.f32 %v3564, %v3871
        %v3904 = vadd.f32 %v3565, %v3872
        %v3905 = vadd.f32 %v3566, %v3873
        %v3906 = vadd.f32 %v3567, %v3874
        %v3907 = vadd.f32 %v3568, %v3875
        %v3908 = vadd.f32 %v3569, %v3876
        %v3909 = vadd.f32 %v3570, %v3877
        %v3910 = vadd.f32 %v3571, %v3878
        %v3911 = vadd.f32 %v3572, %v3879
        %v3912 = vmax.f32 %v3880, 0.0
        %v3913 = vmax.f32 %v3881, 0.0
        %v3914 = vmax.f32 %v3882, 0.0
        %v3915 = vmax.f32 %v3883, 0.0
        %v3916 = vmax.f32 %v3884, 0.0
        %v3917 = vmax.f32 %v3885, 0.0
        %v3918 = vmax.f32 %v3886, 0.0
        %v3919 = vmax.f32 %v3887, 0.0
        %v3920 = vmax.f32 %v3888, 0.0
        %v3921 = vmax.f32 %v3889, 0.0
        %v3922 = vmax.f32 %v3890, 0.0
        %v3923 = vmax.f32 %v3891, 0.0
        %v3924 = vmax.f32 %v3892, 0.0
        %v3925 = vmax.f32 %v3893, 0.0
        %v3926 = vmax.f32 %v3894, 0.0
        %v3927 = vmax.f32 %v3895, 0.0
        %v3928 = vmax.f32 %v3896, 0.0
        %v3929 = vmax.f32 %v3897, 0.0
        %v3930 = vmax.f32 %v3898, 0.0
        %v3931 = vmax.f32 %v3899, 0.0
        %v3932 = vmax.f32 %v3900, 0.0
        %v3933 = vmax.f32 %v3901, 0.0
        %v3934 = vmax.f32 %v3902, 0.0
        %v3935 = vmax.f32 %v3903, 0.0
        %v3936 = vmax.f32 %v3904, 0.0
        %v3937 = vmax.f32 %v3905, 0.0
        %v3938 = vmax.f32 %v3906, 0.0
        %v3939 = vmax.f32 %v3907, 0.0
        %v3940 = vmax.f32 %v3908, 0.0
        %v3941 = vmax.f32 %v3909, 0.0
        %v3942 = vmax.f32 %v3910, 0.0
        %v3943 = vmax.f32 %v3911, 0.0
        %3944 = vst [vmem:[%s448] sm:$0xff] %v3912
        %3945 = vst [vmem:[%s448 + $0x8] sm:$0xff] %v3913
        %3946 = vst [vmem:[%s448 + $0x10] sm:$0xff] %v3914
        %3947 = vst [vmem:[%s448 + $0x18] sm:$0xff] %v3915
        %3948 = vst [vmem:[%s448 + $0x20] sm:$0xff] %v3916
        %3949 = vst [vmem:[%s448 + $0x28] sm:$0xff] %v3917
        %3950 = vst [vmem:[%s448 + $0x30] sm:$0xff] %v3918
        %3951 = vst [vmem:[%s448 + $0x38] sm:$0xff] %v3919
        %3952 = vst [vmem:[%s448 + $0x40] sm:$0xff] %v3920
        %3953 = vst [vmem:[%s448 + $0x48] sm:$0xff] %v3921
        %3954 = vst [vmem:[%s448 + $0x50] sm:$0xff] %v3922
        %3955 = vst [vmem:[%s448 + $0x58] sm:$0xff] %v3923
        %3956 = vst [vmem:[%s448 + $0x60] sm:$0xff] %v3924
        %3957 = vst [vmem:[%s448 + $0x68] sm:$0xff] %v3925
        %3958 = vst [vmem:[%s448 + $0x70] sm:$0xff] %v3926
        %3959 = vst [vmem:[%s448 + $0x78] sm:$0xff] %v3927
        %3960 = vst [vmem:[%s448 + $0x80] sm:$0xff] %v3928
        %3961 = vst [vmem:[%s448 + $0x88] sm:$0xff] %v3929
        %3962 = vst [vmem:[%s448 + $0x90] sm:$0xff] %v3930
        %3963 = vst [vmem:[%s448 + $0x98] sm:$0xff] %v3931
        %3964 = vst [vmem:[%s448 + $0xa0] sm:$0xff] %v3932
        %3965 = vst [vmem:[%s448 + $0xa8] sm:$0xff] %v3933
        %3966 = vst [vmem:[%s448 + $0xb0] sm:$0xff] %v3934
        %3967 = vst [vmem:[%s448 + $0xb8] sm:$0xff] %v3935
        %3968 = vst [vmem:[%s448 + $0xc0] sm:$0xff] %v3936
        %3969 = vst [vmem:[%s448 + $0xc8] sm:$0xff] %v3937
        %3970 = vst [vmem:[%s448 + $0xd0] sm:$0xff] %v3938
        %3971 = vst [vmem:[%s448 + $0xd8] sm:$0xff] %v3939
        %3972 = vst [vmem:[%s448 + $0xe0] sm:$0xff] %v3940
        %3973 = vst [vmem:[%s448 + $0xe8] sm:$0xff] %v3941
        %3974 = vst [vmem:[%s448 + $0xf0] sm:$0xff] %v3942
        %3975 = vst [vmem:[%s448 + $0xf8] sm:$0xff] %v3943
        %s3976 = sand.u32 %s314, 1
        %s3977 = scalar_lea.sflag [#allocation6], %s3976
        %s3978 = sand.u32 %s314, 1
        %s3979 = smul.addr %s3978, 256
        %s3980 = scalar_lea.vmem [#allocation7], %s3979
        // Predicated region
        $region77: #{tpu_custom_call.1} parent=71 // pred_check
          %p3981 = pneg %p324
        $region78: #{tpu_custom_call.1} parent=71 // pred_check_branch
          %3983 = sbr.rel (%p3981) target = $region80
        $region79: #{tpu_custom_call.1} parent=71 // pred_region
          %s3985 = ssub.s32 4096, 4096
          %3986 = vsyncadd %s3977, %s3985
          %s3987 = smul.addr %s28, 32
          %s3988 = smul.addr %s3987, 128
          %s3989 = scalar_lea.hbm %s13, %s3988
          %s3990 = sshll.u32 %s3980, 4
          %s3991 = int_to_ptr.vmem [resolvable:$true] %s3990
          %3996 = dma.vmem_to_hbm [thread:$0]  %s3991, 4096, %s3989, %s3977, 128, 128, 8
        $region80: #{tpu_custom_call.1} parent=71 // pred_fallthru
          _
      $region72: #{tpu_custom_call.1} parent=5 // pred_fallthru
        _
      %p3997 = scmp.le.s32.totalorder 2, %s23
      // Predicated region
      $region81: #{tpu_custom_call.1} parent=5 // pred_check
        %p3998 = pneg %p3997
      $region82: #{tpu_custom_call.1} parent=5 // pred_check_branch
        %4000 = sbr.rel (%p3998) target = $region84
      $region83: #{tpu_custom_call.1} parent=5 // pred_region
        %s4001 = ssub.s32 %s23, 2
        // Predicated region
        $region85: #{tpu_custom_call.1} parent=83 // pred_check
          %p4002 = pneg %p330
        $region86: #{tpu_custom_call.1} parent=83 // pred_check_branch
          %4004 = sbr.rel (%p4002) target = $region88
        $region87: #{tpu_custom_call.1} parent=83 // pred_region
          %s4005 = sand.u32 %s315, 1
          %s4006 = scalar_lea.sflag [#allocation6], %s4005
          %s4007 = sand.u32 %s315, 1
          %s4008 = smul.addr %s4007, 256
          %s4009 = scalar_lea.vmem [#allocation7], %s4008
          %4010 = dma.done %s4006, 4096
        $region88: #{tpu_custom_call.1} parent=83 // pred_fallthru
          _
      $region84: #{tpu_custom_call.1} parent=5 // pred_fallthru
        _
    $region6: #{tpu_custom_call.1} parent=1 // loop_footer
      %s27 = sadd.s32 1, %s23
    $region7: #{tpu_custom_call.1} parent=1 // loop_footer_branch
      %22 = sbr.rel target = $region3
    $region8: #{tpu_custom_call.1} parent=1 // loop_exit
      _
    %4011 = vsyncpa [#allocation5], 1
    %s4012 = scalar_lea.sflag [#allocation5], 1
    %4013 = vsyncpa %s4012, 1
    %4014 = vsyncpa [#allocation6], 1
    %s4015 = scalar_lea.sflag [#allocation6], 1
    %4016 = vsyncpa %s4015, 1

</llo_original>
